<compile_context>
chip_gen: v7x
topology: tpu7x:2x2x1
jax: 0.10.0
libtpu: 0.0.40
codegen_flags: <defaults>
</compile_context>

<pallas_src>
import functools

import jax
import jax.numpy as jnp
from jax import lax
from jax.experimental import pallas as pl
from jax.experimental.pallas import tpu as pltpu


def _round_up(x, m):
    return (x + m - 1) // m * m


# ----------------------------------------------------------------------------
# Pallas kernel: the serial LSTM recurrence for one layer.
# grid = (num_batch_blocks, num_time_blocks); (h, c) live in VMEM scratch.
# ----------------------------------------------------------------------------
def _lstm_recurrence_kernel(gp_ref, whh_ref, h0_ref, c0_ref,
                            yseq_ref, hT_ref, cT_ref,
                            h_sc, c_sc, *, seq_len, time_block):
    t_blk = pl.program_id(1)

    @pl.when(t_blk == 0)
    def _():
        h_sc[...] = h0_ref[...]
        c_sc[...] = c0_ref[...]

    whh = whh_ref[...]                 # (H_pad, 4*H_pad) bf16, VMEM resident
    H = whh.shape[0]
    needs_mask = (seq_len % time_block) != 0   # only if T was padded up

    def step(i, carry):
        h, c = carry                   # f32 (BB, H_pad)
        gates = gp_ref[i] + jnp.dot(h.astype(jnp.bfloat16), whh,
                                    preferred_element_type=jnp.float32)
        i_g = jax.nn.sigmoid(gates[:, 0 * H:1 * H])
        f_g = jax.nn.sigmoid(gates[:, 1 * H:2 * H])
        g_g = jnp.tanh(gates[:, 2 * H:3 * H])
        o_g = jax.nn.sigmoid(gates[:, 3 * H:4 * H])
        c_new = f_g * c + i_g * g_g
        h_new = o_g * jnp.tanh(c_new)
        if needs_mask:                 # freeze state on padded timesteps
            valid = ((t_blk * time_block + i) < seq_len).astype(jnp.float32)
            h_new = valid * h_new + (1.0 - valid) * h
            c_new = valid * c_new + (1.0 - valid) * c
        yseq_ref[i] = h_new.astype(yseq_ref.dtype)
        return h_new, c_new

    h_fin, c_fin = lax.fori_loop(0, time_block, step,
                                 (h_sc[...], c_sc[...]), unroll=True)
    h_sc[...] = h_fin
    c_sc[...] = c_fin

    @pl.when(t_blk == pl.num_programs(1) - 1)   # final states written once
    def _():
        hT_ref[...] = h_fin
        cT_ref[...] = c_fin


def lstm_layer_recurrence(gates_pre, w_hh_t_bf16, h0, c0, *,
                          seq_len, time_block, num_batch_blocks):
    """gates_pre: (T_pad, B_pad, 4*H_pad) f32 (bias folded in),
       w_hh_t_bf16: (H_pad, 4*H_pad) bf16, h0/c0: (B_pad, H_pad) f32."""
    T_pad, B_pad, G = gates_pre.shape
    H_pad = w_hh_t_bf16.shape[0]
    assert G == 4 * H_pad and T_pad % time_block == 0
    NT = T_pad // time_block
    NB = num_batch_blocks
    BB = B_pad // NB

    kernel = functools.partial(_lstm_recurrence_kernel,
                               seq_len=seq_len, time_block=time_block)

    grid_spec = pltpu.PrefetchScalarGridSpec(
        num_scalar_prefetch=0,
        grid=(NB, NT),
        in_specs=[
            pl.BlockSpec((time_block, BB, 4 * H_pad), lambda b, t: (t, b, 0)),
            pl.BlockSpec((H_pad, 4 * H_pad), lambda b, t: (0, 0)),   # W_hh^T
            pl.BlockSpec((BB, H_pad), lambda b, t: (b, 0)),          # h0
            pl.BlockSpec((BB, H_pad), lambda b, t: (b, 0)),          # c0
        ],
        out_specs=[
            pl.BlockSpec((time_block, BB, H_pad), lambda b, t: (t, b, 0)),
            pl.BlockSpec((BB, H_pad), lambda b, t: (b, 0)),          # final h
            pl.BlockSpec((BB, H_pad), lambda b, t: (b, 0)),          # final c
        ],
        scratch_shapes=[
            pltpu.VMEM((BB, H_pad), jnp.float32),                    # h state
            pltpu.VMEM((BB, H_pad), jnp.float32),                    # c state
        ],
    )

    return pl.pallas_call(
        kernel,
        out_shape=(
            jax.ShapeDtypeStruct((T_pad, B_pad, H_pad), jnp.bfloat16),
            jax.ShapeDtypeStruct((B_pad, H_pad), jnp.float32),
            jax.ShapeDtypeStruct((B_pad, H_pad), jnp.float32),
        ),
        grid_spec=grid_spec,
        compiler_params=pltpu.CompilerParams(
            # batch blocks are independent (v7x: 2 TCs); time is sequential
            dimension_semantics=("parallel", "arbitrary")),
    )(gates_pre, w_hh_t_bf16, h0, c0)


# ----------------------------------------------------------------------------
# Padding helpers (gate layout stays [i | f | g | o], each padded to H_pad).
# ----------------------------------------------------------------------------
def _pad_gate_cols(w, h, h_pad):
    """w: (rows, 4*h) -> (rows, 4*h_pad) with zero-padding inside each gate."""
    if h_pad == h:
        return w
    rows = w.shape[0]
    w4 = w.reshape(rows, 4, h)
    w4 = jnp.pad(w4, ((0, 0), (0, 0), (0, h_pad - h)))
    return w4.reshape(rows, 4 * h_pad)


# ----------------------------------------------------------------------------
# Encoder forward: stacked LSTM layers, returns (h, c) of shape (L, B, H),
# matching PyTorch Encoder.forward (which returns only the final states).
# ----------------------------------------------------------------------------
@functools.partial(jax.jit, static_argnames=("time_block",))
def encoder_forward(x_btd, h0_lbh, c0_lbh, params, *, time_block=8):
    B, T, _ = x_btd.shape
    L, _, H = h0_lbh.shape
    H_pad = _round_up(H, 128)          # lane-aligned gates, unmasked stores
    B_pad = _round_up(B, 16)           # dense sublanes for bf16 activations
    TT = max(1, min(time_block, T))
    T_pad = _round_up(T, TT)
    # On v7x a large batch is split into 2 "parallel" blocks (one per TensorCore).
    NB = 2 if (B_pad % 32 == 0) else 1

    h0 = jnp.pad(h0_lbh, ((0, 0), (0, B_pad - B), (0, H_pad - H)))
    c0 = jnp.pad(c0_lbh, ((0, 0), (0, B_pad - B), (0, H_pad - H)))

    # layer-0 input, time-major, padded, bf16 for the hoisted projection
    x = jnp.transpose(x_btd, (1, 0, 2)).astype(jnp.bfloat16)        # (T, B, D)
    x = jnp.pad(x, ((0, T_pad - T), (0, B_pad - B), (0, 0)))

    h_fin, c_fin = [], []
    for l, (w_ih_t, w_hh_t, bias) in enumerate(params):
        w_ih_p = _pad_gate_cols(w_ih_t, H, H_pad)                    # (D_l, 4H_pad)
        if l > 0:                                                    # rows H -> H_pad
            w_ih_p = jnp.pad(w_ih_p, ((0, H_pad - H), (0, 0)))
        w_hh_p = jnp.pad(_pad_gate_cols(w_hh_t, H, H_pad),
                         ((0, H_pad - H), (0, 0)))                   # (H_pad, 4H_pad)
        b_p = _pad_gate_cols(bias[None, :], H, H_pad)[0]             # (4H_pad,)

        # Hoisted, fully parallel input projection (one big MXU-friendly matmul),
        # bias folded in here so the recurrent loop never touches it.
        gates_pre = jnp.einsum('tbd,dg->tbg', x, w_ih_p.astype(jnp.bfloat16),
                               preferred_element_type=jnp.float32) + b_p

        yseq, hT, cT = lstm_layer_recurrence(
            gates_pre, w_hh_p.astype(jnp.bfloat16), h0[l], c0[l],
            seq_len=T, time_block=TT, num_batch_blocks=NB)

        h_fin.append(hT)
        c_fin.append(cT)
        x = yseq                        # bf16 inter-layer activations
        # TODO(synk): fuse adjacent layers in one kernel (wavefront schedule) so
        # the intermediate sequence never round-trips HBM.

    h = jnp.stack(h_fin, axis=0)[:, :B, :H]
    c = jnp.stack(c_fin, axis=0)[:, :B, :H]
    return h, c


# ----------------------------------------------------------------------------
# References for verification.
# ----------------------------------------------------------------------------
def encoder_reference_f32(x_btd, h0_lbh, c0_lbh, params):
    """Exact PyTorch (f32) math via lax.scan."""
    x = jnp.transpose(x_btd, (1, 0, 2))
    hs, cs = [], []
    for l, (w_ih_t, w_hh_t, bias) in enumerate(params):
        H = w_hh_t.shape[0]

        def step(carry, x_t):
            h, c = carry
            g = x_t @ w_ih_t + h @ w_hh_t + bias
            i_g = jax.nn.sigmoid(g[:, 0 * H:1 * H])
            f_g = jax.nn.sigmoid(g[:, 1 * H:2 * H])
            g_g = jnp.tanh(g[:, 2 * H:3 * H])
            o_g = jax.nn.sigmoid(g[:, 3 * H:4 * H])
            c_new = f_g * c + i_g * g_g
            h_new = o_g * jnp.tanh(c_new)
            return (h_new, c_new), h_new

        (hT, cT), yseq = lax.scan(step, (h0_lbh[l], c0_lbh[l]), x)
        hs.append(hT)
        cs.append(cT)
        x = yseq
    return jnp.stack(hs), jnp.stack(cs)


def encoder_reference_bf16(x_btd, h0_lbh, c0_lbh, params):
    """Same mixed precision as the kernel (bf16 matmul operands, f32 state)."""
    x = jnp.transpose(x_btd, (1, 0, 2))
    hs, cs = [], []
    for l, (w_ih_t, w_hh_t, bias) in enumerate(params):
        H = w_hh_t.shape[0]
        gp = jnp.einsum('tbd,dg->tbg', x.astype(jnp.bfloat16),
                        w_ih_t.astype(jnp.bfloat16),
                        preferred_element_type=jnp.float32) + bias
        whh = w_hh_t.astype(jnp.bfloat16)

        def step(carry, g_t):
            h, c = carry
            g = g_t + jnp.dot(h.astype(jnp.bfloat16), whh,
                              preferred_element_type=jnp.float32)
            i_g = jax.nn.sigmoid(g[:, 0 * H:1 * H])
            f_g = jax.nn.sigmoid(g[:, 1 * H:2 * H])
            g_g = jnp.tanh(g[:, 2 * H:3 * H])
            o_g = jax.nn.sigmoid(g[:, 3 * H:4 * H])
            c_new = f_g * c + i_g * g_g
            h_new = o_g * jnp.tanh(c_new)
            return (h_new, c_new), h_new

        (hT, cT), yseq = lax.scan(step, (h0_lbh[l], c0_lbh[l]), gp)
        hs.append(hT)
        cs.append(cT)
        x = yseq.astype(jnp.float32)
    return jnp.stack(hs), jnp.stack(cs)


# ----------------------------------------------------------------------------
# Deterministic parameter init (PyTorch LSTM default: U(-1/sqrt(H), 1/sqrt(H)))
# ----------------------------------------------------------------------------
def init_lstm_params(key, input_size, hidden_size, num_layers):
    params = []
    k = 1.0 / float(hidden_size) ** 0.5
    for l in range(num_layers):
        in_l = input_size if l == 0 else hidden_size
        key, k1, k2, k3, k4 = jax.random.split(key, 5)
        w_ih = jax.random.uniform(k1, (4 * hidden_size, in_l), jnp.float32, -k, k)
        w_hh = jax.random.uniform(k2, (4 * hidden_size, hidden_size), jnp.float32, -k, k)
        b_ih = jax.random.uniform(k3, (4 * hidden_size,), jnp.float32, -k, k)
        b_hh = jax.random.uniform(k4, (4 * hidden_size,), jnp.float32, -k, k)
        params.append((w_ih.T,          # (in_l, 4H)
                       w_hh.T,          # (H, 4H)
                       b_ih + b_hh))    # (4H,)
    return params


if __name__ == "__main__":
    # Small shapes consistent with Encoder(input_size, hidden_size, num_layers)
    B, T, INPUT_SIZE, HIDDEN, LAYERS = 2, 8, 4, 32, 2

    key = jax.random.PRNGKey(0)
    key, kx, kh, kc, kp = jax.random.split(key, 5)

    x = jax.random.normal(kx, (B, T, INPUT_SIZE), jnp.float32)
    # Encoder.forward draws h_0 / c_0 from randn; we draw them deterministically.
    h0 = jax.random.normal(kh, (LAYERS, B, HIDDEN), jnp.float32)
    c0 = jax.random.normal(kc, (LAYERS, B, HIDDEN), jnp.float32)

    params = init_lstm_params(kp, INPUT_SIZE, HIDDEN, LAYERS)

    h, c = encoder_forward(x, h0, c0, params)
    jax.block_until_ready((h, c))

    h_m, c_m = encoder_reference_bf16(x, h0, c0, params)   # matched precision
    h_f, c_f = encoder_reference_f32(x, h0, c0, params)    # PyTorch f32 math

    assert h.shape == (LAYERS, B, HIDDEN) and c.shape == (LAYERS, B, HIDDEN)
    assert jnp.allclose(h, h_m, atol=5e-3, rtol=5e-3)
    assert jnp.allclose(c, c_m, atol=5e-3, rtol=5e-3)
    assert jnp.allclose(h, h_f, atol=5e-2, rtol=5e-2)
    assert jnp.allclose(c, c_f, atol=5e-2, rtol=5e-2)

    print("KERNEL_OK")
</pallas_src>

<mosaic_0001>
module attributes {stable_mosaic.version = 11 : i64} {
  func.func @_lstm_recurrence_kernel(%arg0: i32, %arg1: i32, %arg2: memref<8x16x512xf32, #tpu.memory_space<vmem>>, %arg3: memref<128x512xbf16, #tpu.memory_space<vmem>>, %arg4: memref<16x128xf32, #tpu.memory_space<vmem>>, %arg5: memref<16x128xf32, #tpu.memory_space<vmem>>, %arg6: memref<8x16x128xbf16, #tpu.memory_space<vmem>>, %arg7: memref<16x128xf32, #tpu.memory_space<vmem>>, %arg8: memref<16x128xf32, #tpu.memory_space<vmem>>, %arg9: memref<16x128xf32, #tpu.memory_space<vmem>>, %arg10: memref<16x128xf32, #tpu.memory_space<vmem>>) attributes {dimension_semantics = [#tpu.dimension_semantics<parallel>, #tpu.dimension_semantics<arbitrary>], iteration_bounds = array<i64: 1, 1>, scalar_prefetch = 0 : i64, scratch_operands = 2 : i64, tpu.core_type = #tpu.core_type<tc>, window_params = [{transform_indices = @transform_0, window_bounds = array<i64: 8, 16, 512>}, {pipeline_mode = #tpu.pipeline_mode<synchronous>, transform_indices = @transform_1, window_bounds = array<i64: 128, 512>}, {transform_indices = @transform_2, window_bounds = array<i64: 16, 128>}, {transform_indices = @transform_3, window_bounds = array<i64: 16, 128>}, {transform_indices = @transform_4, window_bounds = array<i64: 8, 16, 128>}, {transform_indices = @transform_5, window_bounds = array<i64: 16, 128>}, {transform_indices = @transform_6, window_bounds = array<i64: 16, 128>}]} {
    %c0_i32 = arith.constant 0 : i32
    %0 = arith.cmpi eq, %arg1, %c0_i32 : i32
    %1 = arith.extui %0 : i1 to i32
    %c0_i32_0 = arith.constant 0 : i32
    %2 = arith.cmpi ne, %1, %c0_i32_0 : i32
    scf.if %2 {
      %c0_76 = arith.constant 0 : index
      %c0_77 = arith.constant 0 : index
      %299 = vector.load %arg4[%c0_76, %c0_77] : memref<16x128xf32, #tpu.memory_space<vmem>>, vector<16x128xf32>
      %c0_78 = arith.constant 0 : index
      %c0_79 = arith.constant 0 : index
      %300 = vector.load %arg9[%c0_78, %c0_79] : memref<16x128xf32, #tpu.memory_space<vmem>>, vector<16x128xf32>
      tpu.vector_store %arg9[%c0_78, %c0_79], %299 {strides = array<i32>} : memref<16x128xf32, #tpu.memory_space<vmem>>, vector<16x128xf32>,
      %c0_80 = arith.constant 0 : index
      %c0_81 = arith.constant 0 : index
      %301 = vector.load %arg5[%c0_80, %c0_81] : memref<16x128xf32, #tpu.memory_space<vmem>>, vector<16x128xf32>
      %c0_82 = arith.constant 0 : index
      %c0_83 = arith.constant 0 : index
      %302 = vector.load %arg10[%c0_82, %c0_83] : memref<16x128xf32, #tpu.memory_space<vmem>>, vector<16x128xf32>
      tpu.vector_store %arg10[%c0_82, %c0_83], %301 {strides = array<i32>} : memref<16x128xf32, #tpu.memory_space<vmem>>, vector<16x128xf32>,
    } else {
    }
    %c0 = arith.constant 0 : index
    %c0_1 = arith.constant 0 : index
    %3 = vector.load %arg3[%c0, %c0_1] : memref<128x512xbf16, #tpu.memory_space<vmem>>, vector<128x512xbf16>
    %c0_2 = arith.constant 0 : index
    %c0_3 = arith.constant 0 : index
    %4 = vector.load %arg9[%c0_2, %c0_3] : memref<16x128xf32, #tpu.memory_space<vmem>>, vector<16x128xf32>
    %c0_4 = arith.constant 0 : index
    %c0_5 = arith.constant 0 : index
    %5 = vector.load %arg10[%c0_4, %c0_5] : memref<16x128xf32, #tpu.memory_space<vmem>>, vector<16x128xf32>
    %c0_i32_6 = arith.constant 0 : i32
    %6 = arith.index_cast %c0_i32_6 : i32 to index
    %c0_7 = arith.constant 0 : index
    %c0_8 = arith.constant 0 : index
    %7 = vector.load %arg2[%6, %c0_7, %c0_8] : memref<8x16x512xf32, #tpu.memory_space<vmem>>, vector<1x16x512xf32>
    %8 = vector.shape_cast %7 : vector<1x16x512xf32> to vector<16x512xf32>
    %9 = arith.truncf %4 : vector<16x128xf32> to vector<16x128xbf16>
    %cst = arith.constant dense<0.000000e+00> : vector<16x512xf32>
    %10 = tpu.matmul %9, %3, %cst {dimension_numbers = #tpu.dot_dimension_numbers<[1], [0], [0], [1], [0, 0, 1, 1], [], []>} : vector<16x128xbf16>, vector<128x512xbf16>, vector<16x512xf32> -> vector<16x512xf32>
    %11 = arith.addf %8, %10 : vector<16x512xf32>
    %12 = vector.extract_strided_slice %11 {offsets = [0, 0], sizes = [16, 128], strides = [1, 1]} : vector<16x512xf32> to vector<16x128xf32>
    %13 = arith.negf %12 : vector<16x128xf32>
    %14 = math.exp %13 : vector<16x128xf32>
    %cst_9 = arith.constant 1.000000e+00 : f32
    %15 = vector.broadcast %cst_9 : f32 to vector<16x128xf32>
    %16 = arith.addf %15, %14 : vector<16x128xf32>
    %17 = arith.divf %15, %16 : vector<16x128xf32>
    %18 = vector.extract_strided_slice %11 {offsets = [0, 128], sizes = [16, 128], strides = [1, 1]} : vector<16x512xf32> to vector<16x128xf32>
    %19 = arith.negf %18 : vector<16x128xf32>
    %20 = math.exp %19 : vector<16x128xf32>
    %cst_10 = arith.constant 1.000000e+00 : f32
    %21 = vector.broadcast %cst_10 : f32 to vector<16x128xf32>
    %22 = arith.addf %21, %20 : vector<16x128xf32>
    %23 = arith.divf %21, %22 : vector<16x128xf32>
    %24 = vector.extract_strided_slice %11 {offsets = [0, 256], sizes = [16, 128], strides = [1, 1]} : vector<16x512xf32> to vector<16x128xf32>
    %25 = math.tanh %24 : vector<16x128xf32>
    %26 = vector.extract_strided_slice %11 {offsets = [0, 384], sizes = [16, 128], strides = [1, 1]} : vector<16x512xf32> to vector<16x128xf32>
    %27 = arith.negf %26 : vector<16x128xf32>
    %28 = math.exp %27 : vector<16x128xf32>
    %cst_11 = arith.constant 1.000000e+00 : f32
    %29 = vector.broadcast %cst_11 : f32 to vector<16x128xf32>
    %30 = arith.addf %29, %28 : vector<16x128xf32>
    %31 = arith.divf %29, %30 : vector<16x128xf32>
    %32 = arith.mulf %23, %5 : vector<16x128xf32>
    %33 = arith.mulf %17, %25 : vector<16x128xf32>
    %34 = arith.addf %32, %33 : vector<16x128xf32>
    %35 = math.tanh %34 : vector<16x128xf32>
    %36 = arith.mulf %31, %35 : vector<16x128xf32>
    %37 = arith.truncf %36 : vector<16x128xf32> to vector<16x128xbf16>
    %38 = arith.index_cast %c0_i32_6 : i32 to index
    %c0_12 = arith.constant 0 : index
    %c0_13 = arith.constant 0 : index
    %39 = vector.load %arg6[%38, %c0_12, %c0_13] : memref<8x16x128xbf16, #tpu.memory_space<vmem>>, vector<1x16x128xbf16>
    %40 = vector.shape_cast %39 : vector<1x16x128xbf16> to vector<16x128xbf16>
    %41 = vector.shape_cast %37 : vector<16x128xbf16> to vector<1x16x128xbf16>
    tpu.vector_store %arg6[%38, %c0_12, %c0_13], %41 {strides = array<i32>} : memref<8x16x128xbf16, #tpu.memory_space<vmem>>, vector<1x16x128xbf16>,
    %c1_i32 = arith.constant 1 : i32
    %42 = arith.index_cast %c1_i32 : i32 to index
    %c0_14 = arith.constant 0 : index
    %c0_15 = arith.constant 0 : index
    %43 = vector.load %arg2[%42, %c0_14, %c0_15] : memref<8x16x512xf32, #tpu.memory_space<vmem>>, vector<1x16x512xf32>
    %44 = vector.shape_cast %43 : vector<1x16x512xf32> to vector<16x512xf32>
    %45 = arith.truncf %36 : vector<16x128xf32> to vector<16x128xbf16>
    %cst_16 = arith.constant dense<0.000000e+00> : vector<16x512xf32>
    %46 = tpu.matmul %45, %3, %cst_16 {dimension_numbers = #tpu.dot_dimension_numbers<[1], [0], [0], [1], [0, 0, 1, 1], [], []>} : vector<16x128xbf16>, vector<128x512xbf16>, vector<16x512xf32> -> vector<16x512xf32>
    %47 = arith.addf %44, %46 : vector<16x512xf32>
    %48 = vector.extract_strided_slice %47 {offsets = [0, 0], sizes = [16, 128], strides = [1, 1]} : vector<16x512xf32> to vector<16x128xf32>
    %49 = arith.negf %48 : vector<16x128xf32>
    %50 = math.exp %49 : vector<16x128xf32>
    %cst_17 = arith.constant 1.000000e+00 : f32
    %51 = vector.broadcast %cst_17 : f32 to vector<16x128xf32>
    %52 = arith.addf %51, %50 : vector<16x128xf32>
    %53 = arith.divf %51, %52 : vector<16x128xf32>
    %54 = vector.extract_strided_slice %47 {offsets = [0, 128], sizes = [16, 128], strides = [1, 1]} : vector<16x512xf32> to vector<16x128xf32>
    %55 = arith.negf %54 : vector<16x128xf32>
    %56 = math.exp %55 : vector<16x128xf32>
    %cst_18 = arith.constant 1.000000e+00 : f32
    %57 = vector.broadcast %cst_18 : f32 to vector<16x128xf32>
    %58 = arith.addf %57, %56 : vector<16x128xf32>
    %59 = arith.divf %57, %58 : vector<16x128xf32>
    %60 = vector.extract_strided_slice %47 {offsets = [0, 256], sizes = [16, 128], strides = [1, 1]} : vector<16x512xf32> to vector<16x128xf32>
    %61 = math.tanh %60 : vector<16x128xf32>
    %62 = vector.extract_strided_slice %47 {offsets = [0, 384], sizes = [16, 128], strides = [1, 1]} : vector<16x512xf32> to vector<16x128xf32>
    %63 = arith.negf %62 : vector<16x128xf32>
    %64 = math.exp %63 : vector<16x128xf32>
    %cst_19 = arith.constant 1.000000e+00 : f32
    %65 = vector.broadcast %cst_19 : f32 to vector<16x128xf32>
    %66 = arith.addf %65, %64 : vector<16x128xf32>
    %67 = arith.divf %65, %66 : vector<16x128xf32>
    %68 = arith.mulf %59, %34 : vector<16x128xf32>
    %69 = arith.mulf %53, %61 : vector<16x128xf32>
    %70 = arith.addf %68, %69 : vector<16x128xf32>
    %71 = math.tanh %70 : vector<16x128xf32>
    %72 = arith.mulf %67, %71 : vector<16x128xf32>
    %73 = arith.truncf %72 : vector<16x128xf32> to vector<16x128xbf16>
    %74 = arith.index_cast %c1_i32 : i32 to index
    %c0_20 = arith.constant 0 : index
    %c0_21 = arith.constant 0 : index
    %75 = vector.load %arg6[%74, %c0_20, %c0_21] : memref<8x16x128xbf16, #tpu.memory_space<vmem>>, vector<1x16x128xbf16>
    %76 = vector.shape_cast %75 : vector<1x16x128xbf16> to vector<16x128xbf16>
    %77 = vector.shape_cast %73 : vector<16x128xbf16> to vector<1x16x128xbf16>
    tpu.vector_store %arg6[%74, %c0_20, %c0_21], %77 {strides = array<i32>} : memref<8x16x128xbf16, #tpu.memory_space<vmem>>, vector<1x16x128xbf16>,
    %c2_i32 = arith.constant 2 : i32
    %78 = arith.index_cast %c2_i32 : i32 to index
    %c0_22 = arith.constant 0 : index
    %c0_23 = arith.constant 0 : index
    %79 = vector.load %arg2[%78, %c0_22, %c0_23] : memref<8x16x512xf32, #tpu.memory_space<vmem>>, vector<1x16x512xf32>
    %80 = vector.shape_cast %79 : vector<1x16x512xf32> to vector<16x512xf32>
    %81 = arith.truncf %72 : vector<16x128xf32> to vector<16x128xbf16>
    %cst_24 = arith.constant dense<0.000000e+00> : vector<16x512xf32>
    %82 = tpu.matmul %81, %3, %cst_24 {dimension_numbers = #tpu.dot_dimension_numbers<[1], [0], [0], [1], [0, 0, 1, 1], [], []>} : vector<16x128xbf16>, vector<128x512xbf16>, vector<16x512xf32> -> vector<16x512xf32>
    %83 = arith.addf %80, %82 : vector<16x512xf32>
    %84 = vector.extract_strided_slice %83 {offsets = [0, 0], sizes = [16, 128], strides = [1, 1]} : vector<16x512xf32> to vector<16x128xf32>
    %85 = arith.negf %84 : vector<16x128xf32>
    %86 = math.exp %85 : vector<16x128xf32>
    %cst_25 = arith.constant 1.000000e+00 : f32
    %87 = vector.broadcast %cst_25 : f32 to vector<16x128xf32>
    %88 = arith.addf %87, %86 : vector<16x128xf32>
    %89 = arith.divf %87, %88 : vector<16x128xf32>
    %90 = vector.extract_strided_slice %83 {offsets = [0, 128], sizes = [16, 128], strides = [1, 1]} : vector<16x512xf32> to vector<16x128xf32>
    %91 = arith.negf %90 : vector<16x128xf32>
    %92 = math.exp %91 : vector<16x128xf32>
    %cst_26 = arith.constant 1.000000e+00 : f32
    %93 = vector.broadcast %cst_26 : f32 to vector<16x128xf32>
    %94 = arith.addf %93, %92 : vector<16x128xf32>
    %95 = arith.divf %93, %94 : vector<16x128xf32>
    %96 = vector.extract_strided_slice %83 {offsets = [0, 256], sizes = [16, 128], strides = [1, 1]} : vector<16x512xf32> to vector<16x128xf32>
    %97 = math.tanh %96 : vector<16x128xf32>
    %98 = vector.extract_strided_slice %83 {offsets = [0, 384], sizes = [16, 128], strides = [1, 1]} : vector<16x512xf32> to vector<16x128xf32>
    %99 = arith.negf %98 : vector<16x128xf32>
    %100 = math.exp %99 : vector<16x128xf32>
    %cst_27 = arith.constant 1.000000e+00 : f32
    %101 = vector.broadcast %cst_27 : f32 to vector<16x128xf32>
    %102 = arith.addf %101, %100 : vector<16x128xf32>
    %103 = arith.divf %101, %102 : vector<16x128xf32>
    %104 = arith.mulf %95, %70 : vector<16x128xf32>
    %105 = arith.mulf %89, %97 : vector<16x128xf32>
    %106 = arith.addf %104, %105 : vector<16x128xf32>
    %107 = math.tanh %106 : vector<16x128xf32>
    %108 = arith.mulf %103, %107 : vector<16x128xf32>
    %109 = arith.truncf %108 : vector<16x128xf32> to vector<16x128xbf16>
    %110 = arith.index_cast %c2_i32 : i32 to index
    %c0_28 = arith.constant 0 : index
    %c0_29 = arith.constant 0 : index
    %111 = vector.load %arg6[%110, %c0_28, %c0_29] : memref<8x16x128xbf16, #tpu.memory_space<vmem>>, vector<1x16x128xbf16>
    %112 = vector.shape_cast %111 : vector<1x16x128xbf16> to vector<16x128xbf16>
    %113 = vector.shape_cast %109 : vector<16x128xbf16> to vector<1x16x128xbf16>
    tpu.vector_store %arg6[%110, %c0_28, %c0_29], %113 {strides = array<i32>} : memref<8x16x128xbf16, #tpu.memory_space<vmem>>, vector<1x16x128xbf16>,
    %c3_i32 = arith.constant 3 : i32
    %114 = arith.index_cast %c3_i32 : i32 to index
    %c0_30 = arith.constant 0 : index
    %c0_31 = arith.constant 0 : index
    %115 = vector.load %arg2[%114, %c0_30, %c0_31] : memref<8x16x512xf32, #tpu.memory_space<vmem>>, vector<1x16x512xf32>
    %116 = vector.shape_cast %115 : vector<1x16x512xf32> to vector<16x512xf32>
    %117 = arith.truncf %108 : vector<16x128xf32> to vector<16x128xbf16>
    %cst_32 = arith.constant dense<0.000000e+00> : vector<16x512xf32>
    %118 = tpu.matmul %117, %3, %cst_32 {dimension_numbers = #tpu.dot_dimension_numbers<[1], [0], [0], [1], [0, 0, 1, 1], [], []>} : vector<16x128xbf16>, vector<128x512xbf16>, vector<16x512xf32> -> vector<16x512xf32>
    %119 = arith.addf %116, %118 : vector<16x512xf32>
    %120 = vector.extract_strided_slice %119 {offsets = [0, 0], sizes = [16, 128], strides = [1, 1]} : vector<16x512xf32> to vector<16x128xf32>
    %121 = arith.negf %120 : vector<16x128xf32>
    %122 = math.exp %121 : vector<16x128xf32>
    %cst_33 = arith.constant 1.000000e+00 : f32
    %123 = vector.broadcast %cst_33 : f32 to vector<16x128xf32>
    %124 = arith.addf %123, %122 : vector<16x128xf32>
    %125 = arith.divf %123, %124 : vector<16x128xf32>
    %126 = vector.extract_strided_slice %119 {offsets = [0, 128], sizes = [16, 128], strides = [1, 1]} : vector<16x512xf32> to vector<16x128xf32>
    %127 = arith.negf %126 : vector<16x128xf32>
    %128 = math.exp %127 : vector<16x128xf32>
    %cst_34 = arith.constant 1.000000e+00 : f32
    %129 = vector.broadcast %cst_34 : f32 to vector<16x128xf32>
    %130 = arith.addf %129, %128 : vector<16x128xf32>
    %131 = arith.divf %129, %130 : vector<16x128xf32>
    %132 = vector.extract_strided_slice %119 {offsets = [0, 256], sizes = [16, 128], strides = [1, 1]} : vector<16x512xf32> to vector<16x128xf32>
    %133 = math.tanh %132 : vector<16x128xf32>
    %134 = vector.extract_strided_slice %119 {offsets = [0, 384], sizes = [16, 128], strides = [1, 1]} : vector<16x512xf32> to vector<16x128xf32>
    %135 = arith.negf %134 : vector<16x128xf32>
    %136 = math.exp %135 : vector<16x128xf32>
    %cst_35 = arith.constant 1.000000e+00 : f32
    %137 = vector.broadcast %cst_35 : f32 to vector<16x128xf32>
    %138 = arith.addf %137, %136 : vector<16x128xf32>
    %139 = arith.divf %137, %138 : vector<16x128xf32>
    %140 = arith.mulf %131, %106 : vector<16x128xf32>
    %141 = arith.mulf %125, %133 : vector<16x128xf32>
    %142 = arith.addf %140, %141 : vector<16x128xf32>
    %143 = math.tanh %142 : vector<16x128xf32>
    %144 = arith.mulf %139, %143 : vector<16x128xf32>
    %145 = arith.truncf %144 : vector<16x128xf32> to vector<16x128xbf16>
    %146 = arith.index_cast %c3_i32 : i32 to index
    %c0_36 = arith.constant 0 : index
    %c0_37 = arith.constant 0 : index
    %147 = vector.load %arg6[%146, %c0_36, %c0_37] : memref<8x16x128xbf16, #tpu.memory_space<vmem>>, vector<1x16x128xbf16>
    %148 = vector.shape_cast %147 : vector<1x16x128xbf16> to vector<16x128xbf16>
    %149 = vector.shape_cast %145 : vector<16x128xbf16> to vector<1x16x128xbf16>
    tpu.vector_store %arg6[%146, %c0_36, %c0_37], %149 {strides = array<i32>} : memref<8x16x128xbf16, #tpu.memory_space<vmem>>, vector<1x16x128xbf16>,
    %c4_i32 = arith.constant 4 : i32
    %150 = arith.index_cast %c4_i32 : i32 to index
    %c0_38 = arith.constant 0 : index
    %c0_39 = arith.constant 0 : index
    %151 = vector.load %arg2[%150, %c0_38, %c0_39] : memref<8x16x512xf32, #tpu.memory_space<vmem>>, vector<1x16x512xf32>
    %152 = vector.shape_cast %151 : vector<1x16x512xf32> to vector<16x512xf32>
    %153 = arith.truncf %144 : vector<16x128xf32> to vector<16x128xbf16>
    %cst_40 = arith.constant dense<0.000000e+00> : vector<16x512xf32>
    %154 = tpu.matmul %153, %3, %cst_40 {dimension_numbers = #tpu.dot_dimension_numbers<[1], [0], [0], [1], [0, 0, 1, 1], [], []>} : vector<16x128xbf16>, vector<128x512xbf16>, vector<16x512xf32> -> vector<16x512xf32>
    %155 = arith.addf %152, %154 : vector<16x512xf32>
    %156 = vector.extract_strided_slice %155 {offsets = [0, 0], sizes = [16, 128], strides = [1, 1]} : vector<16x512xf32> to vector<16x128xf32>
    %157 = arith.negf %156 : vector<16x128xf32>
    %158 = math.exp %157 : vector<16x128xf32>
    %cst_41 = arith.constant 1.000000e+00 : f32
    %159 = vector.broadcast %cst_41 : f32 to vector<16x128xf32>
    %160 = arith.addf %159, %158 : vector<16x128xf32>
    %161 = arith.divf %159, %160 : vector<16x128xf32>
    %162 = vector.extract_strided_slice %155 {offsets = [0, 128], sizes = [16, 128], strides = [1, 1]} : vector<16x512xf32> to vector<16x128xf32>
    %163 = arith.negf %162 : vector<16x128xf32>
    %164 = math.exp %163 : vector<16x128xf32>
    %cst_42 = arith.constant 1.000000e+00 : f32
    %165 = vector.broadcast %cst_42 : f32 to vector<16x128xf32>
    %166 = arith.addf %165, %164 : vector<16x128xf32>
    %167 = arith.divf %165, %166 : vector<16x128xf32>
    %168 = vector.extract_strided_slice %155 {offsets = [0, 256], sizes = [16, 128], strides = [1, 1]} : vector<16x512xf32> to vector<16x128xf32>
    %169 = math.tanh %168 : vector<16x128xf32>
    %170 = vector.extract_strided_slice %155 {offsets = [0, 384], sizes = [16, 128], strides = [1, 1]} : vector<16x512xf32> to vector<16x128xf32>
    %171 = arith.negf %170 : vector<16x128xf32>
    %172 = math.exp %171 : vector<16x128xf32>
    %cst_43 = arith.constant 1.000000e+00 : f32
    %173 = vector.broadcast %cst_43 : f32 to vector<16x128xf32>
    %174 = arith.addf %173, %172 : vector<16x128xf32>
    %175 = arith.divf %173, %174 : vector<16x128xf32>
    %176 = arith.mulf %167, %142 : vector<16x128xf32>
    %177 = arith.mulf %161, %169 : vector<16x128xf32>
    %178 = arith.addf %176, %177 : vector<16x128xf32>
    %179 = math.tanh %178 : vector<16x128xf32>
    %180 = arith.mulf %175, %179 : vector<16x128xf32>
    %181 = arith.truncf %180 : vector<16x128xf32> to vector<16x128xbf16>
    %182 = arith.index_cast %c4_i32 : i32 to index
    %c0_44 = arith.constant 0 : index
    %c0_45 = arith.constant 0 : index
    %183 = vector.load %arg6[%182, %c0_44, %c0_45] : memref<8x16x128xbf16, #tpu.memory_space<vmem>>, vector<1x16x128xbf16>
    %184 = vector.shape_cast %183 : vector<1x16x128xbf16> to vector<16x128xbf16>
    %185 = vector.shape_cast %181 : vector<16x128xbf16> to vector<1x16x128xbf16>
    tpu.vector_store %arg6[%182, %c0_44, %c0_45], %185 {strides = array<i32>} : memref<8x16x128xbf16, #tpu.memory_space<vmem>>, vector<1x16x128xbf16>,
    %c5_i32 = arith.constant 5 : i32
    %186 = arith.index_cast %c5_i32 : i32 to index
    %c0_46 = arith.constant 0 : index
    %c0_47 = arith.constant 0 : index
    %187 = vector.load %arg2[%186, %c0_46, %c0_47] : memref<8x16x512xf32, #tpu.memory_space<vmem>>, vector<1x16x512xf32>
    %188 = vector.shape_cast %187 : vector<1x16x512xf32> to vector<16x512xf32>
    %189 = arith.truncf %180 : vector<16x128xf32> to vector<16x128xbf16>
    %cst_48 = arith.constant dense<0.000000e+00> : vector<16x512xf32>
    %190 = tpu.matmul %189, %3, %cst_48 {dimension_numbers = #tpu.dot_dimension_numbers<[1], [0], [0], [1], [0, 0, 1, 1], [], []>} : vector<16x128xbf16>, vector<128x512xbf16>, vector<16x512xf32> -> vector<16x512xf32>
    %191 = arith.addf %188, %190 : vector<16x512xf32>
    %192 = vector.extract_strided_slice %191 {offsets = [0, 0], sizes = [16, 128], strides = [1, 1]} : vector<16x512xf32> to vector<16x128xf32>
    %193 = arith.negf %192 : vector<16x128xf32>
    %194 = math.exp %193 : vector<16x128xf32>
    %cst_49 = arith.constant 1.000000e+00 : f32
    %195 = vector.broadcast %cst_49 : f32 to vector<16x128xf32>
    %196 = arith.addf %195, %194 : vector<16x128xf32>
    %197 = arith.divf %195, %196 : vector<16x128xf32>
    %198 = vector.extract_strided_slice %191 {offsets = [0, 128], sizes = [16, 128], strides = [1, 1]} : vector<16x512xf32> to vector<16x128xf32>
    %199 = arith.negf %198 : vector<16x128xf32>
    %200 = math.exp %199 : vector<16x128xf32>
    %cst_50 = arith.constant 1.000000e+00 : f32
    %201 = vector.broadcast %cst_50 : f32 to vector<16x128xf32>
    %202 = arith.addf %201, %200 : vector<16x128xf32>
    %203 = arith.divf %201, %202 : vector<16x128xf32>
    %204 = vector.extract_strided_slice %191 {offsets = [0, 256], sizes = [16, 128], strides = [1, 1]} : vector<16x512xf32> to vector<16x128xf32>
    %205 = math.tanh %204 : vector<16x128xf32>
    %206 = vector.extract_strided_slice %191 {offsets = [0, 384], sizes = [16, 128], strides = [1, 1]} : vector<16x512xf32> to vector<16x128xf32>
    %207 = arith.negf %206 : vector<16x128xf32>
    %208 = math.exp %207 : vector<16x128xf32>
    %cst_51 = arith.constant 1.000000e+00 : f32
    %209 = vector.broadcast %cst_51 : f32 to vector<16x128xf32>
    %210 = arith.addf %209, %208 : vector<16x128xf32>
    %211 = arith.divf %209, %210 : vector<16x128xf32>
    %212 = arith.mulf %203, %178 : vector<16x128xf32>
    %213 = arith.mulf %197, %205 : vector<16x128xf32>
    %214 = arith.addf %212, %213 : vector<16x128xf32>
    %215 = math.tanh %214 : vector<16x128xf32>
    %216 = arith.mulf %211, %215 : vector<16x128xf32>
    %217 = arith.truncf %216 : vector<16x128xf32> to vector<16x128xbf16>
    %218 = arith.index_cast %c5_i32 : i32 to index
    %c0_52 = arith.constant 0 : index
    %c0_53 = arith.constant 0 : index
    %219 = vector.load %arg6[%218, %c0_52, %c0_53] : memref<8x16x128xbf16, #tpu.memory_space<vmem>>, vector<1x16x128xbf16>
    %220 = vector.shape_cast %219 : vector<1x16x128xbf16> to vector<16x128xbf16>
    %221 = vector.shape_cast %217 : vector<16x128xbf16> to vector<1x16x128xbf16>
    tpu.vector_store %arg6[%218, %c0_52, %c0_53], %221 {strides = array<i32>} : memref<8x16x128xbf16, #tpu.memory_space<vmem>>, vector<1x16x128xbf16>,
    %c6_i32 = arith.constant 6 : i32
    %222 = arith.index_cast %c6_i32 : i32 to index
    %c0_54 = arith.constant 0 : index
    %c0_55 = arith.constant 0 : index
    %223 = vector.load %arg2[%222, %c0_54, %c0_55] : memref<8x16x512xf32, #tpu.memory_space<vmem>>, vector<1x16x512xf32>
    %224 = vector.shape_cast %223 : vector<1x16x512xf32> to vector<16x512xf32>
    %225 = arith.truncf %216 : vector<16x128xf32> to vector<16x128xbf16>
    %cst_56 = arith.constant dense<0.000000e+00> : vector<16x512xf32>
    %226 = tpu.matmul %225, %3, %cst_56 {dimension_numbers = #tpu.dot_dimension_numbers<[1], [0], [0], [1], [0, 0, 1, 1], [], []>} : vector<16x128xbf16>, vector<128x512xbf16>, vector<16x512xf32> -> vector<16x512xf32>
    %227 = arith.addf %224, %226 : vector<16x512xf32>
    %228 = vector.extract_strided_slice %227 {offsets = [0, 0], sizes = [16, 128], strides = [1, 1]} : vector<16x512xf32> to vector<16x128xf32>
    %229 = arith.negf %228 : vector<16x128xf32>
    %230 = math.exp %229 : vector<16x128xf32>
    %cst_57 = arith.constant 1.000000e+00 : f32
    %231 = vector.broadcast %cst_57 : f32 to vector<16x128xf32>
    %232 = arith.addf %231, %230 : vector<16x128xf32>
    %233 = arith.divf %231, %232 : vector<16x128xf32>
    %234 = vector.extract_strided_slice %227 {offsets = [0, 128], sizes = [16, 128], strides = [1, 1]} : vector<16x512xf32> to vector<16x128xf32>
    %235 = arith.negf %234 : vector<16x128xf32>
    %236 = math.exp %235 : vector<16x128xf32>
    %cst_58 = arith.constant 1.000000e+00 : f32
    %237 = vector.broadcast %cst_58 : f32 to vector<16x128xf32>
    %238 = arith.addf %237, %236 : vector<16x128xf32>
    %239 = arith.divf %237, %238 : vector<16x128xf32>
    %240 = vector.extract_strided_slice %227 {offsets = [0, 256], sizes = [16, 128], strides = [1, 1]} : vector<16x512xf32> to vector<16x128xf32>
    %241 = math.tanh %240 : vector<16x128xf32>
    %242 = vector.extract_strided_slice %227 {offsets = [0, 384], sizes = [16, 128], strides = [1, 1]} : vector<16x512xf32> to vector<16x128xf32>
    %243 = arith.negf %242 : vector<16x128xf32>
    %244 = math.exp %243 : vector<16x128xf32>
    %cst_59 = arith.constant 1.000000e+00 : f32
    %245 = vector.broadcast %cst_59 : f32 to vector<16x128xf32>
    %246 = arith.addf %245, %244 : vector<16x128xf32>
    %247 = arith.divf %245, %246 : vector<16x128xf32>
    %248 = arith.mulf %239, %214 : vector<16x128xf32>
    %249 = arith.mulf %233, %241 : vector<16x128xf32>
    %250 = arith.addf %248, %249 : vector<16x128xf32>
    %251 = math.tanh %250 : vector<16x128xf32>
    %252 = arith.mulf %247, %251 : vector<16x128xf32>
    %253 = arith.truncf %252 : vector<16x128xf32> to vector<16x128xbf16>
    %254 = arith.index_cast %c6_i32 : i32 to index
    %c0_60 = arith.constant 0 : index
    %c0_61 = arith.constant 0 : index
    %255 = vector.load %arg6[%254, %c0_60, %c0_61] : memref<8x16x128xbf16, #tpu.memory_space<vmem>>, vector<1x16x128xbf16>
    %256 = vector.shape_cast %255 : vector<1x16x128xbf16> to vector<16x128xbf16>
    %257 = vector.shape_cast %253 : vector<16x128xbf16> to vector<1x16x128xbf16>
    tpu.vector_store %arg6[%254, %c0_60, %c0_61], %257 {strides = array<i32>} : memref<8x16x128xbf16, #tpu.memory_space<vmem>>, vector<1x16x128xbf16>,
    %c7_i32 = arith.constant 7 : i32
    %258 = arith.index_cast %c7_i32 : i32 to index
    %c0_62 = arith.constant 0 : index
    %c0_63 = arith.constant 0 : index
    %259 = vector.load %arg2[%258, %c0_62, %c0_63] : memref<8x16x512xf32, #tpu.memory_space<vmem>>, vector<1x16x512xf32>
    %260 = vector.shape_cast %259 : vector<1x16x512xf32> to vector<16x512xf32>
    %261 = arith.truncf %252 : vector<16x128xf32> to vector<16x128xbf16>
    %cst_64 = arith.constant dense<0.000000e+00> : vector<16x512xf32>
    %262 = tpu.matmul %261, %3, %cst_64 {dimension_numbers = #tpu.dot_dimension_numbers<[1], [0], [0], [1], [0, 0, 1, 1], [], []>} : vector<16x128xbf16>, vector<128x512xbf16>, vector<16x512xf32> -> vector<16x512xf32>
    %263 = arith.addf %260, %262 : vector<16x512xf32>
    %264 = vector.extract_strided_slice %263 {offsets = [0, 0], sizes = [16, 128], strides = [1, 1]} : vector<16x512xf32> to vector<16x128xf32>
    %265 = arith.negf %264 : vector<16x128xf32>
    %266 = math.exp %265 : vector<16x128xf32>
    %cst_65 = arith.constant 1.000000e+00 : f32
    %267 = vector.broadcast %cst_65 : f32 to vector<16x128xf32>
    %268 = arith.addf %267, %266 : vector<16x128xf32>
    %269 = arith.divf %267, %268 : vector<16x128xf32>
    %270 = vector.extract_strided_slice %263 {offsets = [0, 128], sizes = [16, 128], strides = [1, 1]} : vector<16x512xf32> to vector<16x128xf32>
    %271 = arith.negf %270 : vector<16x128xf32>
    %272 = math.exp %271 : vector<16x128xf32>
    %cst_66 = arith.constant 1.000000e+00 : f32
    %273 = vector.broadcast %cst_66 : f32 to vector<16x128xf32>
    %274 = arith.addf %273, %272 : vector<16x128xf32>
    %275 = arith.divf %273, %274 : vector<16x128xf32>
    %276 = vector.extract_strided_slice %263 {offsets = [0, 256], sizes = [16, 128], strides = [1, 1]} : vector<16x512xf32> to vector<16x128xf32>
    %277 = math.tanh %276 : vector<16x128xf32>
    %278 = vector.extract_strided_slice %263 {offsets = [0, 384], sizes = [16, 128], strides = [1, 1]} : vector<16x512xf32> to vector<16x128xf32>
    %279 = arith.negf %278 : vector<16x128xf32>
    %280 = math.exp %279 : vector<16x128xf32>
    %cst_67 = arith.constant 1.000000e+00 : f32
    %281 = vector.broadcast %cst_67 : f32 to vector<16x128xf32>
    %282 = arith.addf %281, %280 : vector<16x128xf32>
    %283 = arith.divf %281, %282 : vector<16x128xf32>
    %284 = arith.mulf %275, %250 : vector<16x128xf32>
    %285 = arith.mulf %269, %277 : vector<16x128xf32>
    %286 = arith.addf %284, %285 : vector<16x128xf32>
    %287 = math.tanh %286 : vector<16x128xf32>
    %288 = arith.mulf %283, %287 : vector<16x128xf32>
    %289 = arith.truncf %288 : vector<16x128xf32> to vector<16x128xbf16>
    %290 = arith.index_cast %c7_i32 : i32 to index
    %c0_68 = arith.constant 0 : index
    %c0_69 = arith.constant 0 : index
    %291 = vector.load %arg6[%290, %c0_68, %c0_69] : memref<8x16x128xbf16, #tpu.memory_space<vmem>>, vector<1x16x128xbf16>
    %292 = vector.shape_cast %291 : vector<1x16x128xbf16> to vector<16x128xbf16>
    %293 = vector.shape_cast %289 : vector<16x128xbf16> to vector<1x16x128xbf16>
    tpu.vector_store %arg6[%290, %c0_68, %c0_69], %293 {strides = array<i32>} : memref<8x16x128xbf16, #tpu.memory_space<vmem>>, vector<1x16x128xbf16>,
    %c8_i32 = arith.constant 8 : i32
    %c0_70 = arith.constant 0 : index
    %c0_71 = arith.constant 0 : index
    %294 = vector.load %arg9[%c0_70, %c0_71] : memref<16x128xf32, #tpu.memory_space<vmem>>, vector<16x128xf32>
    tpu.vector_store %arg9[%c0_70, %c0_71], %288 {strides = array<i32>} : memref<16x128xf32, #tpu.memory_space<vmem>>, vector<16x128xf32>,
    %c0_72 = arith.constant 0 : index
    %c0_73 = arith.constant 0 : index
    %295 = vector.load %arg10[%c0_72, %c0_73] : memref<16x128xf32, #tpu.memory_space<vmem>>, vector<16x128xf32>
    tpu.vector_store %arg10[%c0_72, %c0_73], %286 {strides = array<i32>} : memref<16x128xf32, #tpu.memory_space<vmem>>, vector<16x128xf32>,
    %c0_i32_74 = arith.constant 0 : i32
    %296 = arith.cmpi eq, %arg1, %c0_i32_74 : i32
    %297 = arith.extui %296 : i1 to i32
    %c0_i32_75 = arith.constant 0 : i32
    %298 = arith.cmpi ne, %297, %c0_i32_75 : i32
    scf.if %298 {
      %c0_76 = arith.constant 0 : index
      %c0_77 = arith.constant 0 : index
      %299 = vector.load %arg7[%c0_76, %c0_77] : memref<16x128xf32, #tpu.memory_space<vmem>>, vector<16x128xf32>
      tpu.vector_store %arg7[%c0_76, %c0_77], %288 {strides = array<i32>} : memref<16x128xf32, #tpu.memory_space<vmem>>, vector<16x128xf32>,
      %c0_78 = arith.constant 0 : index
      %c0_79 = arith.constant 0 : index
      %300 = vector.load %arg8[%c0_78, %c0_79] : memref<16x128xf32, #tpu.memory_space<vmem>>, vector<16x128xf32>
      tpu.vector_store %arg8[%c0_78, %c0_79], %286 {strides = array<i32>} : memref<16x128xf32, #tpu.memory_space<vmem>>, vector<16x128xf32>,
    } else {
    }
    return
  }
  func.func @transform_0(%arg0: i32, %arg1: i32) -> (i32, i32, i32) {
    %c0_i32 = arith.constant 0 : i32
    %c0_i32_0 = arith.constant 0 : i32
    return %arg1, %arg0, %c0_i32 : i32, i32, i32
  }
  func.func @transform_1(%arg0: i32, %arg1: i32) -> (i32, i32) {
    %c0_i32 = arith.constant 0 : i32
    %c0_i32_0 = arith.constant 0 : i32
    %c0_i32_1 = arith.constant 0 : i32
    return %c0_i32, %c0_i32_0 : i32, i32
  }
  func.func @transform_2(%arg0: i32, %arg1: i32) -> (i32, i32) {
    %c0_i32 = arith.constant 0 : i32
    %c0_i32_0 = arith.constant 0 : i32
    return %arg0, %c0_i32 : i32, i32
  }
  func.func @transform_3(%arg0: i32, %arg1: i32) -> (i32, i32) {
    %c0_i32 = arith.constant 0 : i32
    %c0_i32_0 = arith.constant 0 : i32
    return %arg0, %c0_i32 : i32, i32
  }
  func.func @transform_4(%arg0: i32, %arg1: i32) -> (i32, i32, i32) {
    %c0_i32 = arith.constant 0 : i32
    %c0_i32_0 = arith.constant 0 : i32
    return %arg1, %arg0, %c0_i32 : i32, i32, i32
  }
  func.func @transform_5(%arg0: i32, %arg1: i32) -> (i32, i32) {
    %c0_i32 = arith.constant 0 : i32
    %c0_i32_0 = arith.constant 0 : i32
    return %arg0, %c0_i32 : i32, i32
  }
  func.func @transform_6(%arg0: i32, %arg1: i32) -> (i32, i32) {
    %c0_i32 = arith.constant 0 : i32
    %c0_i32_0 = arith.constant 0 : i32
    return %arg0, %c0_i32 : i32, i32
  }
}

module attributes {stable_mosaic.version = 11 : i64} {
  func.func @_lstm_recurrence_kernel(%arg0: i32, %arg1: i32, %arg2: memref<8x16x512xf32, #tpu.memory_space<vmem>>, %arg3: memref<128x512xbf16, #tpu.memory_space<vmem>>, %arg4: memref<16x128xf32, #tpu.memory_space<vmem>>, %arg5: memref<16x128xf32, #tpu.memory_space<vmem>>, %arg6: memref<8x16x128xbf16, #tpu.memory_space<vmem>>, %arg7: memref<16x128xf32, #tpu.memory_space<vmem>>, %arg8: memref<16x128xf32, #tpu.memory_space<vmem>>, %arg9: memref<16x128xf32, #tpu.memory_space<vmem>>, %arg10: memref<16x128xf32, #tpu.memory_space<vmem>>) attributes {dimension_semantics = [#tpu.dimension_semantics<parallel>, #tpu.dimension_semantics<arbitrary>], iteration_bounds = array<i64: 1, 1>, scalar_prefetch = 0 : i64, scratch_operands = 2 : i64, tpu.core_type = #tpu.core_type<tc>, window_params = [{transform_indices = @transform_0, window_bounds = array<i64: 8, 16, 512>}, {pipeline_mode = #tpu.pipeline_mode<synchronous>, transform_indices = @transform_1, window_bounds = array<i64: 128, 512>}, {transform_indices = @transform_2, window_bounds = array<i64: 16, 128>}, {transform_indices = @transform_3, window_bounds = array<i64: 16, 128>}, {transform_indices = @transform_4, window_bounds = array<i64: 8, 16, 128>}, {transform_indices = @transform_5, window_bounds = array<i64: 16, 128>}, {transform_indices = @transform_6, window_bounds = array<i64: 16, 128>}]} {
    %c0_i32 = arith.constant 0 : i32
    %0 = arith.cmpi eq, %arg1, %c0_i32 : i32
    %1 = arith.extui %0 : i1 to i32
    %c0_i32_0 = arith.constant 0 : i32
    %2 = arith.cmpi ne, %1, %c0_i32_0 : i32
    scf.if %2 {
      %c0_76 = arith.constant 0 : index
      %c0_77 = arith.constant 0 : index
      %299 = vector.load %arg4[%c0_76, %c0_77] : memref<16x128xf32, #tpu.memory_space<vmem>>, vector<16x128xf32>
      %c0_78 = arith.constant 0 : index
      %c0_79 = arith.constant 0 : index
      %300 = vector.load %arg9[%c0_78, %c0_79] : memref<16x128xf32, #tpu.memory_space<vmem>>, vector<16x128xf32>
      tpu.vector_store %arg9[%c0_78, %c0_79], %299 {strides = array<i32>} : memref<16x128xf32, #tpu.memory_space<vmem>>, vector<16x128xf32>,
      %c0_80 = arith.constant 0 : index
      %c0_81 = arith.constant 0 : index
      %301 = vector.load %arg5[%c0_80, %c0_81] : memref<16x128xf32, #tpu.memory_space<vmem>>, vector<16x128xf32>
      %c0_82 = arith.constant 0 : index
      %c0_83 = arith.constant 0 : index
      %302 = vector.load %arg10[%c0_82, %c0_83] : memref<16x128xf32, #tpu.memory_space<vmem>>, vector<16x128xf32>
      tpu.vector_store %arg10[%c0_82, %c0_83], %301 {strides = array<i32>} : memref<16x128xf32, #tpu.memory_space<vmem>>, vector<16x128xf32>,
    } else {
    }
    %c0 = arith.constant 0 : index
    %c0_1 = arith.constant 0 : index
    %3 = vector.load %arg3[%c0, %c0_1] : memref<128x512xbf16, #tpu.memory_space<vmem>>, vector<128x512xbf16>
    %c0_2 = arith.constant 0 : index
    %c0_3 = arith.constant 0 : index
    %4 = vector.load %arg9[%c0_2, %c0_3] : memref<16x128xf32, #tpu.memory_space<vmem>>, vector<16x128xf32>
    %c0_4 = arith.constant 0 : index
    %c0_5 = arith.constant 0 : index
    %5 = vector.load %arg10[%c0_4, %c0_5] : memref<16x128xf32, #tpu.memory_space<vmem>>, vector<16x128xf32>
    %c0_i32_6 = arith.constant 0 : i32
    %6 = arith.index_cast %c0_i32_6 : i32 to index
    %c0_7 = arith.constant 0 : index
    %c0_8 = arith.constant 0 : index
    %7 = vector.load %arg2[%6, %c0_7, %c0_8] : memref<8x16x512xf32, #tpu.memory_space<vmem>>, vector<1x16x512xf32>
    %8 = vector.shape_cast %7 : vector<1x16x512xf32> to vector<16x512xf32>
    %9 = arith.truncf %4 : vector<16x128xf32> to vector<16x128xbf16>
    %cst = arith.constant dense<0.000000e+00> : vector<16x512xf32>
    %10 = tpu.matmul %9, %3, %cst {dimension_numbers = #tpu.dot_dimension_numbers<[1], [0], [0], [1], [0, 0, 1, 1], [], []>} : vector<16x128xbf16>, vector<128x512xbf16>, vector<16x512xf32> -> vector<16x512xf32>
    %11 = arith.addf %8, %10 : vector<16x512xf32>
    %12 = vector.extract_strided_slice %11 {offsets = [0, 0], sizes = [16, 128], strides = [1, 1]} : vector<16x512xf32> to vector<16x128xf32>
    %13 = arith.negf %12 : vector<16x128xf32>
    %14 = math.exp %13 : vector<16x128xf32>
    %cst_9 = arith.constant 1.000000e+00 : f32
    %15 = vector.broadcast %cst_9 : f32 to vector<16x128xf32>
    %16 = arith.addf %15, %14 : vector<16x128xf32>
    %17 = arith.divf %15, %16 : vector<16x128xf32>
    %18 = vector.extract_strided_slice %11 {offsets = [0, 128], sizes = [16, 128], strides = [1, 1]} : vector<16x512xf32> to vector<16x128xf32>
    %19 = arith.negf %18 : vector<16x128xf32>
    %20 = math.exp %19 : vector<16x128xf32>
    %cst_10 = arith.constant 1.000000e+00 : f32
    %21 = vector.broadcast %cst_10 : f32 to vector<16x128xf32>
    %22 = arith.addf %21, %20 : vector<16x128xf32>
    %23 = arith.divf %21, %22 : vector<16x128xf32>
    %24 = vector.extract_strided_slice %11 {offsets = [0, 256], sizes = [16, 128], strides = [1, 1]} : vector<16x512xf32> to vector<16x128xf32>
    %25 = math.tanh %24 : vector<16x128xf32>
    %26 = vector.extract_strided_slice %11 {offsets = [0, 384], sizes = [16, 128], strides = [1, 1]} : vector<16x512xf32> to vector<16x128xf32>
    %27 = arith.negf %26 : vector<16x128xf32>
    %28 = math.exp %27 : vector<16x128xf32>
    %cst_11 = arith.constant 1.000000e+00 : f32
    %29 = vector.broadcast %cst_11 : f32 to vector<16x128xf32>
    %30 = arith.addf %29, %28 : vector<16x128xf32>
    %31 = arith.divf %29, %30 : vector<16x128xf32>
    %32 = arith.mulf %23, %5 : vector<16x128xf32>
    %33 = arith.mulf %17, %25 : vector<16x128xf32>
    %34 = arith.addf %32, %33 : vector<16x128xf32>
    %35 = math.tanh %34 : vector<16x128xf32>
    %36 = arith.mulf %31, %35 : vector<16x128xf32>
    %37 = arith.truncf %36 : vector<16x128xf32> to vector<16x128xbf16>
    %38 = arith.index_cast %c0_i32_6 : i32 to index
    %c0_12 = arith.constant 0 : index
    %c0_13 = arith.constant 0 : index
    %39 = vector.load %arg6[%38, %c0_12, %c0_13] : memref<8x16x128xbf16, #tpu.memory_space<vmem>>, vector<1x16x128xbf16>
    %40 = vector.shape_cast %39 : vector<1x16x128xbf16> to vector<16x128xbf16>
    %41 = vector.shape_cast %37 : vector<16x128xbf16> to vector<1x16x128xbf16>
    tpu.vector_store %arg6[%38, %c0_12, %c0_13], %41 {strides = array<i32>} : memref<8x16x128xbf16, #tpu.memory_space<vmem>>, vector<1x16x128xbf16>,
    %c1_i32 = arith.constant 1 : i32
    %42 = arith.index_cast %c1_i32 : i32 to index
    %c0_14 = arith.constant 0 : index
    %c0_15 = arith.constant 0 : index
    %43 = vector.load %arg2[%42, %c0_14, %c0_15] : memref<8x16x512xf32, #tpu.memory_space<vmem>>, vector<1x16x512xf32>
    %44 = vector.shape_cast %43 : vector<1x16x512xf32> to vector<16x512xf32>
    %45 = arith.truncf %36 : vector<16x128xf32> to vector<16x128xbf16>
    %cst_16 = arith.constant dense<0.000000e+00> : vector<16x512xf32>
    %46 = tpu.matmul %45, %3, %cst_16 {dimension_numbers = #tpu.dot_dimension_numbers<[1], [0], [0], [1], [0, 0, 1, 1], [], []>} : vector<16x128xbf16>, vector<128x512xbf16>, vector<16x512xf32> -> vector<16x512xf32>
    %47 = arith.addf %44, %46 : vector<16x512xf32>
    %48 = vector.extract_strided_slice %47 {offsets = [0, 0], sizes = [16, 128], strides = [1, 1]} : vector<16x512xf32> to vector<16x128xf32>
    %49 = arith.negf %48 : vector<16x128xf32>
    %50 = math.exp %49 : vector<16x128xf32>
    %cst_17 = arith.constant 1.000000e+00 : f32
    %51 = vector.broadcast %cst_17 : f32 to vector<16x128xf32>
    %52 = arith.addf %51, %50 : vector<16x128xf32>
    %53 = arith.divf %51, %52 : vector<16x128xf32>
    %54 = vector.extract_strided_slice %47 {offsets = [0, 128], sizes = [16, 128], strides = [1, 1]} : vector<16x512xf32> to vector<16x128xf32>
    %55 = arith.negf %54 : vector<16x128xf32>
    %56 = math.exp %55 : vector<16x128xf32>
    %cst_18 = arith.constant 1.000000e+00 : f32
    %57 = vector.broadcast %cst_18 : f32 to vector<16x128xf32>
    %58 = arith.addf %57, %56 : vector<16x128xf32>
    %59 = arith.divf %57, %58 : vector<16x128xf32>
    %60 = vector.extract_strided_slice %47 {offsets = [0, 256], sizes = [16, 128], strides = [1, 1]} : vector<16x512xf32> to vector<16x128xf32>
    %61 = math.tanh %60 : vector<16x128xf32>
    %62 = vector.extract_strided_slice %47 {offsets = [0, 384], sizes = [16, 128], strides = [1, 1]} : vector<16x512xf32> to vector<16x128xf32>
    %63 = arith.negf %62 : vector<16x128xf32>
    %64 = math.exp %63 : vector<16x128xf32>
    %cst_19 = arith.constant 1.000000e+00 : f32
    %65 = vector.broadcast %cst_19 : f32 to vector<16x128xf32>
    %66 = arith.addf %65, %64 : vector<16x128xf32>
    %67 = arith.divf %65, %66 : vector<16x128xf32>
    %68 = arith.mulf %59, %34 : vector<16x128xf32>
    %69 = arith.mulf %53, %61 : vector<16x128xf32>
    %70 = arith.addf %68, %69 : vector<16x128xf32>
    %71 = math.tanh %70 : vector<16x128xf32>
    %72 = arith.mulf %67, %71 : vector<16x128xf32>
    %73 = arith.truncf %72 : vector<16x128xf32> to vector<16x128xbf16>
    %74 = arith.index_cast %c1_i32 : i32 to index
    %c0_20 = arith.constant 0 : index
    %c0_21 = arith.constant 0 : index
    %75 = vector.load %arg6[%74, %c0_20, %c0_21] : memref<8x16x128xbf16, #tpu.memory_space<vmem>>, vector<1x16x128xbf16>
    %76 = vector.shape_cast %75 : vector<1x16x128xbf16> to vector<16x128xbf16>
    %77 = vector.shape_cast %73 : vector<16x128xbf16> to vector<1x16x128xbf16>
    tpu.vector_store %arg6[%74, %c0_20, %c0_21], %77 {strides = array<i32>} : memref<8x16x128xbf16, #tpu.memory_space<vmem>>, vector<1x16x128xbf16>,
    %c2_i32 = arith.constant 2 : i32
    %78 = arith.index_cast %c2_i32 : i32 to index
    %c0_22 = arith.constant 0 : index
    %c0_23 = arith.constant 0 : index
    %79 = vector.load %arg2[%78, %c0_22, %c0_23] : memref<8x16x512xf32, #tpu.memory_space<vmem>>, vector<1x16x512xf32>
    %80 = vector.shape_cast %79 : vector<1x16x512xf32> to vector<16x512xf32>
    %81 = arith.truncf %72 : vector<16x128xf32> to vector<16x128xbf16>
    %cst_24 = arith.constant dense<0.000000e+00> : vector<16x512xf32>
    %82 = tpu.matmul %81, %3, %cst_24 {dimension_numbers = #tpu.dot_dimension_numbers<[1], [0], [0], [1], [0, 0, 1, 1], [], []>} : vector<16x128xbf16>, vector<128x512xbf16>, vector<16x512xf32> -> vector<16x512xf32>
    %83 = arith.addf %80, %82 : vector<16x512xf32>
    %84 = vector.extract_strided_slice %83 {offsets = [0, 0], sizes = [16, 128], strides = [1, 1]} : vector<16x512xf32> to vector<16x128xf32>
    %85 = arith.negf %84 : vector<16x128xf32>
    %86 = math.exp %85 : vector<16x128xf32>
    %cst_25 = arith.constant 1.000000e+00 : f32
    %87 = vector.broadcast %cst_25 : f32 to vector<16x128xf32>
    %88 = arith.addf %87, %86 : vector<16x128xf32>
    %89 = arith.divf %87, %88 : vector<16x128xf32>
    %90 = vector.extract_strided_slice %83 {offsets = [0, 128], sizes = [16, 128], strides = [1, 1]} : vector<16x512xf32> to vector<16x128xf32>
    %91 = arith.negf %90 : vector<16x128xf32>
    %92 = math.exp %91 : vector<16x128xf32>
    %cst_26 = arith.constant 1.000000e+00 : f32
    %93 = vector.broadcast %cst_26 : f32 to vector<16x128xf32>
    %94 = arith.addf %93, %92 : vector<16x128xf32>
    %95 = arith.divf %93, %94 : vector<16x128xf32>
    %96 = vector.extract_strided_slice %83 {offsets = [0, 256], sizes = [16, 128], strides = [1, 1]} : vector<16x512xf32> to vector<16x128xf32>
    %97 = math.tanh %96 : vector<16x128xf32>
    %98 = vector.extract_strided_slice %83 {offsets = [0, 384], sizes = [16, 128], strides = [1, 1]} : vector<16x512xf32> to vector<16x128xf32>
    %99 = arith.negf %98 : vector<16x128xf32>
    %100 = math.exp %99 : vector<16x128xf32>
    %cst_27 = arith.constant 1.000000e+00 : f32
    %101 = vector.broadcast %cst_27 : f32 to vector<16x128xf32>
    %102 = arith.addf %101, %100 : vector<16x128xf32>
    %103 = arith.divf %101, %102 : vector<16x128xf32>
    %104 = arith.mulf %95, %70 : vector<16x128xf32>
    %105 = arith.mulf %89, %97 : vector<16x128xf32>
    %106 = arith.addf %104, %105 : vector<16x128xf32>
    %107 = math.tanh %106 : vector<16x128xf32>
    %108 = arith.mulf %103, %107 : vector<16x128xf32>
    %109 = arith.truncf %108 : vector<16x128xf32> to vector<16x128xbf16>
    %110 = arith.index_cast %c2_i32 : i32 to index
    %c0_28 = arith.constant 0 : index
    %c0_29 = arith.constant 0 : index
    %111 = vector.load %arg6[%110, %c0_28, %c0_29] : memref<8x16x128xbf16, #tpu.memory_space<vmem>>, vector<1x16x128xbf16>
    %112 = vector.shape_cast %111 : vector<1x16x128xbf16> to vector<16x128xbf16>
    %113 = vector.shape_cast %109 : vector<16x128xbf16> to vector<1x16x128xbf16>
    tpu.vector_store %arg6[%110, %c0_28, %c0_29], %113 {strides = array<i32>} : memref<8x16x128xbf16, #tpu.memory_space<vmem>>, vector<1x16x128xbf16>,
    %c3_i32 = arith.constant 3 : i32
    %114 = arith.index_cast %c3_i32 : i32 to index
    %c0_30 = arith.constant 0 : index
    %c0_31 = arith.constant 0 : index
    %115 = vector.load %arg2[%114, %c0_30, %c0_31] : memref<8x16x512xf32, #tpu.memory_space<vmem>>, vector<1x16x512xf32>
    %116 = vector.shape_cast %115 : vector<1x16x512xf32> to vector<16x512xf32>
    %117 = arith.truncf %108 : vector<16x128xf32> to vector<16x128xbf16>
    %cst_32 = arith.constant dense<0.000000e+00> : vector<16x512xf32>
    %118 = tpu.matmul %117, %3, %cst_32 {dimension_numbers = #tpu.dot_dimension_numbers<[1], [0], [0], [1], [0, 0, 1, 1], [], []>} : vector<16x128xbf16>, vector<128x512xbf16>, vector<16x512xf32> -> vector<16x512xf32>
    %119 = arith.addf %116, %118 : vector<16x512xf32>
    %120 = vector.extract_strided_slice %119 {offsets = [0, 0], sizes = [16, 128], strides = [1, 1]} : vector<16x512xf32> to vector<16x128xf32>
    %121 = arith.negf %120 : vector<16x128xf32>
    %122 = math.exp %121 : vector<16x128xf32>
    %cst_33 = arith.constant 1.000000e+00 : f32
    %123 = vector.broadcast %cst_33 : f32 to vector<16x128xf32>
    %124 = arith.addf %123, %122 : vector<16x128xf32>
    %125 = arith.divf %123, %124 : vector<16x128xf32>
    %126 = vector.extract_strided_slice %119 {offsets = [0, 128], sizes = [16, 128], strides = [1, 1]} : vector<16x512xf32> to vector<16x128xf32>
    %127 = arith.negf %126 : vector<16x128xf32>
    %128 = math.exp %127 : vector<16x128xf32>
    %cst_34 = arith.constant 1.000000e+00 : f32
    %129 = vector.broadcast %cst_34 : f32 to vector<16x128xf32>
    %130 = arith.addf %129, %128 : vector<16x128xf32>
    %131 = arith.divf %129, %130 : vector<16x128xf32>
    %132 = vector.extract_strided_slice %119 {offsets = [0, 256], sizes = [16, 128], strides = [1, 1]} : vector<16x512xf32> to vector<16x128xf32>
    %133 = math.tanh %132 : vector<16x128xf32>
    %134 = vector.extract_strided_slice %119 {offsets = [0, 384], sizes = [16, 128], strides = [1, 1]} : vector<16x512xf32> to vector<16x128xf32>
    %135 = arith.negf %134 : vector<16x128xf32>
    %136 = math.exp %135 : vector<16x128xf32>
    %cst_35 = arith.constant 1.000000e+00 : f32
    %137 = vector.broadcast %cst_35 : f32 to vector<16x128xf32>
    %138 = arith.addf %137, %136 : vector<16x128xf32>
    %139 = arith.divf %137, %138 : vector<16x128xf32>
    %140 = arith.mulf %131, %106 : vector<16x128xf32>
    %141 = arith.mulf %125, %133 : vector<16x128xf32>
    %142 = arith.addf %140, %141 : vector<16x128xf32>
    %143 = math.tanh %142 : vector<16x128xf32>
    %144 = arith.mulf %139, %143 : vector<16x128xf32>
    %145 = arith.truncf %144 : vector<16x128xf32> to vector<16x128xbf16>
    %146 = arith.index_cast %c3_i32 : i32 to index
    %c0_36 = arith.constant 0 : index
    %c0_37 = arith.constant 0 : index
    %147 = vector.load %arg6[%146, %c0_36, %c0_37] : memref<8x16x128xbf16, #tpu.memory_space<vmem>>, vector<1x16x128xbf16>
    %148 = vector.shape_cast %147 : vector<1x16x128xbf16> to vector<16x128xbf16>
    %149 = vector.shape_cast %145 : vector<16x128xbf16> to vector<1x16x128xbf16>
    tpu.vector_store %arg6[%146, %c0_36, %c0_37], %149 {strides = array<i32>} : memref<8x16x128xbf16, #tpu.memory_space<vmem>>, vector<1x16x128xbf16>,
    %c4_i32 = arith.constant 4 : i32
    %150 = arith.index_cast %c4_i32 : i32 to index
    %c0_38 = arith.constant 0 : index
    %c0_39 = arith.constant 0 : index
    %151 = vector.load %arg2[%150, %c0_38, %c0_39] : memref<8x16x512xf32, #tpu.memory_space<vmem>>, vector<1x16x512xf32>
    %152 = vector.shape_cast %151 : vector<1x16x512xf32> to vector<16x512xf32>
    %153 = arith.truncf %144 : vector<16x128xf32> to vector<16x128xbf16>
    %cst_40 = arith.constant dense<0.000000e+00> : vector<16x512xf32>
    %154 = tpu.matmul %153, %3, %cst_40 {dimension_numbers = #tpu.dot_dimension_numbers<[1], [0], [0], [1], [0, 0, 1, 1], [], []>} : vector<16x128xbf16>, vector<128x512xbf16>, vector<16x512xf32> -> vector<16x512xf32>
    %155 = arith.addf %152, %154 : vector<16x512xf32>
    %156 = vector.extract_strided_slice %155 {offsets = [0, 0], sizes = [16, 128], strides = [1, 1]} : vector<16x512xf32> to vector<16x128xf32>
    %157 = arith.negf %156 : vector<16x128xf32>
    %158 = math.exp %157 : vector<16x128xf32>
    %cst_41 = arith.constant 1.000000e+00 : f32
    %159 = vector.broadcast %cst_41 : f32 to vector<16x128xf32>
    %160 = arith.addf %159, %158 : vector<16x128xf32>
    %161 = arith.divf %159, %160 : vector<16x128xf32>
    %162 = vector.extract_strided_slice %155 {offsets = [0, 128], sizes = [16, 128], strides = [1, 1]} : vector<16x512xf32> to vector<16x128xf32>
    %163 = arith.negf %162 : vector<16x128xf32>
    %164 = math.exp %163 : vector<16x128xf32>
    %cst_42 = arith.constant 1.000000e+00 : f32
    %165 = vector.broadcast %cst_42 : f32 to vector<16x128xf32>
    %166 = arith.addf %165, %164 : vector<16x128xf32>
    %167 = arith.divf %165, %166 : vector<16x128xf32>
    %168 = vector.extract_strided_slice %155 {offsets = [0, 256], sizes = [16, 128], strides = [1, 1]} : vector<16x512xf32> to vector<16x128xf32>
    %169 = math.tanh %168 : vector<16x128xf32>
    %170 = vector.extract_strided_slice %155 {offsets = [0, 384], sizes = [16, 128], strides = [1, 1]} : vector<16x512xf32> to vector<16x128xf32>
    %171 = arith.negf %170 : vector<16x128xf32>
    %172 = math.exp %171 : vector<16x128xf32>
    %cst_43 = arith.constant 1.000000e+00 : f32
    %173 = vector.broadcast %cst_43 : f32 to vector<16x128xf32>
    %174 = arith.addf %173, %172 : vector<16x128xf32>
    %175 = arith.divf %173, %174 : vector<16x128xf32>
    %176 = arith.mulf %167, %142 : vector<16x128xf32>
    %177 = arith.mulf %161, %169 : vector<16x128xf32>
    %178 = arith.addf %176, %177 : vector<16x128xf32>
    %179 = math.tanh %178 : vector<16x128xf32>
    %180 = arith.mulf %175, %179 : vector<16x128xf32>
    %181 = arith.truncf %180 : vector<16x128xf32> to vector<16x128xbf16>
    %182 = arith.index_cast %c4_i32 : i32 to index
    %c0_44 = arith.constant 0 : index
    %c0_45 = arith.constant 0 : index
    %183 = vector.load %arg6[%182, %c0_44, %c0_45] : memref<8x16x128xbf16, #tpu.memory_space<vmem>>, vector<1x16x128xbf16>
    %184 = vector.shape_cast %183 : vector<1x16x128xbf16> to vector<16x128xbf16>
    %185 = vector.shape_cast %181 : vector<16x128xbf16> to vector<1x16x128xbf16>
    tpu.vector_store %arg6[%182, %c0_44, %c0_45], %185 {strides = array<i32>} : memref<8x16x128xbf16, #tpu.memory_space<vmem>>, vector<1x16x128xbf16>,
    %c5_i32 = arith.constant 5 : i32
    %186 = arith.index_cast %c5_i32 : i32 to index
    %c0_46 = arith.constant 0 : index
    %c0_47 = arith.constant 0 : index
    %187 = vector.load %arg2[%186, %c0_46, %c0_47] : memref<8x16x512xf32, #tpu.memory_space<vmem>>, vector<1x16x512xf32>
    %188 = vector.shape_cast %187 : vector<1x16x512xf32> to vector<16x512xf32>
    %189 = arith.truncf %180 : vector<16x128xf32> to vector<16x128xbf16>
    %cst_48 = arith.constant dense<0.000000e+00> : vector<16x512xf32>
    %190 = tpu.matmul %189, %3, %cst_48 {dimension_numbers = #tpu.dot_dimension_numbers<[1], [0], [0], [1], [0, 0, 1, 1], [], []>} : vector<16x128xbf16>, vector<128x512xbf16>, vector<16x512xf32> -> vector<16x512xf32>
    %191 = arith.addf %188, %190 : vector<16x512xf32>
    %192 = vector.extract_strided_slice %191 {offsets = [0, 0], sizes = [16, 128], strides = [1, 1]} : vector<16x512xf32> to vector<16x128xf32>
    %193 = arith.negf %192 : vector<16x128xf32>
    %194 = math.exp %193 : vector<16x128xf32>
    %cst_49 = arith.constant 1.000000e+00 : f32
    %195 = vector.broadcast %cst_49 : f32 to vector<16x128xf32>
    %196 = arith.addf %195, %194 : vector<16x128xf32>
    %197 = arith.divf %195, %196 : vector<16x128xf32>
    %198 = vector.extract_strided_slice %191 {offsets = [0, 128], sizes = [16, 128], strides = [1, 1]} : vector<16x512xf32> to vector<16x128xf32>
    %199 = arith.negf %198 : vector<16x128xf32>
    %200 = math.exp %199 : vector<16x128xf32>
    %cst_50 = arith.constant 1.000000e+00 : f32
    %201 = vector.broadcast %cst_50 : f32 to vector<16x128xf32>
    %202 = arith.addf %201, %200 : vector<16x128xf32>
    %203 = arith.divf %201, %202 : vector<16x128xf32>
    %204 = vector.extract_strided_slice %191 {offsets = [0, 256], sizes = [16, 128], strides = [1, 1]} : vector<16x512xf32> to vector<16x128xf32>
    %205 = math.tanh %204 : vector<16x128xf32>
    %206 = vector.extract_strided_slice %191 {offsets = [0, 384], sizes = [16, 128], strides = [1, 1]} : vector<16x512xf32> to vector<16x128xf32>
    %207 = arith.negf %206 : vector<16x128xf32>
    %208 = math.exp %207 : vector<16x128xf32>
    %cst_51 = arith.constant 1.000000e+00 : f32
    %209 = vector.broadcast %cst_51 : f32 to vector<16x128xf32>
    %210 = arith.addf %209, %208 : vector<16x128xf32>
    %211 = arith.divf %209, %210 : vector<16x128xf32>
    %212 = arith.mulf %203, %178 : vector<16x128xf32>
    %213 = arith.mulf %197, %205 : vector<16x128xf32>
    %214 = arith.addf %212, %213 : vector<16x128xf32>
    %215 = math.tanh %214 : vector<16x128xf32>
    %216 = arith.mulf %211, %215 : vector<16x128xf32>
    %217 = arith.truncf %216 : vector<16x128xf32> to vector<16x128xbf16>
    %218 = arith.index_cast %c5_i32 : i32 to index
    %c0_52 = arith.constant 0 : index
    %c0_53 = arith.constant 0 : index
    %219 = vector.load %arg6[%218, %c0_52, %c0_53] : memref<8x16x128xbf16, #tpu.memory_space<vmem>>, vector<1x16x128xbf16>
    %220 = vector.shape_cast %219 : vector<1x16x128xbf16> to vector<16x128xbf16>
    %221 = vector.shape_cast %217 : vector<16x128xbf16> to vector<1x16x128xbf16>
    tpu.vector_store %arg6[%218, %c0_52, %c0_53], %221 {strides = array<i32>} : memref<8x16x128xbf16, #tpu.memory_space<vmem>>, vector<1x16x128xbf16>,
    %c6_i32 = arith.constant 6 : i32
    %222 = arith.index_cast %c6_i32 : i32 to index
    %c0_54 = arith.constant 0 : index
    %c0_55 = arith.constant 0 : index
    %223 = vector.load %arg2[%222, %c0_54, %c0_55] : memref<8x16x512xf32, #tpu.memory_space<vmem>>, vector<1x16x512xf32>
    %224 = vector.shape_cast %223 : vector<1x16x512xf32> to vector<16x512xf32>
    %225 = arith.truncf %216 : vector<16x128xf32> to vector<16x128xbf16>
    %cst_56 = arith.constant dense<0.000000e+00> : vector<16x512xf32>
    %226 = tpu.matmul %225, %3, %cst_56 {dimension_numbers = #tpu.dot_dimension_numbers<[1], [0], [0], [1], [0, 0, 1, 1], [], []>} : vector<16x128xbf16>, vector<128x512xbf16>, vector<16x512xf32> -> vector<16x512xf32>
    %227 = arith.addf %224, %226 : vector<16x512xf32>
    %228 = vector.extract_strided_slice %227 {offsets = [0, 0], sizes = [16, 128], strides = [1, 1]} : vector<16x512xf32> to vector<16x128xf32>
    %229 = arith.negf %228 : vector<16x128xf32>
    %230 = math.exp %229 : vector<16x128xf32>
    %cst_57 = arith.constant 1.000000e+00 : f32
    %231 = vector.broadcast %cst_57 : f32 to vector<16x128xf32>
    %232 = arith.addf %231, %230 : vector<16x128xf32>
    %233 = arith.divf %231, %232 : vector<16x128xf32>
    %234 = vector.extract_strided_slice %227 {offsets = [0, 128], sizes = [16, 128], strides = [1, 1]} : vector<16x512xf32> to vector<16x128xf32>
    %235 = arith.negf %234 : vector<16x128xf32>
    %236 = math.exp %235 : vector<16x128xf32>
    %cst_58 = arith.constant 1.000000e+00 : f32
    %237 = vector.broadcast %cst_58 : f32 to vector<16x128xf32>
    %238 = arith.addf %237, %236 : vector<16x128xf32>
    %239 = arith.divf %237, %238 : vector<16x128xf32>
    %240 = vector.extract_strided_slice %227 {offsets = [0, 256], sizes = [16, 128], strides = [1, 1]} : vector<16x512xf32> to vector<16x128xf32>
    %241 = math.tanh %240 : vector<16x128xf32>
    %242 = vector.extract_strided_slice %227 {offsets = [0, 384], sizes = [16, 128], strides = [1, 1]} : vector<16x512xf32> to vector<16x128xf32>
    %243 = arith.negf %242 : vector<16x128xf32>
    %244 = math.exp %243 : vector<16x128xf32>
    %cst_59 = arith.constant 1.000000e+00 : f32
    %245 = vector.broadcast %cst_59 : f32 to vector<16x128xf32>
    %246 = arith.addf %245, %244 : vector<16x128xf32>
    %247 = arith.divf %245, %246 : vector<16x128xf32>
    %248 = arith.mulf %239, %214 : vector<16x128xf32>
    %249 = arith.mulf %233, %241 : vector<16x128xf32>
    %250 = arith.addf %248, %249 : vector<16x128xf32>
    %251 = math.tanh %250 : vector<16x128xf32>
    %252 = arith.mulf %247, %251 : vector<16x128xf32>
    %253 = arith.truncf %252 : vector<16x128xf32> to vector<16x128xbf16>
    %254 = arith.index_cast %c6_i32 : i32 to index
    %c0_60 = arith.constant 0 : index
    %c0_61 = arith.constant 0 : index
    %255 = vector.load %arg6[%254, %c0_60, %c0_61] : memref<8x16x128xbf16, #tpu.memory_space<vmem>>, vector<1x16x128xbf16>
    %256 = vector.shape_cast %255 : vector<1x16x128xbf16> to vector<16x128xbf16>
    %257 = vector.shape_cast %253 : vector<16x128xbf16> to vector<1x16x128xbf16>
    tpu.vector_store %arg6[%254, %c0_60, %c0_61], %257 {strides = array<i32>} : memref<8x16x128xbf16, #tpu.memory_space<vmem>>, vector<1x16x128xbf16>,
    %c7_i32 = arith.constant 7 : i32
    %258 = arith.index_cast %c7_i32 : i32 to index
    %c0_62 = arith.constant 0 : index
    %c0_63 = arith.constant 0 : index
    %259 = vector.load %arg2[%258, %c0_62, %c0_63] : memref<8x16x512xf32, #tpu.memory_space<vmem>>, vector<1x16x512xf32>
    %260 = vector.shape_cast %259 : vector<1x16x512xf32> to vector<16x512xf32>
    %261 = arith.truncf %252 : vector<16x128xf32> to vector<16x128xbf16>
    %cst_64 = arith.constant dense<0.000000e+00> : vector<16x512xf32>
    %262 = tpu.matmul %261, %3, %cst_64 {dimension_numbers = #tpu.dot_dimension_numbers<[1], [0], [0], [1], [0, 0, 1, 1], [], []>} : vector<16x128xbf16>, vector<128x512xbf16>, vector<16x512xf32> -> vector<16x512xf32>
    %263 = arith.addf %260, %262 : vector<16x512xf32>
    %264 = vector.extract_strided_slice %263 {offsets = [0, 0], sizes = [16, 128], strides = [1, 1]} : vector<16x512xf32> to vector<16x128xf32>
    %265 = arith.negf %264 : vector<16x128xf32>
    %266 = math.exp %265 : vector<16x128xf32>
    %cst_65 = arith.constant 1.000000e+00 : f32
    %267 = vector.broadcast %cst_65 : f32 to vector<16x128xf32>
    %268 = arith.addf %267, %266 : vector<16x128xf32>
    %269 = arith.divf %267, %268 : vector<16x128xf32>
    %270 = vector.extract_strided_slice %263 {offsets = [0, 128], sizes = [16, 128], strides = [1, 1]} : vector<16x512xf32> to vector<16x128xf32>
    %271 = arith.negf %270 : vector<16x128xf32>
    %272 = math.exp %271 : vector<16x128xf32>
    %cst_66 = arith.constant 1.000000e+00 : f32
    %273 = vector.broadcast %cst_66 : f32 to vector<16x128xf32>
    %274 = arith.addf %273, %272 : vector<16x128xf32>
    %275 = arith.divf %273, %274 : vector<16x128xf32>
    %276 = vector.extract_strided_slice %263 {offsets = [0, 256], sizes = [16, 128], strides = [1, 1]} : vector<16x512xf32> to vector<16x128xf32>
    %277 = math.tanh %276 : vector<16x128xf32>
    %278 = vector.extract_strided_slice %263 {offsets = [0, 384], sizes = [16, 128], strides = [1, 1]} : vector<16x512xf32> to vector<16x128xf32>
    %279 = arith.negf %278 : vector<16x128xf32>
    %280 = math.exp %279 : vector<16x128xf32>
    %cst_67 = arith.constant 1.000000e+00 : f32
    %281 = vector.broadcast %cst_67 : f32 to vector<16x128xf32>
    %282 = arith.addf %281, %280 : vector<16x128xf32>
    %283 = arith.divf %281, %282 : vector<16x128xf32>
    %284 = arith.mulf %275, %250 : vector<16x128xf32>
    %285 = arith.mulf %269, %277 : vector<16x128xf32>
    %286 = arith.addf %284, %285 : vector<16x128xf32>
    %287 = math.tanh %286 : vector<16x128xf32>
    %288 = arith.mulf %283, %287 : vector<16x128xf32>
    %289 = arith.truncf %288 : vector<16x128xf32> to vector<16x128xbf16>
    %290 = arith.index_cast %c7_i32 : i32 to index
    %c0_68 = arith.constant 0 : index
    %c0_69 = arith.constant 0 : index
    %291 = vector.load %arg6[%290, %c0_68, %c0_69] : memref<8x16x128xbf16, #tpu.memory_space<vmem>>, vector<1x16x128xbf16>
    %292 = vector.shape_cast %291 : vector<1x16x128xbf16> to vector<16x128xbf16>
    %293 = vector.shape_cast %289 : vector<16x128xbf16> to vector<1x16x128xbf16>
    tpu.vector_store %arg6[%290, %c0_68, %c0_69], %293 {strides = array<i32>} : memref<8x16x128xbf16, #tpu.memory_space<vmem>>, vector<1x16x128xbf16>,
    %c8_i32 = arith.constant 8 : i32
    %c0_70 = arith.constant 0 : index
    %c0_71 = arith.constant 0 : index
    %294 = vector.load %arg9[%c0_70, %c0_71] : memref<16x128xf32, #tpu.memory_space<vmem>>, vector<16x128xf32>
    tpu.vector_store %arg9[%c0_70, %c0_71], %288 {strides = array<i32>} : memref<16x128xf32, #tpu.memory_space<vmem>>, vector<16x128xf32>,
    %c0_72 = arith.constant 0 : index
    %c0_73 = arith.constant 0 : index
    %295 = vector.load %arg10[%c0_72, %c0_73] : memref<16x128xf32, #tpu.memory_space<vmem>>, vector<16x128xf32>
    tpu.vector_store %arg10[%c0_72, %c0_73], %286 {strides = array<i32>} : memref<16x128xf32, #tpu.memory_space<vmem>>, vector<16x128xf32>,
    %c0_i32_74 = arith.constant 0 : i32
    %296 = arith.cmpi eq, %arg1, %c0_i32_74 : i32
    %297 = arith.extui %296 : i1 to i32
    %c0_i32_75 = arith.constant 0 : i32
    %298 = arith.cmpi ne, %297, %c0_i32_75 : i32
    scf.if %298 {
      %c0_76 = arith.constant 0 : index
      %c0_77 = arith.constant 0 : index
      %299 = vector.load %arg7[%c0_76, %c0_77] : memref<16x128xf32, #tpu.memory_space<vmem>>, vector<16x128xf32>
      tpu.vector_store %arg7[%c0_76, %c0_77], %288 {strides = array<i32>} : memref<16x128xf32, #tpu.memory_space<vmem>>, vector<16x128xf32>,
      %c0_78 = arith.constant 0 : index
      %c0_79 = arith.constant 0 : index
      %300 = vector.load %arg8[%c0_78, %c0_79] : memref<16x128xf32, #tpu.memory_space<vmem>>, vector<16x128xf32>
      tpu.vector_store %arg8[%c0_78, %c0_79], %286 {strides = array<i32>} : memref<16x128xf32, #tpu.memory_space<vmem>>, vector<16x128xf32>,
    } else {
    }
    return
  }
  func.func @transform_0(%arg0: i32, %arg1: i32) -> (i32, i32, i32) {
    %c0_i32 = arith.constant 0 : i32
    %c0_i32_0 = arith.constant 0 : i32
    return %arg1, %arg0, %c0_i32 : i32, i32, i32
  }
  func.func @transform_1(%arg0: i32, %arg1: i32) -> (i32, i32) {
    %c0_i32 = arith.constant 0 : i32
    %c0_i32_0 = arith.constant 0 : i32
    %c0_i32_1 = arith.constant 0 : i32
    return %c0_i32, %c0_i32_0 : i32, i32
  }
  func.func @transform_2(%arg0: i32, %arg1: i32) -> (i32, i32) {
    %c0_i32 = arith.constant 0 : i32
    %c0_i32_0 = arith.constant 0 : i32
    return %arg0, %c0_i32 : i32, i32
  }
  func.func @transform_3(%arg0: i32, %arg1: i32) -> (i32, i32) {
    %c0_i32 = arith.constant 0 : i32
    %c0_i32_0 = arith.constant 0 : i32
    return %arg0, %c0_i32 : i32, i32
  }
  func.func @transform_4(%arg0: i32, %arg1: i32) -> (i32, i32, i32) {
    %c0_i32 = arith.constant 0 : i32
    %c0_i32_0 = arith.constant 0 : i32
    return %arg1, %arg0, %c0_i32 : i32, i32, i32
  }
  func.func @transform_5(%arg0: i32, %arg1: i32) -> (i32, i32) {
    %c0_i32 = arith.constant 0 : i32
    %c0_i32_0 = arith.constant 0 : i32
    return %arg0, %c0_i32 : i32, i32
  }
  func.func @transform_6(%arg0: i32, %arg1: i32) -> (i32, i32) {
    %c0_i32 = arith.constant 0 : i32
    %c0_i32_0 = arith.constant 0 : i32
    return %arg0, %c0_i32 : i32, i32
  }
}

</mosaic_0001>

<llo_original>
// kernel: encoder_forward.3
$region0: #{encoder_forward.3}
  #allocation0 [shape = 'u32[]', space=smem, size = 0x4, offset = 0x4, fixed_abs, tag = 'smem constant byte address 0x4 - core index']
  #allocation1 [shape = 'u32[144,128]{1,0:T(1,128)}', space=vmem, size = 0x12000, scoped, tag = 'internal scratch']
  #allocation2 [shape = 'f32[16,128]{1,0:T(8,128)}', space=vmem, size = 0x2000, scoped, tag = 'scratch operand']
  #allocation3 [shape = 'f32[16,128]{1,0:T(8,128)}', space=vmem, size = 0x2000, scoped, tag = 'scratch operand']
  %s0 = inlined_call_operand.vmem [shape: f32[8,16,512], index: 0, kind: input, shape index: {}]
  %s1 = inlined_call_operand.vmem [shape: bf16[128,512], index: 1, kind: input, shape index: {}]
  %s2 = inlined_call_operand.vmem [shape: f32[16,128], index: 2, kind: input, shape index: {}]
  %s3 = inlined_call_operand.vmem [shape: f32[16,128], index: 3, kind: input, shape index: {}]
  %s4 = inlined_call_operand.hbm [shape: bf16[8,16,128], index: 4, kind: output, shape index: {0}]
  %s5 = inlined_call_operand.vmem [shape: f32[16,128], index: 5, kind: output, shape index: {1}]
  %s6 = inlined_call_operand.vmem [shape: f32[16,128], index: 6, kind: output, shape index: {2}]
  %7 = xla_tuple %s4, %s5, %s6
  %s8 = sld [smem:[#allocation0]]
  $region50: #{encoder_forward.3} parent=0
    _
  %s10 = ssub.s32 1, %s8
  %s11 = scalar_select 0, %s10, %s8
  $region1: #{encoder_forward.3} parent=0
    #allocation4 [shape = 'u8[32768]{0}', space=vmem, size = 0x8000, scoped, tag = 'output window, operand 0, single buffered']
    #allocation5 [shape = 's32[1]{0}', space=sflag, size = 0x4, scoped, tag = 'scoped memory for encoder_forward.3']
    %12 = vsyncpa [#allocation5], 0
    // Predicated region
    $region2: #{encoder_forward.3} parent=1 // pred_check
      _
    $region3: #{encoder_forward.3} parent=1 // pred_check_branch
      %14 = sbr.rel (0) target = $region5
    $region4: #{encoder_forward.3} parent=1 // pred_region
      _
    $region5: #{encoder_forward.3} parent=1 // pred_fallthru
      _
    // Predicated region
    $region6: #{encoder_forward.3} parent=1 // pred_check
      _
    $region7: #{encoder_forward.3} parent=1 // pred_check_branch
      %16 = sbr.rel (0) target = $region9
    $region8: #{encoder_forward.3} parent=1 // pred_region
      _
    $region9: #{encoder_forward.3} parent=1 // pred_fallthru
      _
    // Predicated region
    $region10: #{encoder_forward.3} parent=1 // pred_check
      _
    $region11: #{encoder_forward.3} parent=1 // pred_check_branch
      %18 = sbr.rel (0) target = $region13
    $region12: #{encoder_forward.3} parent=1 // pred_region
      _
    $region13: #{encoder_forward.3} parent=1 // pred_fallthru
      _
    // Predicated region
    $region14: #{encoder_forward.3} parent=1 // pred_check
      _
    $region15: #{encoder_forward.3} parent=1 // pred_check_branch
      %20 = sbr.rel (0) target = $region17
    $region16: #{encoder_forward.3} parent=1 // pred_region
      _
    $region17: #{encoder_forward.3} parent=1 // pred_fallthru
      _
    %p22 = scmp.eq.s32.totalorder 0, 0
    // Predicated region
    $region18: #{encoder_forward.3} parent=1 // pred_check
      %p23 = pneg %p22
    $region19: #{encoder_forward.3} parent=1 // pred_check_branch
      %25 = sbr.rel (%p23) target = $region21
    $region20: #{encoder_forward.3} parent=1 // pred_region
      %v26 = vld [vmem:[%s2] sm:$0xff]
      %v27 = vld [vmem:[%s2 + $0x8] sm:$0xff]
      %28 = vst [vmem:[#allocation2] sm:$0xff] %v26
      %29 = vst [vmem:[#allocation2 + $0x8] sm:$0xff] %v27
      %v30 = vld [vmem:[%s3] sm:$0xff]
      %v31 = vld [vmem:[%s3 + $0x8] sm:$0xff]
      %32 = vst [vmem:[#allocation3] sm:$0xff] %v30
      %33 = vst [vmem:[#allocation3 + $0x8] sm:$0xff] %v31
    $region21: #{encoder_forward.3} parent=1 // pred_fallthru
      _
    %v34 = vld [vmem:[%s1] sm:$0xff]
    %v35 = vld [vmem:[%s1 + $0x8] sm:$0xff]
    %v36 = vld [vmem:[%s1 + $0x10] sm:$0xff]
    %v37 = vld [vmem:[%s1 + $0x18] sm:$0xff]
    %v38 = vld [vmem:[%s1 + $0x20] sm:$0xff]
    %v39 = vld [vmem:[%s1 + $0x28] sm:$0xff]
    %v40 = vld [vmem:[%s1 + $0x30] sm:$0xff]
    %v41 = vld [vmem:[%s1 + $0x38] sm:$0xff]
    %v42 = vld [vmem:[%s1 + $0x40] sm:$0xff]
    %v43 = vld [vmem:[%s1 + $0x48] sm:$0xff]
    %v44 = vld [vmem:[%s1 + $0x50] sm:$0xff]
    %v45 = vld [vmem:[%s1 + $0x58] sm:$0xff]
    %v46 = vld [vmem:[%s1 + $0x60] sm:$0xff]
    %v47 = vld [vmem:[%s1 + $0x68] sm:$0xff]
    %v48 = vld [vmem:[%s1 + $0x70] sm:$0xff]
    %v49 = vld [vmem:[%s1 + $0x78] sm:$0xff]
    %v50 = vld [vmem:[%s1 + $0x80] sm:$0xff]
    %v51 = vld [vmem:[%s1 + $0x88] sm:$0xff]
    %v52 = vld [vmem:[%s1 + $0x90] sm:$0xff]
    %v53 = vld [vmem:[%s1 + $0x98] sm:$0xff]
    %v54 = vld [vmem:[%s1 + $0xa0] sm:$0xff]
    %v55 = vld [vmem:[%s1 + $0xa8] sm:$0xff]
    %v56 = vld [vmem:[%s1 + $0xb0] sm:$0xff]
    %v57 = vld [vmem:[%s1 + $0xb8] sm:$0xff]
    %v58 = vld [vmem:[%s1 + $0xc0] sm:$0xff]
    %v59 = vld [vmem:[%s1 + $0xc8] sm:$0xff]
    %v60 = vld [vmem:[%s1 + $0xd0] sm:$0xff]
    %v61 = vld [vmem:[%s1 + $0xd8] sm:$0xff]
    %v62 = vld [vmem:[%s1 + $0xe0] sm:$0xff]
    %v63 = vld [vmem:[%s1 + $0xe8] sm:$0xff]
    %v64 = vld [vmem:[%s1 + $0xf0] sm:$0xff]
    %v65 = vld [vmem:[%s1 + $0xf8] sm:$0xff]
    %v66 = vld [vmem:[#allocation2] sm:$0xff]
    %v67 = vld [vmem:[#allocation2 + $0x8] sm:$0xff]
    %v68 = vld [vmem:[#allocation3] sm:$0xff]
    %v69 = vld [vmem:[#allocation3 + $0x8] sm:$0xff]
    %v70 = vld [vmem:[%s0] sm:$0xff]
    %v71 = vld [vmem:[%s0 + $0x8] sm:$0xff]
    %v72 = vld [vmem:[%s0 + $0x10] sm:$0xff]
    %v73 = vld [vmem:[%s0 + $0x18] sm:$0xff]
    %v74 = vld [vmem:[%s0 + $0x20] sm:$0xff]
    %v75 = vld [vmem:[%s0 + $0x28] sm:$0xff]
    %v76 = vld [vmem:[%s0 + $0x30] sm:$0xff]
    %v77 = vld [vmem:[%s0 + $0x38] sm:$0xff]
    %v78 = vpack.c.bf16 %v67, %v66
    %v111 = vunpack.c.l.b16 %v34
    %v112 = vunpack.c.h.b16 %v34
    %v113 = vunpack.c.l.b16 %v35
    %v114 = vunpack.c.h.b16 %v35
    %v115 = vunpack.c.l.b16 %v36
    %v116 = vunpack.c.h.b16 %v36
    %v117 = vunpack.c.l.b16 %v37
    %v118 = vunpack.c.h.b16 %v37
    %v119 = vunpack.c.l.b16 %v38
    %v120 = vunpack.c.h.b16 %v38
    %v121 = vunpack.c.l.b16 %v39
    %v122 = vunpack.c.h.b16 %v39
    %v123 = vunpack.c.l.b16 %v40
    %v124 = vunpack.c.h.b16 %v40
    %v125 = vunpack.c.l.b16 %v41
    %v126 = vunpack.c.h.b16 %v41
    %v127 = vunpack.c.l.b16 %v42
    %v128 = vunpack.c.h.b16 %v42
    %v129 = vunpack.c.l.b16 %v43
    %v130 = vunpack.c.h.b16 %v43
    %v131 = vunpack.c.l.b16 %v44
    %v132 = vunpack.c.h.b16 %v44
    %v133 = vunpack.c.l.b16 %v45
    %v134 = vunpack.c.h.b16 %v45
    %v135 = vunpack.c.l.b16 %v46
    %v136 = vunpack.c.h.b16 %v46
    %v137 = vunpack.c.l.b16 %v47
    %v138 = vunpack.c.h.b16 %v47
    %v139 = vunpack.c.l.b16 %v48
    %v140 = vunpack.c.h.b16 %v48
    %v141 = vunpack.c.l.b16 %v49
    %v142 = vunpack.c.h.b16 %v49
    %v143 = vunpack.c.l.b16 %v50
    %v144 = vunpack.c.h.b16 %v50
    %v145 = vunpack.c.l.b16 %v51
    %v146 = vunpack.c.h.b16 %v51
    %v147 = vunpack.c.l.b16 %v52
    %v148 = vunpack.c.h.b16 %v52
    %v149 = vunpack.c.l.b16 %v53
    %v150 = vunpack.c.h.b16 %v53
    %v151 = vunpack.c.l.b16 %v54
    %v152 = vunpack.c.h.b16 %v54
    %v153 = vunpack.c.l.b16 %v55
    %v154 = vunpack.c.h.b16 %v55
    %v155 = vunpack.c.l.b16 %v56
    %v156 = vunpack.c.h.b16 %v56
    %v157 = vunpack.c.l.b16 %v57
    %v158 = vunpack.c.h.b16 %v57
    %v159 = vunpack.c.l.b16 %v58
    %v160 = vunpack.c.h.b16 %v58
    %v161 = vunpack.c.l.b16 %v59
    %v162 = vunpack.c.h.b16 %v59
    %v163 = vunpack.c.l.b16 %v60
    %v164 = vunpack.c.h.b16 %v60
    %v165 = vunpack.c.l.b16 %v61
    %v166 = vunpack.c.h.b16 %v61
    %v167 = vunpack.c.l.b16 %v62
    %v168 = vunpack.c.h.b16 %v62
    %v169 = vunpack.c.l.b16 %v63
    %v170 = vunpack.c.h.b16 %v63
    %v171 = vunpack.c.l.b16 %v64
    %v172 = vunpack.c.h.b16 %v64
    %v173 = vunpack.c.l.b16 %v65
    %v174 = vunpack.c.h.b16 %v65
    %v175 = vpack.c.b16 %v115, %v111
    %v176 = vpack.c.b16 %v116, %v112
    %v177 = vpack.c.b16 %v117, %v113
    %v178 = vpack.c.b16 %v118, %v114
    %v179 = vpack.c.b16 %v123, %v119
    %v180 = vpack.c.b16 %v124, %v120
    %v181 = vpack.c.b16 %v125, %v121
    %v182 = vpack.c.b16 %v126, %v122
    %v183 = vpack.c.b16 %v131, %v127
    %v184 = vpack.c.b16 %v132, %v128
    %v185 = vpack.c.b16 %v133, %v129
    %v186 = vpack.c.b16 %v134, %v130
    %v187 = vpack.c.b16 %v139, %v135
    %v188 = vpack.c.b16 %v140, %v136
    %v189 = vpack.c.b16 %v141, %v137
    %v190 = vpack.c.b16 %v142, %v138
    %v191 = vpack.c.b16 %v147, %v143
    %v192 = vpack.c.b16 %v148, %v144
    %v193 = vpack.c.b16 %v149, %v145
    %v194 = vpack.c.b16 %v150, %v146
    %v195 = vpack.c.b16 %v155, %v151
    %v196 = vpack.c.b16 %v156, %v152
    %v197 = vpack.c.b16 %v157, %v153
    %v198 = vpack.c.b16 %v158, %v154
    %v199 = vpack.c.b16 %v163, %v159
    %v200 = vpack.c.b16 %v164, %v160
    %v201 = vpack.c.b16 %v165, %v161
    %v202 = vpack.c.b16 %v166, %v162
    %v203 = vpack.c.b16 %v171, %v167
    %v204 = vpack.c.b16 %v172, %v168
    %v205 = vpack.c.b16 %v173, %v169
    %v206 = vpack.c.b16 %v174, %v170
    %239 = vmatprep.subr.bf16.mxu0 %v176
    %240 = vmatpush1.bf16.msra.mxu0 %v175
    %241 = vmatprep.subr.bf16.mxu0 %v180
    %242 = vmatpush1.bf16.msra.mxu0 %v179
    %243 = vmatprep.subr.bf16.mxu0 %v184
    %244 = vmatpush1.bf16.msra.mxu0 %v183
    %245 = vmatprep.subr.bf16.mxu0 %v188
    %246 = vmatpush1.bf16.msra.mxu0 %v187
    %247 = vmatprep.subr.bf16.mxu0 %v192
    %248 = vmatpush1.bf16.msra.mxu0 %v191
    %249 = vmatprep.subr.bf16.mxu0 %v196
    %250 = vmatpush1.bf16.msra.mxu0 %v195
    %251 = vmatprep.subr.bf16.mxu0 %v200
    %252 = vmatpush1.bf16.msra.mxu0 %v199
    %253 = vmatprep.subr.bf16.mxu0 %v204
    %254 = vmatpush1.bf16.msra.mxu0 %v203
    %255 = vmatprep.subr.bf16.mxu0 0
    %256 = vmatpush1.bf16.msra.mxu0 0
    %257 = vmatprep.subr.bf16.mxu0 0
    %258 = vmatpush1.bf16.msra.mxu0 0
    %259 = vmatprep.subr.bf16.mxu0 0
    %260 = vmatpush1.bf16.msra.mxu0 0
    %261 = vmatprep.subr.bf16.mxu0 0
    %262 = vmatpush1.bf16.msra.mxu0 0
    %263 = vmatprep.subr.bf16.mxu0 0
    %264 = vmatpush1.bf16.msra.mxu0 0
    %265 = vmatprep.subr.bf16.mxu0 0
    %266 = vmatpush1.bf16.msra.mxu0 0
    %267 = vmatprep.subr.bf16.mxu0 0
    %268 = vmatpush1.bf16.msra.mxu0 0
    %269 = vmatprep.subr.bf16.mxu0 0
    %270 = vmatpush1.bf16.msra.mxu0 0
    %271 = vmatprep.mubr.bf16.mxu0 0
    %272 = vmatmul.mubr.bf16.gmra.mrb[0].mxu0 %v78
    %v273 = vpop.f32.mrb[0].mxu0
    %v274 = vadd.f32 0.0, %v273
    %v275 = vpop.f32.mrb[0].mxu0
    %v276 = vadd.f32 0.0, %v275
    %v277 = vpop.f32.mrb[0].mxu0
    %v278 = vadd.f32 0.0, %v277
    %v279 = vpop.f32.mrb[0].mxu0
    %v280 = vadd.f32 0.0, %v279
    %281 = vdwg.mxu0
    %282 = vmatprep.subr.bf16.mxu0 %v178
    %283 = vmatpush1.bf16.msra.mxu0 %v177
    %284 = vmatprep.subr.bf16.mxu0 %v182
    %285 = vmatpush1.bf16.msra.mxu0 %v181
    %286 = vmatprep.subr.bf16.mxu0 %v186
    %287 = vmatpush1.bf16.msra.mxu0 %v185
    %288 = vmatprep.subr.bf16.mxu0 %v190
    %289 = vmatpush1.bf16.msra.mxu0 %v189
    %290 = vmatprep.subr.bf16.mxu0 %v194
    %291 = vmatpush1.bf16.msra.mxu0 %v193
    %292 = vmatprep.subr.bf16.mxu0 %v198
    %293 = vmatpush1.bf16.msra.mxu0 %v197
    %294 = vmatprep.subr.bf16.mxu0 %v202
    %295 = vmatpush1.bf16.msra.mxu0 %v201
    %296 = vmatprep.subr.bf16.mxu0 %v206
    %297 = vmatpush1.bf16.msra.mxu0 %v205
    %298 = vmatprep.subr.bf16.mxu0 0
    %299 = vmatpush1.bf16.msra.mxu0 0
    %300 = vmatprep.subr.bf16.mxu0 0
    %301 = vmatpush1.bf16.msra.mxu0 0
    %302 = vmatprep.subr.bf16.mxu0 0
    %303 = vmatpush1.bf16.msra.mxu0 0
    %304 = vmatprep.subr.bf16.mxu0 0
    %305 = vmatpush1.bf16.msra.mxu0 0
    %306 = vmatprep.subr.bf16.mxu0 0
    %307 = vmatpush1.bf16.msra.mxu0 0
    %308 = vmatprep.subr.bf16.mxu0 0
    %309 = vmatpush1.bf16.msra.mxu0 0
    %310 = vmatprep.subr.bf16.mxu0 0
    %311 = vmatpush1.bf16.msra.mxu0 0
    %312 = vmatprep.subr.bf16.mxu0 0
    %313 = vmatpush1.bf16.msra.mxu0 0
    %314 = vmatprep.mubr.bf16.mxu0 0
    %315 = vmatmul.mubr.bf16.gmra.mrb[0].mxu0 %v78
    %v316 = vpop.f32.mrb[0].mxu0
    %v317 = vadd.f32 0.0, %v316
    %v318 = vpop.f32.mrb[0].mxu0
    %v319 = vadd.f32 0.0, %v318
    %v320 = vpop.f32.mrb[0].mxu0
    %v321 = vadd.f32 0.0, %v320
    %v322 = vpop.f32.mrb[0].mxu0
    %v323 = vadd.f32 0.0, %v322
    %324 = vdwg.mxu0
    %v325 = vadd.f32 %v70, %v274
    %v326 = vadd.f32 %v71, %v276
    %v327 = vadd.f32 %v72, %v317
    %v328 = vadd.f32 %v73, %v319
    %v329 = vadd.f32 %v74, %v278
    %v330 = vadd.f32 %v75, %v280
    %v331 = vadd.f32 %v76, %v321
    %v332 = vadd.f32 %v77, %v323
    %v333 = vxor.u32 %v325, 2147483648
    %v334 = vxor.u32 %v329, 2147483648
    %v335 = vmul.f32 %v333, 1.442695
    %v336 = vpow.pop %v335
    %v337 = vmul.f32 %v334, 1.442695
    %v338 = vpow.pop %v337
    %v339 = vadd.f32 %v336, 1.0
    %v340 = vadd.f32 %v338, 1.0
    %v341 = vrcp.pop %v339
    %v342 = vmul.f32 1.0, %v341
    %v343 = vrcp.pop %v340
    %v344 = vmul.f32 1.0, %v343
    %v345 = vxor.u32 %v326, 2147483648
    %v346 = vxor.u32 %v330, 2147483648
    %v347 = vmul.f32 %v345, 1.442695
    %v348 = vpow.pop %v347
    %v349 = vmul.f32 %v346, 1.442695
    %v350 = vpow.pop %v349
    %v351 = vadd.f32 %v348, 1.0
    %v352 = vadd.f32 %v350, 1.0
    %v353 = vrcp.pop %v351
    %v354 = vmul.f32 1.0, %v353
    %v355 = vrcp.pop %v352
    %v356 = vmul.f32 1.0, %v355
    %v357 = vtanh.pop %v327
    %v358 = vtanh.pop %v331
    %v359 = vxor.u32 %v328, 2147483648
    %v360 = vxor.u32 %v332, 2147483648
    %v361 = vmul.f32 %v359, 1.442695
    %v362 = vpow.pop %v361
    %v363 = vmul.f32 %v360, 1.442695
    %v364 = vpow.pop %v363
    %v365 = vadd.f32 %v362, 1.0
    %v366 = vadd.f32 %v364, 1.0
    %v367 = vrcp.pop %v365
    %v368 = vmul.f32 1.0, %v367
    %v369 = vrcp.pop %v366
    %v370 = vmul.f32 1.0, %v369
    %v371 = vmul.f32 %v354, %v68
    %v372 = vmul.f32 %v356, %v69
    %v373 = vmul.f32 %v342, %v357
    %v374 = vmul.f32 %v344, %v358
    %v375 = vadd.f32 %v371, %v373
    %v376 = vadd.f32 %v372, %v374
    %v377 = vtanh.pop %v375
    %v378 = vtanh.pop %v376
    %v379 = vmul.f32 %v368, %v377
    %v380 = vmul.f32 %v370, %v378
    %v381 = vpack.c.bf16 %v380, %v379
    %v383 = vunpack.c.l.b16 %v381
    %v384 = vunpack.c.h.b16 %v381
    %v385 = vpack.c.b16 %v383, %v383
    %v386 = vpack.c.b16 %v384, %v384
    %389 = vst [vmem:[#allocation4] sm:$0xf] %v385
    %390 = vst [vmem:[#allocation4 + $0x4] sm:$0xf] %v386
    %s391 = scalar_lea.vmem %s0, 64
    %v392 = vld [vmem:[%s391] sm:$0xff]
    %v393 = vld [vmem:[%s391 + $0x8] sm:$0xff]
    %v394 = vld [vmem:[%s391 + $0x10] sm:$0xff]
    %v395 = vld [vmem:[%s391 + $0x18] sm:$0xff]
    %v396 = vld [vmem:[%s391 + $0x20] sm:$0xff]
    %v397 = vld [vmem:[%s391 + $0x28] sm:$0xff]
    %v398 = vld [vmem:[%s391 + $0x30] sm:$0xff]
    %v399 = vld [vmem:[%s391 + $0x38] sm:$0xff]
    %400 = vmatprep.subr.bf16.mxu0 %v176
    %401 = vmatpush1.bf16.msra.mxu0 %v175
    %402 = vmatprep.subr.bf16.mxu0 %v180
    %403 = vmatpush1.bf16.msra.mxu0 %v179
    %404 = vmatprep.subr.bf16.mxu0 %v184
    %405 = vmatpush1.bf16.msra.mxu0 %v183
    %406 = vmatprep.subr.bf16.mxu0 %v188
    %407 = vmatpush1.bf16.msra.mxu0 %v187
    %408 = vmatprep.subr.bf16.mxu0 %v192
    %409 = vmatpush1.bf16.msra.mxu0 %v191
    %410 = vmatprep.subr.bf16.mxu0 %v196
    %411 = vmatpush1.bf16.msra.mxu0 %v195
    %412 = vmatprep.subr.bf16.mxu0 %v200
    %413 = vmatpush1.bf16.msra.mxu0 %v199
    %414 = vmatprep.subr.bf16.mxu0 %v204
    %415 = vmatpush1.bf16.msra.mxu0 %v203
    %416 = vmatprep.subr.bf16.mxu0 0
    %417 = vmatpush1.bf16.msra.mxu0 0
    %418 = vmatprep.subr.bf16.mxu0 0
    %419 = vmatpush1.bf16.msra.mxu0 0
    %420 = vmatprep.subr.bf16.mxu0 0
    %421 = vmatpush1.bf16.msra.mxu0 0
    %422 = vmatprep.subr.bf16.mxu0 0
    %423 = vmatpush1.bf16.msra.mxu0 0
    %424 = vmatprep.subr.bf16.mxu0 0
    %425 = vmatpush1.bf16.msra.mxu0 0
    %426 = vmatprep.subr.bf16.mxu0 0
    %427 = vmatpush1.bf16.msra.mxu0 0
    %428 = vmatprep.subr.bf16.mxu0 0
    %429 = vmatpush1.bf16.msra.mxu0 0
    %430 = vmatprep.subr.bf16.mxu0 0
    %431 = vmatpush1.bf16.msra.mxu0 0
    %432 = vmatprep.mubr.bf16.mxu0 0
    %433 = vmatmul.mubr.bf16.gmra.mrb[0].mxu0 %v381
    %v434 = vpop.f32.mrb[0].mxu0
    %v435 = vadd.f32 0.0, %v434
    %v436 = vpop.f32.mrb[0].mxu0
    %v437 = vadd.f32 0.0, %v436
    %v438 = vpop.f32.mrb[0].mxu0
    %v439 = vadd.f32 0.0, %v438
    %v440 = vpop.f32.mrb[0].mxu0
    %v441 = vadd.f32 0.0, %v440
    %442 = vdwg.mxu0
    %443 = vmatprep.subr.bf16.mxu0 %v178
    %444 = vmatpush1.bf16.msra.mxu0 %v177
    %445 = vmatprep.subr.bf16.mxu0 %v182
    %446 = vmatpush1.bf16.msra.mxu0 %v181
    %447 = vmatprep.subr.bf16.mxu0 %v186
    %448 = vmatpush1.bf16.msra.mxu0 %v185
    %449 = vmatprep.subr.bf16.mxu0 %v190
    %450 = vmatpush1.bf16.msra.mxu0 %v189
    %451 = vmatprep.subr.bf16.mxu0 %v194
    %452 = vmatpush1.bf16.msra.mxu0 %v193
    %453 = vmatprep.subr.bf16.mxu0 %v198
    %454 = vmatpush1.bf16.msra.mxu0 %v197
    %455 = vmatprep.subr.bf16.mxu0 %v202
    %456 = vmatpush1.bf16.msra.mxu0 %v201
    %457 = vmatprep.subr.bf16.mxu0 %v206
    %458 = vmatpush1.bf16.msra.mxu0 %v205
    %459 = vmatprep.subr.bf16.mxu0 0
    %460 = vmatpush1.bf16.msra.mxu0 0
    %461 = vmatprep.subr.bf16.mxu0 0
    %462 = vmatpush1.bf16.msra.mxu0 0
    %463 = vmatprep.subr.bf16.mxu0 0
    %464 = vmatpush1.bf16.msra.mxu0 0
    %465 = vmatprep.subr.bf16.mxu0 0
    %466 = vmatpush1.bf16.msra.mxu0 0
    %467 = vmatprep.subr.bf16.mxu0 0
    %468 = vmatpush1.bf16.msra.mxu0 0
    %469 = vmatprep.subr.bf16.mxu0 0
    %470 = vmatpush1.bf16.msra.mxu0 0
    %471 = vmatprep.subr.bf16.mxu0 0
    %472 = vmatpush1.bf16.msra.mxu0 0
    %473 = vmatprep.subr.bf16.mxu0 0
    %474 = vmatpush1.bf16.msra.mxu0 0
    %475 = vmatprep.mubr.bf16.mxu0 0
    %476 = vmatmul.mubr.bf16.gmra.mrb[0].mxu0 %v381
    %v477 = vpop.f32.mrb[0].mxu0
    %v478 = vadd.f32 0.0, %v477
    %v479 = vpop.f32.mrb[0].mxu0
    %v480 = vadd.f32 0.0, %v479
    %v481 = vpop.f32.mrb[0].mxu0
    %v482 = vadd.f32 0.0, %v481
    %v483 = vpop.f32.mrb[0].mxu0
    %v484 = vadd.f32 0.0, %v483
    %485 = vdwg.mxu0
    %v486 = vadd.f32 %v392, %v435
    %v487 = vadd.f32 %v393, %v437
    %v488 = vadd.f32 %v394, %v478
    %v489 = vadd.f32 %v395, %v480
    %v490 = vadd.f32 %v396, %v439
    %v491 = vadd.f32 %v397, %v441
    %v492 = vadd.f32 %v398, %v482
    %v493 = vadd.f32 %v399, %v484
    %v494 = vxor.u32 %v486, 2147483648
    %v495 = vxor.u32 %v490, 2147483648
    %v496 = vmul.f32 %v494, 1.442695
    %v497 = vpow.pop %v496
    %v498 = vmul.f32 %v495, 1.442695
    %v499 = vpow.pop %v498
    %v500 = vadd.f32 %v497, 1.0
    %v501 = vadd.f32 %v499, 1.0
    %v502 = vrcp.pop %v500
    %v503 = vmul.f32 1.0, %v502
    %v504 = vrcp.pop %v501
    %v505 = vmul.f32 1.0, %v504
    %v506 = vxor.u32 %v487, 2147483648
    %v507 = vxor.u32 %v491, 2147483648
    %v508 = vmul.f32 %v506, 1.442695
    %v509 = vpow.pop %v508
    %v510 = vmul.f32 %v507, 1.442695
    %v511 = vpow.pop %v510
    %v512 = vadd.f32 %v509, 1.0
    %v513 = vadd.f32 %v511, 1.0
    %v514 = vrcp.pop %v512
    %v515 = vmul.f32 1.0, %v514
    %v516 = vrcp.pop %v513
    %v517 = vmul.f32 1.0, %v516
    %v518 = vtanh.pop %v488
    %v519 = vtanh.pop %v492
    %v520 = vxor.u32 %v489, 2147483648
    %v521 = vxor.u32 %v493, 2147483648
    %v522 = vmul.f32 %v520, 1.442695
    %v523 = vpow.pop %v522
    %v524 = vmul.f32 %v521, 1.442695
    %v525 = vpow.pop %v524
    %v526 = vadd.f32 %v523, 1.0
    %v527 = vadd.f32 %v525, 1.0
    %v528 = vrcp.pop %v526
    %v529 = vmul.f32 1.0, %v528
    %v530 = vrcp.pop %v527
    %v531 = vmul.f32 1.0, %v530
    %v532 = vmul.f32 %v515, %v375
    %v533 = vmul.f32 %v517, %v376
    %v534 = vmul.f32 %v503, %v518
    %v535 = vmul.f32 %v505, %v519
    %v536 = vadd.f32 %v532, %v534
    %v537 = vadd.f32 %v533, %v535
    %v538 = vtanh.pop %v536
    %v539 = vtanh.pop %v537
    %v540 = vmul.f32 %v529, %v538
    %v541 = vmul.f32 %v531, %v539
    %v542 = vpack.c.bf16 %v541, %v540
    %v544 = vunpack.c.l.b16 %v542
    %v545 = vunpack.c.h.b16 %v542
    %v546 = vpack.c.b16 %v544, %v544
    %v547 = vpack.c.b16 %v545, %v545
    %s550 = scalar_lea.vmem [#allocation4], 8
    %551 = vst [vmem:[%s550] sm:$0xf] %v546
    %552 = vst [vmem:[%s550 + $0x4] sm:$0xf] %v547
    %s553 = scalar_lea.vmem %s0, 128
    %v554 = vld [vmem:[%s553] sm:$0xff]
    %v555 = vld [vmem:[%s553 + $0x8] sm:$0xff]
    %v556 = vld [vmem:[%s553 + $0x10] sm:$0xff]
    %v557 = vld [vmem:[%s553 + $0x18] sm:$0xff]
    %v558 = vld [vmem:[%s553 + $0x20] sm:$0xff]
    %v559 = vld [vmem:[%s553 + $0x28] sm:$0xff]
    %v560 = vld [vmem:[%s553 + $0x30] sm:$0xff]
    %v561 = vld [vmem:[%s553 + $0x38] sm:$0xff]
    %562 = vmatprep.subr.bf16.mxu0 %v176
    %563 = vmatpush1.bf16.msra.mxu0 %v175
    %564 = vmatprep.subr.bf16.mxu0 %v180
    %565 = vmatpush1.bf16.msra.mxu0 %v179
    %566 = vmatprep.subr.bf16.mxu0 %v184
    %567 = vmatpush1.bf16.msra.mxu0 %v183
    %568 = vmatprep.subr.bf16.mxu0 %v188
    %569 = vmatpush1.bf16.msra.mxu0 %v187
    %570 = vmatprep.subr.bf16.mxu0 %v192
    %571 = vmatpush1.bf16.msra.mxu0 %v191
    %572 = vmatprep.subr.bf16.mxu0 %v196
    %573 = vmatpush1.bf16.msra.mxu0 %v195
    %574 = vmatprep.subr.bf16.mxu0 %v200
    %575 = vmatpush1.bf16.msra.mxu0 %v199
    %576 = vmatprep.subr.bf16.mxu0 %v204
    %577 = vmatpush1.bf16.msra.mxu0 %v203
    %578 = vmatprep.subr.bf16.mxu0 0
    %579 = vmatpush1.bf16.msra.mxu0 0
    %580 = vmatprep.subr.bf16.mxu0 0
    %581 = vmatpush1.bf16.msra.mxu0 0
    %582 = vmatprep.subr.bf16.mxu0 0
    %583 = vmatpush1.bf16.msra.mxu0 0
    %584 = vmatprep.subr.bf16.mxu0 0
    %585 = vmatpush1.bf16.msra.mxu0 0
    %586 = vmatprep.subr.bf16.mxu0 0
    %587 = vmatpush1.bf16.msra.mxu0 0
    %588 = vmatprep.subr.bf16.mxu0 0
    %589 = vmatpush1.bf16.msra.mxu0 0
    %590 = vmatprep.subr.bf16.mxu0 0
    %591 = vmatpush1.bf16.msra.mxu0 0
    %592 = vmatprep.subr.bf16.mxu0 0
    %593 = vmatpush1.bf16.msra.mxu0 0
    %594 = vmatprep.mubr.bf16.mxu0 0
    %595 = vmatmul.mubr.bf16.gmra.mrb[0].mxu0 %v542
    %v596 = vpop.f32.mrb[0].mxu0
    %v597 = vadd.f32 0.0, %v596
    %v598 = vpop.f32.mrb[0].mxu0
    %v599 = vadd.f32 0.0, %v598
    %v600 = vpop.f32.mrb[0].mxu0
    %v601 = vadd.f32 0.0, %v600
    %v602 = vpop.f32.mrb[0].mxu0
    %v603 = vadd.f32 0.0, %v602
    %604 = vdwg.mxu0
    %605 = vmatprep.subr.bf16.mxu0 %v178
    %606 = vmatpush1.bf16.msra.mxu0 %v177
    %607 = vmatprep.subr.bf16.mxu0 %v182
    %608 = vmatpush1.bf16.msra.mxu0 %v181
    %609 = vmatprep.subr.bf16.mxu0 %v186
    %610 = vmatpush1.bf16.msra.mxu0 %v185
    %611 = vmatprep.subr.bf16.mxu0 %v190
    %612 = vmatpush1.bf16.msra.mxu0 %v189
    %613 = vmatprep.subr.bf16.mxu0 %v194
    %614 = vmatpush1.bf16.msra.mxu0 %v193
    %615 = vmatprep.subr.bf16.mxu0 %v198
    %616 = vmatpush1.bf16.msra.mxu0 %v197
    %617 = vmatprep.subr.bf16.mxu0 %v202
    %618 = vmatpush1.bf16.msra.mxu0 %v201
    %619 = vmatprep.subr.bf16.mxu0 %v206
    %620 = vmatpush1.bf16.msra.mxu0 %v205
    %621 = vmatprep.subr.bf16.mxu0 0
    %622 = vmatpush1.bf16.msra.mxu0 0
    %623 = vmatprep.subr.bf16.mxu0 0
    %624 = vmatpush1.bf16.msra.mxu0 0
    %625 = vmatprep.subr.bf16.mxu0 0
    %626 = vmatpush1.bf16.msra.mxu0 0
    %627 = vmatprep.subr.bf16.mxu0 0
    %628 = vmatpush1.bf16.msra.mxu0 0
    %629 = vmatprep.subr.bf16.mxu0 0
    %630 = vmatpush1.bf16.msra.mxu0 0
    %631 = vmatprep.subr.bf16.mxu0 0
    %632 = vmatpush1.bf16.msra.mxu0 0
    %633 = vmatprep.subr.bf16.mxu0 0
    %634 = vmatpush1.bf16.msra.mxu0 0
    %635 = vmatprep.subr.bf16.mxu0 0
    %636 = vmatpush1.bf16.msra.mxu0 0
    %637 = vmatprep.mubr.bf16.mxu0 0
    %638 = vmatmul.mubr.bf16.gmra.mrb[0].mxu0 %v542
    %v639 = vpop.f32.mrb[0].mxu0
    %v640 = vadd.f32 0.0, %v639
    %v641 = vpop.f32.mrb[0].mxu0
    %v642 = vadd.f32 0.0, %v641
    %v643 = vpop.f32.mrb[0].mxu0
    %v644 = vadd.f32 0.0, %v643
    %v645 = vpop.f32.mrb[0].mxu0
    %v646 = vadd.f32 0.0, %v645
    %647 = vdwg.mxu0
    %v648 = vadd.f32 %v554, %v597
    %v649 = vadd.f32 %v555, %v599
    %v650 = vadd.f32 %v556, %v640
    %v651 = vadd.f32 %v557, %v642
    %v652 = vadd.f32 %v558, %v601
    %v653 = vadd.f32 %v559, %v603
    %v654 = vadd.f32 %v560, %v644
    %v655 = vadd.f32 %v561, %v646
    %v656 = vxor.u32 %v648, 2147483648
    %v657 = vxor.u32 %v652, 2147483648
    %v658 = vmul.f32 %v656, 1.442695
    %v659 = vpow.pop %v658
    %v660 = vmul.f32 %v657, 1.442695
    %v661 = vpow.pop %v660
    %v662 = vadd.f32 %v659, 1.0
    %v663 = vadd.f32 %v661, 1.0
    %v664 = vrcp.pop %v662
    %v665 = vmul.f32 1.0, %v664
    %v666 = vrcp.pop %v663
    %v667 = vmul.f32 1.0, %v666
    %v668 = vxor.u32 %v649, 2147483648
    %v669 = vxor.u32 %v653, 2147483648
    %v670 = vmul.f32 %v668, 1.442695
    %v671 = vpow.pop %v670
    %v672 = vmul.f32 %v669, 1.442695
    %v673 = vpow.pop %v672
    %v674 = vadd.f32 %v671, 1.0
    %v675 = vadd.f32 %v673, 1.0
    %v676 = vrcp.pop %v674
    %v677 = vmul.f32 1.0, %v676
    %v678 = vrcp.pop %v675
    %v679 = vmul.f32 1.0, %v678
    %v680 = vtanh.pop %v650
    %v681 = vtanh.pop %v654
    %v682 = vxor.u32 %v651, 2147483648
    %v683 = vxor.u32 %v655, 2147483648
    %v684 = vmul.f32 %v682, 1.442695
    %v685 = vpow.pop %v684
    %v686 = vmul.f32 %v683, 1.442695
    %v687 = vpow.pop %v686
    %v688 = vadd.f32 %v685, 1.0
    %v689 = vadd.f32 %v687, 1.0
    %v690 = vrcp.pop %v688
    %v691 = vmul.f32 1.0, %v690
    %v692 = vrcp.pop %v689
    %v693 = vmul.f32 1.0, %v692
    %v694 = vmul.f32 %v677, %v536
    %v695 = vmul.f32 %v679, %v537
    %v696 = vmul.f32 %v665, %v680
    %v697 = vmul.f32 %v667, %v681
    %v698 = vadd.f32 %v694, %v696
    %v699 = vadd.f32 %v695, %v697
    %v700 = vtanh.pop %v698
    %v701 = vtanh.pop %v699
    %v702 = vmul.f32 %v691, %v700
    %v703 = vmul.f32 %v693, %v701
    %v704 = vpack.c.bf16 %v703, %v702
    %v706 = vunpack.c.l.b16 %v704
    %v707 = vunpack.c.h.b16 %v704
    %v708 = vpack.c.b16 %v706, %v706
    %v709 = vpack.c.b16 %v707, %v707
    %s712 = scalar_lea.vmem [#allocation4], 16
    %713 = vst [vmem:[%s712] sm:$0xf] %v708
    %714 = vst [vmem:[%s712 + $0x4] sm:$0xf] %v709
    %s715 = scalar_lea.vmem %s0, 192
    %v716 = vld [vmem:[%s715] sm:$0xff]
    %v717 = vld [vmem:[%s715 + $0x8] sm:$0xff]
    %v718 = vld [vmem:[%s715 + $0x10] sm:$0xff]
    %v719 = vld [vmem:[%s715 + $0x18] sm:$0xff]
    %v720 = vld [vmem:[%s715 + $0x20] sm:$0xff]
    %v721 = vld [vmem:[%s715 + $0x28] sm:$0xff]
    %v722 = vld [vmem:[%s715 + $0x30] sm:$0xff]
    %v723 = vld [vmem:[%s715 + $0x38] sm:$0xff]
    %724 = vmatprep.subr.bf16.mxu0 %v176
    %725 = vmatpush1.bf16.msra.mxu0 %v175
    %726 = vmatprep.subr.bf16.mxu0 %v180
    %727 = vmatpush1.bf16.msra.mxu0 %v179
    %728 = vmatprep.subr.bf16.mxu0 %v184
    %729 = vmatpush1.bf16.msra.mxu0 %v183
    %730 = vmatprep.subr.bf16.mxu0 %v188
    %731 = vmatpush1.bf16.msra.mxu0 %v187
    %732 = vmatprep.subr.bf16.mxu0 %v192
    %733 = vmatpush1.bf16.msra.mxu0 %v191
    %734 = vmatprep.subr.bf16.mxu0 %v196
    %735 = vmatpush1.bf16.msra.mxu0 %v195
    %736 = vmatprep.subr.bf16.mxu0 %v200
    %737 = vmatpush1.bf16.msra.mxu0 %v199
    %738 = vmatprep.subr.bf16.mxu0 %v204
    %739 = vmatpush1.bf16.msra.mxu0 %v203
    %740 = vmatprep.subr.bf16.mxu0 0
    %741 = vmatpush1.bf16.msra.mxu0 0
    %742 = vmatprep.subr.bf16.mxu0 0
    %743 = vmatpush1.bf16.msra.mxu0 0
    %744 = vmatprep.subr.bf16.mxu0 0
    %745 = vmatpush1.bf16.msra.mxu0 0
    %746 = vmatprep.subr.bf16.mxu0 0
    %747 = vmatpush1.bf16.msra.mxu0 0
    %748 = vmatprep.subr.bf16.mxu0 0
    %749 = vmatpush1.bf16.msra.mxu0 0
    %750 = vmatprep.subr.bf16.mxu0 0
    %751 = vmatpush1.bf16.msra.mxu0 0
    %752 = vmatprep.subr.bf16.mxu0 0
    %753 = vmatpush1.bf16.msra.mxu0 0
    %754 = vmatprep.subr.bf16.mxu0 0
    %755 = vmatpush1.bf16.msra.mxu0 0
    %756 = vmatprep.mubr.bf16.mxu0 0
    %757 = vmatmul.mubr.bf16.gmra.mrb[0].mxu0 %v704
    %v758 = vpop.f32.mrb[0].mxu0
    %v759 = vadd.f32 0.0, %v758
    %v760 = vpop.f32.mrb[0].mxu0
    %v761 = vadd.f32 0.0, %v760
    %v762 = vpop.f32.mrb[0].mxu0
    %v763 = vadd.f32 0.0, %v762
    %v764 = vpop.f32.mrb[0].mxu0
    %v765 = vadd.f32 0.0, %v764
    %766 = vdwg.mxu0
    %767 = vmatprep.subr.bf16.mxu0 %v178
    %768 = vmatpush1.bf16.msra.mxu0 %v177
    %769 = vmatprep.subr.bf16.mxu0 %v182
    %770 = vmatpush1.bf16.msra.mxu0 %v181
    %771 = vmatprep.subr.bf16.mxu0 %v186
    %772 = vmatpush1.bf16.msra.mxu0 %v185
    %773 = vmatprep.subr.bf16.mxu0 %v190
    %774 = vmatpush1.bf16.msra.mxu0 %v189
    %775 = vmatprep.subr.bf16.mxu0 %v194
    %776 = vmatpush1.bf16.msra.mxu0 %v193
    %777 = vmatprep.subr.bf16.mxu0 %v198
    %778 = vmatpush1.bf16.msra.mxu0 %v197
    %779 = vmatprep.subr.bf16.mxu0 %v202
    %780 = vmatpush1.bf16.msra.mxu0 %v201
    %781 = vmatprep.subr.bf16.mxu0 %v206
    %782 = vmatpush1.bf16.msra.mxu0 %v205
    %783 = vmatprep.subr.bf16.mxu0 0
    %784 = vmatpush1.bf16.msra.mxu0 0
    %785 = vmatprep.subr.bf16.mxu0 0
    %786 = vmatpush1.bf16.msra.mxu0 0
    %787 = vmatprep.subr.bf16.mxu0 0
    %788 = vmatpush1.bf16.msra.mxu0 0
    %789 = vmatprep.subr.bf16.mxu0 0
    %790 = vmatpush1.bf16.msra.mxu0 0
    %791 = vmatprep.subr.bf16.mxu0 0
    %792 = vmatpush1.bf16.msra.mxu0 0
    %793 = vmatprep.subr.bf16.mxu0 0
    %794 = vmatpush1.bf16.msra.mxu0 0
    %795 = vmatprep.subr.bf16.mxu0 0
    %796 = vmatpush1.bf16.msra.mxu0 0
    %797 = vmatprep.subr.bf16.mxu0 0
    %798 = vmatpush1.bf16.msra.mxu0 0
    %799 = vmatprep.mubr.bf16.mxu0 0
    %800 = vmatmul.mubr.bf16.gmra.mrb[0].mxu0 %v704
    %v801 = vpop.f32.mrb[0].mxu0
    %v802 = vadd.f32 0.0, %v801
    %v803 = vpop.f32.mrb[0].mxu0
    %v804 = vadd.f32 0.0, %v803
    %v805 = vpop.f32.mrb[0].mxu0
    %v806 = vadd.f32 0.0, %v805
    %v807 = vpop.f32.mrb[0].mxu0
    %v808 = vadd.f32 0.0, %v807
    %809 = vdwg.mxu0
    %v810 = vadd.f32 %v716, %v759
    %v811 = vadd.f32 %v717, %v761
    %v812 = vadd.f32 %v718, %v802
    %v813 = vadd.f32 %v719, %v804
    %v814 = vadd.f32 %v720, %v763
    %v815 = vadd.f32 %v721, %v765
    %v816 = vadd.f32 %v722, %v806
    %v817 = vadd.f32 %v723, %v808
    %v818 = vxor.u32 %v810, 2147483648
    %v819 = vxor.u32 %v814, 2147483648
    %v820 = vmul.f32 %v818, 1.442695
    %v821 = vpow.pop %v820
    %v822 = vmul.f32 %v819, 1.442695
    %v823 = vpow.pop %v822
    %v824 = vadd.f32 %v821, 1.0
    %v825 = vadd.f32 %v823, 1.0
    %v826 = vrcp.pop %v824
    %v827 = vmul.f32 1.0, %v826
    %v828 = vrcp.pop %v825
    %v829 = vmul.f32 1.0, %v828
    %v830 = vxor.u32 %v811, 2147483648
    %v831 = vxor.u32 %v815, 2147483648
    %v832 = vmul.f32 %v830, 1.442695
    %v833 = vpow.pop %v832
    %v834 = vmul.f32 %v831, 1.442695
    %v835 = vpow.pop %v834
    %v836 = vadd.f32 %v833, 1.0
    %v837 = vadd.f32 %v835, 1.0
    %v838 = vrcp.pop %v836
    %v839 = vmul.f32 1.0, %v838
    %v840 = vrcp.pop %v837
    %v841 = vmul.f32 1.0, %v840
    %v842 = vtanh.pop %v812
    %v843 = vtanh.pop %v816
    %v844 = vxor.u32 %v813, 2147483648
    %v845 = vxor.u32 %v817, 2147483648
    %v846 = vmul.f32 %v844, 1.442695
    %v847 = vpow.pop %v846
    %v848 = vmul.f32 %v845, 1.442695
    %v849 = vpow.pop %v848
    %v850 = vadd.f32 %v847, 1.0
    %v851 = vadd.f32 %v849, 1.0
    %v852 = vrcp.pop %v850
    %v853 = vmul.f32 1.0, %v852
    %v854 = vrcp.pop %v851
    %v855 = vmul.f32 1.0, %v854
    %v856 = vmul.f32 %v839, %v698
    %v857 = vmul.f32 %v841, %v699
    %v858 = vmul.f32 %v827, %v842
    %v859 = vmul.f32 %v829, %v843
    %v860 = vadd.f32 %v856, %v858
    %v861 = vadd.f32 %v857, %v859
    %v862 = vtanh.pop %v860
    %v863 = vtanh.pop %v861
    %v864 = vmul.f32 %v853, %v862
    %v865 = vmul.f32 %v855, %v863
    %v866 = vpack.c.bf16 %v865, %v864
    %v868 = vunpack.c.l.b16 %v866
    %v869 = vunpack.c.h.b16 %v866
    %v870 = vpack.c.b16 %v868, %v868
    %v871 = vpack.c.b16 %v869, %v869
    %s874 = scalar_lea.vmem [#allocation4], 24
    %875 = vst [vmem:[%s874] sm:$0xf] %v870
    %876 = vst [vmem:[%s874 + $0x4] sm:$0xf] %v871
    %s877 = scalar_lea.vmem %s0, 256
    %v878 = vld [vmem:[%s877] sm:$0xff]
    %v879 = vld [vmem:[%s877 + $0x8] sm:$0xff]
    %v880 = vld [vmem:[%s877 + $0x10] sm:$0xff]
    %v881 = vld [vmem:[%s877 + $0x18] sm:$0xff]
    %v882 = vld [vmem:[%s877 + $0x20] sm:$0xff]
    %v883 = vld [vmem:[%s877 + $0x28] sm:$0xff]
    %v884 = vld [vmem:[%s877 + $0x30] sm:$0xff]
    %v885 = vld [vmem:[%s877 + $0x38] sm:$0xff]
    %886 = vmatprep.subr.bf16.mxu0 %v176
    %887 = vmatpush1.bf16.msra.mxu0 %v175
    %888 = vmatprep.subr.bf16.mxu0 %v180
    %889 = vmatpush1.bf16.msra.mxu0 %v179
    %890 = vmatprep.subr.bf16.mxu0 %v184
    %891 = vmatpush1.bf16.msra.mxu0 %v183
    %892 = vmatprep.subr.bf16.mxu0 %v188
    %893 = vmatpush1.bf16.msra.mxu0 %v187
    %894 = vmatprep.subr.bf16.mxu0 %v192
    %895 = vmatpush1.bf16.msra.mxu0 %v191
    %896 = vmatprep.subr.bf16.mxu0 %v196
    %897 = vmatpush1.bf16.msra.mxu0 %v195
    %898 = vmatprep.subr.bf16.mxu0 %v200
    %899 = vmatpush1.bf16.msra.mxu0 %v199
    %900 = vmatprep.subr.bf16.mxu0 %v204
    %901 = vmatpush1.bf16.msra.mxu0 %v203
    %902 = vmatprep.subr.bf16.mxu0 0
    %903 = vmatpush1.bf16.msra.mxu0 0
    %904 = vmatprep.subr.bf16.mxu0 0
    %905 = vmatpush1.bf16.msra.mxu0 0
    %906 = vmatprep.subr.bf16.mxu0 0
    %907 = vmatpush1.bf16.msra.mxu0 0
    %908 = vmatprep.subr.bf16.mxu0 0
    %909 = vmatpush1.bf16.msra.mxu0 0
    %910 = vmatprep.subr.bf16.mxu0 0
    %911 = vmatpush1.bf16.msra.mxu0 0
    %912 = vmatprep.subr.bf16.mxu0 0
    %913 = vmatpush1.bf16.msra.mxu0 0
    %914 = vmatprep.subr.bf16.mxu0 0
    %915 = vmatpush1.bf16.msra.mxu0 0
    %916 = vmatprep.subr.bf16.mxu0 0
    %917 = vmatpush1.bf16.msra.mxu0 0
    %918 = vmatprep.mubr.bf16.mxu0 0
    %919 = vmatmul.mubr.bf16.gmra.mrb[0].mxu0 %v866
    %v920 = vpop.f32.mrb[0].mxu0
    %v921 = vadd.f32 0.0, %v920
    %v922 = vpop.f32.mrb[0].mxu0
    %v923 = vadd.f32 0.0, %v922
    %v924 = vpop.f32.mrb[0].mxu0
    %v925 = vadd.f32 0.0, %v924
    %v926 = vpop.f32.mrb[0].mxu0
    %v927 = vadd.f32 0.0, %v926
    %928 = vdwg.mxu0
    %929 = vmatprep.subr.bf16.mxu0 %v178
    %930 = vmatpush1.bf16.msra.mxu0 %v177
    %931 = vmatprep.subr.bf16.mxu0 %v182
    %932 = vmatpush1.bf16.msra.mxu0 %v181
    %933 = vmatprep.subr.bf16.mxu0 %v186
    %934 = vmatpush1.bf16.msra.mxu0 %v185
    %935 = vmatprep.subr.bf16.mxu0 %v190
    %936 = vmatpush1.bf16.msra.mxu0 %v189
    %937 = vmatprep.subr.bf16.mxu0 %v194
    %938 = vmatpush1.bf16.msra.mxu0 %v193
    %939 = vmatprep.subr.bf16.mxu0 %v198
    %940 = vmatpush1.bf16.msra.mxu0 %v197
    %941 = vmatprep.subr.bf16.mxu0 %v202
    %942 = vmatpush1.bf16.msra.mxu0 %v201
    %943 = vmatprep.subr.bf16.mxu0 %v206
    %944 = vmatpush1.bf16.msra.mxu0 %v205
    %945 = vmatprep.subr.bf16.mxu0 0
    %946 = vmatpush1.bf16.msra.mxu0 0
    %947 = vmatprep.subr.bf16.mxu0 0
    %948 = vmatpush1.bf16.msra.mxu0 0
    %949 = vmatprep.subr.bf16.mxu0 0
    %950 = vmatpush1.bf16.msra.mxu0 0
    %951 = vmatprep.subr.bf16.mxu0 0
    %952 = vmatpush1.bf16.msra.mxu0 0
    %953 = vmatprep.subr.bf16.mxu0 0
    %954 = vmatpush1.bf16.msra.mxu0 0
    %955 = vmatprep.subr.bf16.mxu0 0
    %956 = vmatpush1.bf16.msra.mxu0 0
    %957 = vmatprep.subr.bf16.mxu0 0
    %958 = vmatpush1.bf16.msra.mxu0 0
    %959 = vmatprep.subr.bf16.mxu0 0
    %960 = vmatpush1.bf16.msra.mxu0 0
    %961 = vmatprep.mubr.bf16.mxu0 0
    %962 = vmatmul.mubr.bf16.gmra.mrb[0].mxu0 %v866
    %v963 = vpop.f32.mrb[0].mxu0
    %v964 = vadd.f32 0.0, %v963
    %v965 = vpop.f32.mrb[0].mxu0
    %v966 = vadd.f32 0.0, %v965
    %v967 = vpop.f32.mrb[0].mxu0
    %v968 = vadd.f32 0.0, %v967
    %v969 = vpop.f32.mrb[0].mxu0
    %v970 = vadd.f32 0.0, %v969
    %971 = vdwg.mxu0
    %v972 = vadd.f32 %v878, %v921
    %v973 = vadd.f32 %v879, %v923
    %v974 = vadd.f32 %v880, %v964
    %v975 = vadd.f32 %v881, %v966
    %v976 = vadd.f32 %v882, %v925
    %v977 = vadd.f32 %v883, %v927
    %v978 = vadd.f32 %v884, %v968
    %v979 = vadd.f32 %v885, %v970
    %v980 = vxor.u32 %v972, 2147483648
    %v981 = vxor.u32 %v976, 2147483648
    %v982 = vmul.f32 %v980, 1.442695
    %v983 = vpow.pop %v982
    %v984 = vmul.f32 %v981, 1.442695
    %v985 = vpow.pop %v984
    %v986 = vadd.f32 %v983, 1.0
    %v987 = vadd.f32 %v985, 1.0
    %v988 = vrcp.pop %v986
    %v989 = vmul.f32 1.0, %v988
    %v990 = vrcp.pop %v987
    %v991 = vmul.f32 1.0, %v990
    %v992 = vxor.u32 %v973, 2147483648
    %v993 = vxor.u32 %v977, 2147483648
    %v994 = vmul.f32 %v992, 1.442695
    %v995 = vpow.pop %v994
    %v996 = vmul.f32 %v993, 1.442695
    %v997 = vpow.pop %v996
    %v998 = vadd.f32 %v995, 1.0
    %v999 = vadd.f32 %v997, 1.0
    %v1000 = vrcp.pop %v998
    %v1001 = vmul.f32 1.0, %v1000
    %v1002 = vrcp.pop %v999
    %v1003 = vmul.f32 1.0, %v1002
    %v1004 = vtanh.pop %v974
    %v1005 = vtanh.pop %v978
    %v1006 = vxor.u32 %v975, 2147483648
    %v1007 = vxor.u32 %v979, 2147483648
    %v1008 = vmul.f32 %v1006, 1.442695
    %v1009 = vpow.pop %v1008
    %v1010 = vmul.f32 %v1007, 1.442695
    %v1011 = vpow.pop %v1010
    %v1012 = vadd.f32 %v1009, 1.0
    %v1013 = vadd.f32 %v1011, 1.0
    %v1014 = vrcp.pop %v1012
    %v1015 = vmul.f32 1.0, %v1014
    %v1016 = vrcp.pop %v1013
    %v1017 = vmul.f32 1.0, %v1016
    %v1018 = vmul.f32 %v1001, %v860
    %v1019 = vmul.f32 %v1003, %v861
    %v1020 = vmul.f32 %v989, %v1004
    %v1021 = vmul.f32 %v991, %v1005
    %v1022 = vadd.f32 %v1018, %v1020
    %v1023 = vadd.f32 %v1019, %v1021
    %v1024 = vtanh.pop %v1022
    %v1025 = vtanh.pop %v1023
    %v1026 = vmul.f32 %v1015, %v1024
    %v1027 = vmul.f32 %v1017, %v1025
    %v1028 = vpack.c.bf16 %v1027, %v1026
    %v1030 = vunpack.c.l.b16 %v1028
    %v1031 = vunpack.c.h.b16 %v1028
    %v1032 = vpack.c.b16 %v1030, %v1030
    %v1033 = vpack.c.b16 %v1031, %v1031
    %s1036 = scalar_lea.vmem [#allocation4], 32
    %1037 = vst [vmem:[%s1036] sm:$0xf] %v1032
    %1038 = vst [vmem:[%s1036 + $0x4] sm:$0xf] %v1033
    %s1039 = scalar_lea.vmem %s0, 320
    %v1040 = vld [vmem:[%s1039] sm:$0xff]
    %v1041 = vld [vmem:[%s1039 + $0x8] sm:$0xff]
    %v1042 = vld [vmem:[%s1039 + $0x10] sm:$0xff]
    %v1043 = vld [vmem:[%s1039 + $0x18] sm:$0xff]
    %v1044 = vld [vmem:[%s1039 + $0x20] sm:$0xff]
    %v1045 = vld [vmem:[%s1039 + $0x28] sm:$0xff]
    %v1046 = vld [vmem:[%s1039 + $0x30] sm:$0xff]
    %v1047 = vld [vmem:[%s1039 + $0x38] sm:$0xff]
    %1048 = vmatprep.subr.bf16.mxu0 %v176
    %1049 = vmatpush1.bf16.msra.mxu0 %v175
    %1050 = vmatprep.subr.bf16.mxu0 %v180
    %1051 = vmatpush1.bf16.msra.mxu0 %v179
    %1052 = vmatprep.subr.bf16.mxu0 %v184
    %1053 = vmatpush1.bf16.msra.mxu0 %v183
    %1054 = vmatprep.subr.bf16.mxu0 %v188
    %1055 = vmatpush1.bf16.msra.mxu0 %v187
    %1056 = vmatprep.subr.bf16.mxu0 %v192
    %1057 = vmatpush1.bf16.msra.mxu0 %v191
    %1058 = vmatprep.subr.bf16.mxu0 %v196
    %1059 = vmatpush1.bf16.msra.mxu0 %v195
    %1060 = vmatprep.subr.bf16.mxu0 %v200
    %1061 = vmatpush1.bf16.msra.mxu0 %v199
    %1062 = vmatprep.subr.bf16.mxu0 %v204
    %1063 = vmatpush1.bf16.msra.mxu0 %v203
    %1064 = vmatprep.subr.bf16.mxu0 0
    %1065 = vmatpush1.bf16.msra.mxu0 0
    %1066 = vmatprep.subr.bf16.mxu0 0
    %1067 = vmatpush1.bf16.msra.mxu0 0
    %1068 = vmatprep.subr.bf16.mxu0 0
    %1069 = vmatpush1.bf16.msra.mxu0 0
    %1070 = vmatprep.subr.bf16.mxu0 0
    %1071 = vmatpush1.bf16.msra.mxu0 0
    %1072 = vmatprep.subr.bf16.mxu0 0
    %1073 = vmatpush1.bf16.msra.mxu0 0
    %1074 = vmatprep.subr.bf16.mxu0 0
    %1075 = vmatpush1.bf16.msra.mxu0 0
    %1076 = vmatprep.subr.bf16.mxu0 0
    %1077 = vmatpush1.bf16.msra.mxu0 0
    %1078 = vmatprep.subr.bf16.mxu0 0
    %1079 = vmatpush1.bf16.msra.mxu0 0
    %1080 = vmatprep.mubr.bf16.mxu0 0
    %1081 = vmatmul.mubr.bf16.gmra.mrb[0].mxu0 %v1028
    %v1082 = vpop.f32.mrb[0].mxu0
    %v1083 = vadd.f32 0.0, %v1082
    %v1084 = vpop.f32.mrb[0].mxu0
    %v1085 = vadd.f32 0.0, %v1084
    %v1086 = vpop.f32.mrb[0].mxu0
    %v1087 = vadd.f32 0.0, %v1086
    %v1088 = vpop.f32.mrb[0].mxu0
    %v1089 = vadd.f32 0.0, %v1088
    %1090 = vdwg.mxu0
    %1091 = vmatprep.subr.bf16.mxu0 %v178
    %1092 = vmatpush1.bf16.msra.mxu0 %v177
    %1093 = vmatprep.subr.bf16.mxu0 %v182
    %1094 = vmatpush1.bf16.msra.mxu0 %v181
    %1095 = vmatprep.subr.bf16.mxu0 %v186
    %1096 = vmatpush1.bf16.msra.mxu0 %v185
    %1097 = vmatprep.subr.bf16.mxu0 %v190
    %1098 = vmatpush1.bf16.msra.mxu0 %v189
    %1099 = vmatprep.subr.bf16.mxu0 %v194
    %1100 = vmatpush1.bf16.msra.mxu0 %v193
    %1101 = vmatprep.subr.bf16.mxu0 %v198
    %1102 = vmatpush1.bf16.msra.mxu0 %v197
    %1103 = vmatprep.subr.bf16.mxu0 %v202
    %1104 = vmatpush1.bf16.msra.mxu0 %v201
    %1105 = vmatprep.subr.bf16.mxu0 %v206
    %1106 = vmatpush1.bf16.msra.mxu0 %v205
    %1107 = vmatprep.subr.bf16.mxu0 0
    %1108 = vmatpush1.bf16.msra.mxu0 0
    %1109 = vmatprep.subr.bf16.mxu0 0
    %1110 = vmatpush1.bf16.msra.mxu0 0
    %1111 = vmatprep.subr.bf16.mxu0 0
    %1112 = vmatpush1.bf16.msra.mxu0 0
    %1113 = vmatprep.subr.bf16.mxu0 0
    %1114 = vmatpush1.bf16.msra.mxu0 0
    %1115 = vmatprep.subr.bf16.mxu0 0
    %1116 = vmatpush1.bf16.msra.mxu0 0
    %1117 = vmatprep.subr.bf16.mxu0 0
    %1118 = vmatpush1.bf16.msra.mxu0 0
    %1119 = vmatprep.subr.bf16.mxu0 0
    %1120 = vmatpush1.bf16.msra.mxu0 0
    %1121 = vmatprep.subr.bf16.mxu0 0
    %1122 = vmatpush1.bf16.msra.mxu0 0
    %1123 = vmatprep.mubr.bf16.mxu0 0
    %1124 = vmatmul.mubr.bf16.gmra.mrb[0].mxu0 %v1028
    %v1125 = vpop.f32.mrb[0].mxu0
    %v1126 = vadd.f32 0.0, %v1125
    %v1127 = vpop.f32.mrb[0].mxu0
    %v1128 = vadd.f32 0.0, %v1127
    %v1129 = vpop.f32.mrb[0].mxu0
    %v1130 = vadd.f32 0.0, %v1129
    %v1131 = vpop.f32.mrb[0].mxu0
    %v1132 = vadd.f32 0.0, %v1131
    %1133 = vdwg.mxu0
    %v1134 = vadd.f32 %v1040, %v1083
    %v1135 = vadd.f32 %v1041, %v1085
    %v1136 = vadd.f32 %v1042, %v1126
    %v1137 = vadd.f32 %v1043, %v1128
    %v1138 = vadd.f32 %v1044, %v1087
    %v1139 = vadd.f32 %v1045, %v1089
    %v1140 = vadd.f32 %v1046, %v1130
    %v1141 = vadd.f32 %v1047, %v1132
    %v1142 = vxor.u32 %v1134, 2147483648
    %v1143 = vxor.u32 %v1138, 2147483648
    %v1144 = vmul.f32 %v1142, 1.442695
    %v1145 = vpow.pop %v1144
    %v1146 = vmul.f32 %v1143, 1.442695
    %v1147 = vpow.pop %v1146
    %v1148 = vadd.f32 %v1145, 1.0
    %v1149 = vadd.f32 %v1147, 1.0
    %v1150 = vrcp.pop %v1148
    %v1151 = vmul.f32 1.0, %v1150
    %v1152 = vrcp.pop %v1149
    %v1153 = vmul.f32 1.0, %v1152
    %v1154 = vxor.u32 %v1135, 2147483648
    %v1155 = vxor.u32 %v1139, 2147483648
    %v1156 = vmul.f32 %v1154, 1.442695
    %v1157 = vpow.pop %v1156
    %v1158 = vmul.f32 %v1155, 1.442695
    %v1159 = vpow.pop %v1158
    %v1160 = vadd.f32 %v1157, 1.0
    %v1161 = vadd.f32 %v1159, 1.0
    %v1162 = vrcp.pop %v1160
    %v1163 = vmul.f32 1.0, %v1162
    %v1164 = vrcp.pop %v1161
    %v1165 = vmul.f32 1.0, %v1164
    %v1166 = vtanh.pop %v1136
    %v1167 = vtanh.pop %v1140
    %v1168 = vxor.u32 %v1137, 2147483648
    %v1169 = vxor.u32 %v1141, 2147483648
    %v1170 = vmul.f32 %v1168, 1.442695
    %v1171 = vpow.pop %v1170
    %v1172 = vmul.f32 %v1169, 1.442695
    %v1173 = vpow.pop %v1172
    %v1174 = vadd.f32 %v1171, 1.0
    %v1175 = vadd.f32 %v1173, 1.0
    %v1176 = vrcp.pop %v1174
    %v1177 = vmul.f32 1.0, %v1176
    %v1178 = vrcp.pop %v1175
    %v1179 = vmul.f32 1.0, %v1178
    %v1180 = vmul.f32 %v1163, %v1022
    %v1181 = vmul.f32 %v1165, %v1023
    %v1182 = vmul.f32 %v1151, %v1166
    %v1183 = vmul.f32 %v1153, %v1167
    %v1184 = vadd.f32 %v1180, %v1182
    %v1185 = vadd.f32 %v1181, %v1183
    %v1186 = vtanh.pop %v1184
    %v1187 = vtanh.pop %v1185
    %v1188 = vmul.f32 %v1177, %v1186
    %v1189 = vmul.f32 %v1179, %v1187
    %v1190 = vpack.c.bf16 %v1189, %v1188
    %v1192 = vunpack.c.l.b16 %v1190
    %v1193 = vunpack.c.h.b16 %v1190
    %v1194 = vpack.c.b16 %v1192, %v1192
    %v1195 = vpack.c.b16 %v1193, %v1193
    %s1198 = scalar_lea.vmem [#allocation4], 40
    %1199 = vst [vmem:[%s1198] sm:$0xf] %v1194
    %1200 = vst [vmem:[%s1198 + $0x4] sm:$0xf] %v1195
    %s1201 = scalar_lea.vmem %s0, 384
    %v1202 = vld [vmem:[%s1201] sm:$0xff]
    %v1203 = vld [vmem:[%s1201 + $0x8] sm:$0xff]
    %v1204 = vld [vmem:[%s1201 + $0x10] sm:$0xff]
    %v1205 = vld [vmem:[%s1201 + $0x18] sm:$0xff]
    %v1206 = vld [vmem:[%s1201 + $0x20] sm:$0xff]
    %v1207 = vld [vmem:[%s1201 + $0x28] sm:$0xff]
    %v1208 = vld [vmem:[%s1201 + $0x30] sm:$0xff]
    %v1209 = vld [vmem:[%s1201 + $0x38] sm:$0xff]
    %1210 = vmatprep.subr.bf16.mxu0 %v176
    %1211 = vmatpush1.bf16.msra.mxu0 %v175
    %1212 = vmatprep.subr.bf16.mxu0 %v180
    %1213 = vmatpush1.bf16.msra.mxu0 %v179
    %1214 = vmatprep.subr.bf16.mxu0 %v184
    %1215 = vmatpush1.bf16.msra.mxu0 %v183
    %1216 = vmatprep.subr.bf16.mxu0 %v188
    %1217 = vmatpush1.bf16.msra.mxu0 %v187
    %1218 = vmatprep.subr.bf16.mxu0 %v192
    %1219 = vmatpush1.bf16.msra.mxu0 %v191
    %1220 = vmatprep.subr.bf16.mxu0 %v196
    %1221 = vmatpush1.bf16.msra.mxu0 %v195
    %1222 = vmatprep.subr.bf16.mxu0 %v200
    %1223 = vmatpush1.bf16.msra.mxu0 %v199
    %1224 = vmatprep.subr.bf16.mxu0 %v204
    %1225 = vmatpush1.bf16.msra.mxu0 %v203
    %1226 = vmatprep.subr.bf16.mxu0 0
    %1227 = vmatpush1.bf16.msra.mxu0 0
    %1228 = vmatprep.subr.bf16.mxu0 0
    %1229 = vmatpush1.bf16.msra.mxu0 0
    %1230 = vmatprep.subr.bf16.mxu0 0
    %1231 = vmatpush1.bf16.msra.mxu0 0
    %1232 = vmatprep.subr.bf16.mxu0 0
    %1233 = vmatpush1.bf16.msra.mxu0 0
    %1234 = vmatprep.subr.bf16.mxu0 0
    %1235 = vmatpush1.bf16.msra.mxu0 0
    %1236 = vmatprep.subr.bf16.mxu0 0
    %1237 = vmatpush1.bf16.msra.mxu0 0
    %1238 = vmatprep.subr.bf16.mxu0 0
    %1239 = vmatpush1.bf16.msra.mxu0 0
    %1240 = vmatprep.subr.bf16.mxu0 0
    %1241 = vmatpush1.bf16.msra.mxu0 0
    %1242 = vmatprep.mubr.bf16.mxu0 0
    %1243 = vmatmul.mubr.bf16.gmra.mrb[0].mxu0 %v1190
    %v1244 = vpop.f32.mrb[0].mxu0
    %v1245 = vadd.f32 0.0, %v1244
    %v1246 = vpop.f32.mrb[0].mxu0
    %v1247 = vadd.f32 0.0, %v1246
    %v1248 = vpop.f32.mrb[0].mxu0
    %v1249 = vadd.f32 0.0, %v1248
    %v1250 = vpop.f32.mrb[0].mxu0
    %v1251 = vadd.f32 0.0, %v1250
    %1252 = vdwg.mxu0
    %1253 = vmatprep.subr.bf16.mxu0 %v178
    %1254 = vmatpush1.bf16.msra.mxu0 %v177
    %1255 = vmatprep.subr.bf16.mxu0 %v182
    %1256 = vmatpush1.bf16.msra.mxu0 %v181
    %1257 = vmatprep.subr.bf16.mxu0 %v186
    %1258 = vmatpush1.bf16.msra.mxu0 %v185
    %1259 = vmatprep.subr.bf16.mxu0 %v190
    %1260 = vmatpush1.bf16.msra.mxu0 %v189
    %1261 = vmatprep.subr.bf16.mxu0 %v194
    %1262 = vmatpush1.bf16.msra.mxu0 %v193
    %1263 = vmatprep.subr.bf16.mxu0 %v198
    %1264 = vmatpush1.bf16.msra.mxu0 %v197
    %1265 = vmatprep.subr.bf16.mxu0 %v202
    %1266 = vmatpush1.bf16.msra.mxu0 %v201
    %1267 = vmatprep.subr.bf16.mxu0 %v206
    %1268 = vmatpush1.bf16.msra.mxu0 %v205
    %1269 = vmatprep.subr.bf16.mxu0 0
    %1270 = vmatpush1.bf16.msra.mxu0 0
    %1271 = vmatprep.subr.bf16.mxu0 0
    %1272 = vmatpush1.bf16.msra.mxu0 0
    %1273 = vmatprep.subr.bf16.mxu0 0
    %1274 = vmatpush1.bf16.msra.mxu0 0
    %1275 = vmatprep.subr.bf16.mxu0 0
    %1276 = vmatpush1.bf16.msra.mxu0 0
    %1277 = vmatprep.subr.bf16.mxu0 0
    %1278 = vmatpush1.bf16.msra.mxu0 0
    %1279 = vmatprep.subr.bf16.mxu0 0
    %1280 = vmatpush1.bf16.msra.mxu0 0
    %1281 = vmatprep.subr.bf16.mxu0 0
    %1282 = vmatpush1.bf16.msra.mxu0 0
    %1283 = vmatprep.subr.bf16.mxu0 0
    %1284 = vmatpush1.bf16.msra.mxu0 0
    %1285 = vmatprep.mubr.bf16.mxu0 0
    %1286 = vmatmul.mubr.bf16.gmra.mrb[0].mxu0 %v1190
    %v1287 = vpop.f32.mrb[0].mxu0
    %v1288 = vadd.f32 0.0, %v1287
    %v1289 = vpop.f32.mrb[0].mxu0
    %v1290 = vadd.f32 0.0, %v1289
    %v1291 = vpop.f32.mrb[0].mxu0
    %v1292 = vadd.f32 0.0, %v1291
    %v1293 = vpop.f32.mrb[0].mxu0
    %v1294 = vadd.f32 0.0, %v1293
    %1295 = vdwg.mxu0
    %v1296 = vadd.f32 %v1202, %v1245
    %v1297 = vadd.f32 %v1203, %v1247
    %v1298 = vadd.f32 %v1204, %v1288
    %v1299 = vadd.f32 %v1205, %v1290
    %v1300 = vadd.f32 %v1206, %v1249
    %v1301 = vadd.f32 %v1207, %v1251
    %v1302 = vadd.f32 %v1208, %v1292
    %v1303 = vadd.f32 %v1209, %v1294
    %v1304 = vxor.u32 %v1296, 2147483648
    %v1305 = vxor.u32 %v1300, 2147483648
    %v1306 = vmul.f32 %v1304, 1.442695
    %v1307 = vpow.pop %v1306
    %v1308 = vmul.f32 %v1305, 1.442695
    %v1309 = vpow.pop %v1308
    %v1310 = vadd.f32 %v1307, 1.0
    %v1311 = vadd.f32 %v1309, 1.0
    %v1312 = vrcp.pop %v1310
    %v1313 = vmul.f32 1.0, %v1312
    %v1314 = vrcp.pop %v1311
    %v1315 = vmul.f32 1.0, %v1314
    %v1316 = vxor.u32 %v1297, 2147483648
    %v1317 = vxor.u32 %v1301, 2147483648
    %v1318 = vmul.f32 %v1316, 1.442695
    %v1319 = vpow.pop %v1318
    %v1320 = vmul.f32 %v1317, 1.442695
    %v1321 = vpow.pop %v1320
    %v1322 = vadd.f32 %v1319, 1.0
    %v1323 = vadd.f32 %v1321, 1.0
    %v1324 = vrcp.pop %v1322
    %v1325 = vmul.f32 1.0, %v1324
    %v1326 = vrcp.pop %v1323
    %v1327 = vmul.f32 1.0, %v1326
    %v1328 = vtanh.pop %v1298
    %v1329 = vtanh.pop %v1302
    %v1330 = vxor.u32 %v1299, 2147483648
    %v1331 = vxor.u32 %v1303, 2147483648
    %v1332 = vmul.f32 %v1330, 1.442695
    %v1333 = vpow.pop %v1332
    %v1334 = vmul.f32 %v1331, 1.442695
    %v1335 = vpow.pop %v1334
    %v1336 = vadd.f32 %v1333, 1.0
    %v1337 = vadd.f32 %v1335, 1.0
    %v1338 = vrcp.pop %v1336
    %v1339 = vmul.f32 1.0, %v1338
    %v1340 = vrcp.pop %v1337
    %v1341 = vmul.f32 1.0, %v1340
    %v1342 = vmul.f32 %v1325, %v1184
    %v1343 = vmul.f32 %v1327, %v1185
    %v1344 = vmul.f32 %v1313, %v1328
    %v1345 = vmul.f32 %v1315, %v1329
    %v1346 = vadd.f32 %v1342, %v1344
    %v1347 = vadd.f32 %v1343, %v1345
    %v1348 = vtanh.pop %v1346
    %v1349 = vtanh.pop %v1347
    %v1350 = vmul.f32 %v1339, %v1348
    %v1351 = vmul.f32 %v1341, %v1349
    %v1352 = vpack.c.bf16 %v1351, %v1350
    %v1354 = vunpack.c.l.b16 %v1352
    %v1355 = vunpack.c.h.b16 %v1352
    %v1356 = vpack.c.b16 %v1354, %v1354
    %v1357 = vpack.c.b16 %v1355, %v1355
    %s1360 = scalar_lea.vmem [#allocation4], 48
    %1361 = vst [vmem:[%s1360] sm:$0xf] %v1356
    %1362 = vst [vmem:[%s1360 + $0x4] sm:$0xf] %v1357
    %s1363 = scalar_lea.vmem %s0, 448
    %v1364 = vld [vmem:[%s1363] sm:$0xff]
    %v1365 = vld [vmem:[%s1363 + $0x8] sm:$0xff]
    %v1366 = vld [vmem:[%s1363 + $0x10] sm:$0xff]
    %v1367 = vld [vmem:[%s1363 + $0x18] sm:$0xff]
    %v1368 = vld [vmem:[%s1363 + $0x20] sm:$0xff]
    %v1369 = vld [vmem:[%s1363 + $0x28] sm:$0xff]
    %v1370 = vld [vmem:[%s1363 + $0x30] sm:$0xff]
    %v1371 = vld [vmem:[%s1363 + $0x38] sm:$0xff]
    %1372 = vmatprep.subr.bf16.mxu0 %v176
    %1373 = vmatpush1.bf16.msra.mxu0 %v175
    %1374 = vmatprep.subr.bf16.mxu0 %v180
    %1375 = vmatpush1.bf16.msra.mxu0 %v179
    %1376 = vmatprep.subr.bf16.mxu0 %v184
    %1377 = vmatpush1.bf16.msra.mxu0 %v183
    %1378 = vmatprep.subr.bf16.mxu0 %v188
    %1379 = vmatpush1.bf16.msra.mxu0 %v187
    %1380 = vmatprep.subr.bf16.mxu0 %v192
    %1381 = vmatpush1.bf16.msra.mxu0 %v191
    %1382 = vmatprep.subr.bf16.mxu0 %v196
    %1383 = vmatpush1.bf16.msra.mxu0 %v195
    %1384 = vmatprep.subr.bf16.mxu0 %v200
    %1385 = vmatpush1.bf16.msra.mxu0 %v199
    %1386 = vmatprep.subr.bf16.mxu0 %v204
    %1387 = vmatpush1.bf16.msra.mxu0 %v203
    %1388 = vmatprep.subr.bf16.mxu0 0
    %1389 = vmatpush1.bf16.msra.mxu0 0
    %1390 = vmatprep.subr.bf16.mxu0 0
    %1391 = vmatpush1.bf16.msra.mxu0 0
    %1392 = vmatprep.subr.bf16.mxu0 0
    %1393 = vmatpush1.bf16.msra.mxu0 0
    %1394 = vmatprep.subr.bf16.mxu0 0
    %1395 = vmatpush1.bf16.msra.mxu0 0
    %1396 = vmatprep.subr.bf16.mxu0 0
    %1397 = vmatpush1.bf16.msra.mxu0 0
    %1398 = vmatprep.subr.bf16.mxu0 0
    %1399 = vmatpush1.bf16.msra.mxu0 0
    %1400 = vmatprep.subr.bf16.mxu0 0
    %1401 = vmatpush1.bf16.msra.mxu0 0
    %1402 = vmatprep.subr.bf16.mxu0 0
    %1403 = vmatpush1.bf16.msra.mxu0 0
    %1404 = vmatprep.mubr.bf16.mxu0 0
    %1405 = vmatmul.mubr.bf16.gmra.mrb[0].mxu0 %v1352
    %v1406 = vpop.f32.mrb[0].mxu0
    %v1407 = vadd.f32 0.0, %v1406
    %v1408 = vpop.f32.mrb[0].mxu0
    %v1409 = vadd.f32 0.0, %v1408
    %v1410 = vpop.f32.mrb[0].mxu0
    %v1411 = vadd.f32 0.0, %v1410
    %v1412 = vpop.f32.mrb[0].mxu0
    %v1413 = vadd.f32 0.0, %v1412
    %1414 = vdwg.mxu0
    %1415 = vmatprep.subr.bf16.mxu0 %v178
    %1416 = vmatpush1.bf16.msra.mxu0 %v177
    %1417 = vmatprep.subr.bf16.mxu0 %v182
    %1418 = vmatpush1.bf16.msra.mxu0 %v181
    %1419 = vmatprep.subr.bf16.mxu0 %v186
    %1420 = vmatpush1.bf16.msra.mxu0 %v185
    %1421 = vmatprep.subr.bf16.mxu0 %v190
    %1422 = vmatpush1.bf16.msra.mxu0 %v189
    %1423 = vmatprep.subr.bf16.mxu0 %v194
    %1424 = vmatpush1.bf16.msra.mxu0 %v193
    %1425 = vmatprep.subr.bf16.mxu0 %v198
    %1426 = vmatpush1.bf16.msra.mxu0 %v197
    %1427 = vmatprep.subr.bf16.mxu0 %v202
    %1428 = vmatpush1.bf16.msra.mxu0 %v201
    %1429 = vmatprep.subr.bf16.mxu0 %v206
    %1430 = vmatpush1.bf16.msra.mxu0 %v205
    %1431 = vmatprep.subr.bf16.mxu0 0
    %1432 = vmatpush1.bf16.msra.mxu0 0
    %1433 = vmatprep.subr.bf16.mxu0 0
    %1434 = vmatpush1.bf16.msra.mxu0 0
    %1435 = vmatprep.subr.bf16.mxu0 0
    %1436 = vmatpush1.bf16.msra.mxu0 0
    %1437 = vmatprep.subr.bf16.mxu0 0
    %1438 = vmatpush1.bf16.msra.mxu0 0
    %1439 = vmatprep.subr.bf16.mxu0 0
    %1440 = vmatpush1.bf16.msra.mxu0 0
    %1441 = vmatprep.subr.bf16.mxu0 0
    %1442 = vmatpush1.bf16.msra.mxu0 0
    %1443 = vmatprep.subr.bf16.mxu0 0
    %1444 = vmatpush1.bf16.msra.mxu0 0
    %1445 = vmatprep.subr.bf16.mxu0 0
    %1446 = vmatpush1.bf16.msra.mxu0 0
    %1447 = vmatprep.mubr.bf16.mxu0 0
    %1448 = vmatmul.mubr.bf16.gmra.mrb[0].mxu0 %v1352
    %v1449 = vpop.f32.mrb[0].mxu0
    %v1450 = vadd.f32 0.0, %v1449
    %v1451 = vpop.f32.mrb[0].mxu0
    %v1452 = vadd.f32 0.0, %v1451
    %v1453 = vpop.f32.mrb[0].mxu0
    %v1454 = vadd.f32 0.0, %v1453
    %v1455 = vpop.f32.mrb[0].mxu0
    %v1456 = vadd.f32 0.0, %v1455
    %1457 = vdwg.mxu0
    %v1458 = vadd.f32 %v1364, %v1407
    %v1459 = vadd.f32 %v1365, %v1409
    %v1460 = vadd.f32 %v1366, %v1450
    %v1461 = vadd.f32 %v1367, %v1452
    %v1462 = vadd.f32 %v1368, %v1411
    %v1463 = vadd.f32 %v1369, %v1413
    %v1464 = vadd.f32 %v1370, %v1454
    %v1465 = vadd.f32 %v1371, %v1456
    %v1466 = vxor.u32 %v1458, 2147483648
    %v1467 = vxor.u32 %v1462, 2147483648
    %v1468 = vmul.f32 %v1466, 1.442695
    %v1469 = vpow.pop %v1468
    %v1470 = vmul.f32 %v1467, 1.442695
    %v1471 = vpow.pop %v1470
    %v1472 = vadd.f32 %v1469, 1.0
    %v1473 = vadd.f32 %v1471, 1.0
    %v1474 = vrcp.pop %v1472
    %v1475 = vmul.f32 1.0, %v1474
    %v1476 = vrcp.pop %v1473
    %v1477 = vmul.f32 1.0, %v1476
    %v1478 = vxor.u32 %v1459, 2147483648
    %v1479 = vxor.u32 %v1463, 2147483648
    %v1480 = vmul.f32 %v1478, 1.442695
    %v1481 = vpow.pop %v1480
    %v1482 = vmul.f32 %v1479, 1.442695
    %v1483 = vpow.pop %v1482
    %v1484 = vadd.f32 %v1481, 1.0
    %v1485 = vadd.f32 %v1483, 1.0
    %v1486 = vrcp.pop %v1484
    %v1487 = vmul.f32 1.0, %v1486
    %v1488 = vrcp.pop %v1485
    %v1489 = vmul.f32 1.0, %v1488
    %v1490 = vtanh.pop %v1460
    %v1491 = vtanh.pop %v1464
    %v1492 = vxor.u32 %v1461, 2147483648
    %v1493 = vxor.u32 %v1465, 2147483648
    %v1494 = vmul.f32 %v1492, 1.442695
    %v1495 = vpow.pop %v1494
    %v1496 = vmul.f32 %v1493, 1.442695
    %v1497 = vpow.pop %v1496
    %v1498 = vadd.f32 %v1495, 1.0
    %v1499 = vadd.f32 %v1497, 1.0
    %v1500 = vrcp.pop %v1498
    %v1501 = vmul.f32 1.0, %v1500
    %v1502 = vrcp.pop %v1499
    %v1503 = vmul.f32 1.0, %v1502
    %v1504 = vmul.f32 %v1487, %v1346
    %v1505 = vmul.f32 %v1489, %v1347
    %v1506 = vmul.f32 %v1475, %v1490
    %v1507 = vmul.f32 %v1477, %v1491
    %v1508 = vadd.f32 %v1504, %v1506
    %v1509 = vadd.f32 %v1505, %v1507
    %v1510 = vtanh.pop %v1508
    %v1511 = vtanh.pop %v1509
    %v1512 = vmul.f32 %v1501, %v1510
    %v1513 = vmul.f32 %v1503, %v1511
    %v1514 = vpack.c.bf16 %v1513, %v1512
    %v1516 = vunpack.c.l.b16 %v1514
    %v1517 = vunpack.c.h.b16 %v1514
    %v1518 = vpack.c.b16 %v1516, %v1516
    %v1519 = vpack.c.b16 %v1517, %v1517
    %s1522 = scalar_lea.vmem [#allocation4], 56
    %1523 = vst [vmem:[%s1522] sm:$0xf] %v1518
    %1524 = vst [vmem:[%s1522 + $0x4] sm:$0xf] %v1519
    %1525 = vst [vmem:[#allocation2] sm:$0xff] %v1512
    %1526 = vst [vmem:[#allocation2 + $0x8] sm:$0xff] %v1513
    %1527 = vst [vmem:[#allocation3] sm:$0xff] %v1508
    %1528 = vst [vmem:[#allocation3 + $0x8] sm:$0xff] %v1509
    // Predicated region
    $region22: #{encoder_forward.3} parent=1 // pred_check
      %p1529 = pneg %p22
    $region23: #{encoder_forward.3} parent=1 // pred_check_branch
      %1531 = sbr.rel (%p1529) target = $region25
    $region24: #{encoder_forward.3} parent=1 // pred_region
      %1532 = vst [vmem:[%s5] sm:$0xff] %v1512
      %1533 = vst [vmem:[%s5 + $0x8] sm:$0xff] %v1513
      %1534 = vst [vmem:[%s6] sm:$0xff] %v1508
      %1535 = vst [vmem:[%s6 + $0x8] sm:$0xff] %v1509
    $region25: #{encoder_forward.3} parent=1 // pred_fallthru
      _
    // Predicated region
    $region26: #{encoder_forward.3} parent=1 // pred_check
      _
    $region27: #{encoder_forward.3} parent=1 // pred_check_branch
      %1537 = sbr.rel (0) target = $region29
    $region28: #{encoder_forward.3} parent=1 // pred_region
      %s1539 = ssub.s32 1024, 1024
      %1540 = vsyncadd [#allocation5], %s1539
      %s1541 = sshll.u32 [#allocation4], 4
      %s1542 = int_to_ptr.vmem [resolvable:$true] %s1541
      %1547 = dma.vmem_to_hbm [thread:$0]  %s1542, 1024, %s4, [#allocation5], 64, 64, 4
    $region29: #{encoder_forward.3} parent=1 // pred_fallthru
      _
    // Predicated region
    $region30: #{encoder_forward.3} parent=1 // pred_check
      _
    $region31: #{encoder_forward.3} parent=1 // pred_check_branch
      %1549 = sbr.rel (0) target = $region33
    $region32: #{encoder_forward.3} parent=1 // pred_region
      _
    $region33: #{encoder_forward.3} parent=1 // pred_fallthru
      _
    // Predicated region
    $region34: #{encoder_forward.3} parent=1 // pred_check
      _
    $region35: #{encoder_forward.3} parent=1 // pred_check_branch
      %1551 = sbr.rel (0) target = $region37
    $region36: #{encoder_forward.3} parent=1 // pred_region
      _
    $region37: #{encoder_forward.3} parent=1 // pred_fallthru
      _
    // Predicated region
    $region38: #{encoder_forward.3} parent=1 // pred_check
      _
    $region39: #{encoder_forward.3} parent=1 // pred_check_branch
      %1553 = sbr.rel (0) target = $region41
    $region40: #{encoder_forward.3} parent=1 // pred_region
      %1554 = dma.done [#allocation5], 1024
    $region41: #{encoder_forward.3} parent=1 // pred_fallthru
      _
    // Predicated region
    $region42: #{encoder_forward.3} parent=1 // pred_check
      _
    $region43: #{encoder_forward.3} parent=1 // pred_check_branch
      %1556 = sbr.rel (0) target = $region45
    $region44: #{encoder_forward.3} parent=1 // pred_region
      _
    $region45: #{encoder_forward.3} parent=1 // pred_fallthru
      _
    // Predicated region
    $region46: #{encoder_forward.3} parent=1 // pred_check
      _
    $region47: #{encoder_forward.3} parent=1 // pred_check_branch
      %1558 = sbr.rel (0) target = $region49
    $region48: #{encoder_forward.3} parent=1 // pred_region
      _
    $region49: #{encoder_forward.3} parent=1 // pred_fallthru
      _
    %1559 = vsyncpa [#allocation5], 1

// kernel: encoder_forward.2
$region0: #{encoder_forward.2}
  #allocation0 [shape = 'u32[]', space=smem, size = 0x4, offset = 0x4, fixed_abs, tag = 'smem constant byte address 0x4 - core index']
  #allocation1 [shape = 'u32[144,128]{1,0:T(1,128)}', space=vmem, size = 0x12000, scoped, tag = 'internal scratch']
  #allocation2 [shape = 'f32[16,128]{1,0:T(8,128)}', space=vmem, size = 0x2000, scoped, tag = 'scratch operand']
  #allocation3 [shape = 'f32[16,128]{1,0:T(8,128)}', space=vmem, size = 0x2000, scoped, tag = 'scratch operand']
  %s0 = inlined_call_operand.vmem [shape: f32[8,16,512], index: 0, kind: input, shape index: {}]
  %s1 = inlined_call_operand.vmem [shape: bf16[128,512], index: 1, kind: input, shape index: {}]
  %s2 = inlined_call_operand.vmem [shape: f32[16,128], index: 2, kind: input, shape index: {}]
  %s3 = inlined_call_operand.vmem [shape: f32[16,128], index: 3, kind: input, shape index: {}]
  %s4 = inlined_call_operand.vmem [shape: bf16[8,16,128], index: 4, kind: output, shape index: {0}]
  %s5 = inlined_call_operand.vmem [shape: f32[16,128], index: 5, kind: output, shape index: {1}]
  %s6 = inlined_call_operand.vmem [shape: f32[16,128], index: 6, kind: output, shape index: {2}]
  %7 = xla_tuple %s4, %s5, %s6
  %s8 = sld [smem:[#allocation0]]
  $region50: #{encoder_forward.2} parent=0
    _
  %s10 = ssub.s32 1, %s8
  %s11 = scalar_select 0, %s10, %s8
  // Predicated region
  $region2: #{encoder_forward.2} parent=0 // pred_check
    _
  $region3: #{encoder_forward.2} parent=0 // pred_check_branch
    %13 = sbr.rel (0) target = $region5
  $region4: #{encoder_forward.2} parent=0 // pred_region
    _
  $region5: #{encoder_forward.2} parent=0 // pred_fallthru
    _
  // Predicated region
  $region6: #{encoder_forward.2} parent=0 // pred_check
    _
  $region7: #{encoder_forward.2} parent=0 // pred_check_branch
    %15 = sbr.rel (0) target = $region9
  $region8: #{encoder_forward.2} parent=0 // pred_region
    _
  $region9: #{encoder_forward.2} parent=0 // pred_fallthru
    _
  // Predicated region
  $region10: #{encoder_forward.2} parent=0 // pred_check
    _
  $region11: #{encoder_forward.2} parent=0 // pred_check_branch
    %17 = sbr.rel (0) target = $region13
  $region12: #{encoder_forward.2} parent=0 // pred_region
    _
  $region13: #{encoder_forward.2} parent=0 // pred_fallthru
    _
  // Predicated region
  $region14: #{encoder_forward.2} parent=0 // pred_check
    _
  $region15: #{encoder_forward.2} parent=0 // pred_check_branch
    %19 = sbr.rel (0) target = $region17
  $region16: #{encoder_forward.2} parent=0 // pred_region
    _
  $region17: #{encoder_forward.2} parent=0 // pred_fallthru
    _
  %p21 = scmp.eq.s32.totalorder 0, 0
  // Predicated region
  $region18: #{encoder_forward.2} parent=0 // pred_check
    %p22 = pneg %p21
  $region19: #{encoder_forward.2} parent=0 // pred_check_branch
    %24 = sbr.rel (%p22) target = $region21
  $region20: #{encoder_forward.2} parent=0 // pred_region
    %v25 = vld [vmem:[%s2] sm:$0xff]
    %v26 = vld [vmem:[%s2 + $0x8] sm:$0xff]
    %27 = vst [vmem:[#allocation2] sm:$0xff] %v25
    %28 = vst [vmem:[#allocation2 + $0x8] sm:$0xff] %v26
    %v29 = vld [vmem:[%s3] sm:$0xff]
    %v30 = vld [vmem:[%s3 + $0x8] sm:$0xff]
    %31 = vst [vmem:[#allocation3] sm:$0xff] %v29
    %32 = vst [vmem:[#allocation3 + $0x8] sm:$0xff] %v30
  $region21: #{encoder_forward.2} parent=0 // pred_fallthru
    _
  %v33 = vld [vmem:[%s1] sm:$0xff]
  %v34 = vld [vmem:[%s1 + $0x8] sm:$0xff]
  %v35 = vld [vmem:[%s1 + $0x10] sm:$0xff]
  %v36 = vld [vmem:[%s1 + $0x18] sm:$0xff]
  %v37 = vld [vmem:[%s1 + $0x20] sm:$0xff]
  %v38 = vld [vmem:[%s1 + $0x28] sm:$0xff]
  %v39 = vld [vmem:[%s1 + $0x30] sm:$0xff]
  %v40 = vld [vmem:[%s1 + $0x38] sm:$0xff]
  %v41 = vld [vmem:[%s1 + $0x40] sm:$0xff]
  %v42 = vld [vmem:[%s1 + $0x48] sm:$0xff]
  %v43 = vld [vmem:[%s1 + $0x50] sm:$0xff]
  %v44 = vld [vmem:[%s1 + $0x58] sm:$0xff]
  %v45 = vld [vmem:[%s1 + $0x60] sm:$0xff]
  %v46 = vld [vmem:[%s1 + $0x68] sm:$0xff]
  %v47 = vld [vmem:[%s1 + $0x70] sm:$0xff]
  %v48 = vld [vmem:[%s1 + $0x78] sm:$0xff]
  %v49 = vld [vmem:[%s1 + $0x80] sm:$0xff]
  %v50 = vld [vmem:[%s1 + $0x88] sm:$0xff]
  %v51 = vld [vmem:[%s1 + $0x90] sm:$0xff]
  %v52 = vld [vmem:[%s1 + $0x98] sm:$0xff]
  %v53 = vld [vmem:[%s1 + $0xa0] sm:$0xff]
  %v54 = vld [vmem:[%s1 + $0xa8] sm:$0xff]
  %v55 = vld [vmem:[%s1 + $0xb0] sm:$0xff]
  %v56 = vld [vmem:[%s1 + $0xb8] sm:$0xff]
  %v57 = vld [vmem:[%s1 + $0xc0] sm:$0xff]
  %v58 = vld [vmem:[%s1 + $0xc8] sm:$0xff]
  %v59 = vld [vmem:[%s1 + $0xd0] sm:$0xff]
  %v60 = vld [vmem:[%s1 + $0xd8] sm:$0xff]
  %v61 = vld [vmem:[%s1 + $0xe0] sm:$0xff]
  %v62 = vld [vmem:[%s1 + $0xe8] sm:$0xff]
  %v63 = vld [vmem:[%s1 + $0xf0] sm:$0xff]
  %v64 = vld [vmem:[%s1 + $0xf8] sm:$0xff]
  %v65 = vld [vmem:[#allocation2] sm:$0xff]
  %v66 = vld [vmem:[#allocation2 + $0x8] sm:$0xff]
  %v67 = vld [vmem:[#allocation3] sm:$0xff]
  %v68 = vld [vmem:[#allocation3 + $0x8] sm:$0xff]
  %v69 = vld [vmem:[%s0] sm:$0xff]
  %v70 = vld [vmem:[%s0 + $0x8] sm:$0xff]
  %v71 = vld [vmem:[%s0 + $0x10] sm:$0xff]
  %v72 = vld [vmem:[%s0 + $0x18] sm:$0xff]
  %v73 = vld [vmem:[%s0 + $0x20] sm:$0xff]
  %v74 = vld [vmem:[%s0 + $0x28] sm:$0xff]
  %v75 = vld [vmem:[%s0 + $0x30] sm:$0xff]
  %v76 = vld [vmem:[%s0 + $0x38] sm:$0xff]
  %v77 = vpack.c.bf16 %v66, %v65
  %v110 = vunpack.c.l.b16 %v33
  %v111 = vunpack.c.h.b16 %v33
  %v112 = vunpack.c.l.b16 %v34
  %v113 = vunpack.c.h.b16 %v34
  %v114 = vunpack.c.l.b16 %v35
  %v115 = vunpack.c.h.b16 %v35
  %v116 = vunpack.c.l.b16 %v36
  %v117 = vunpack.c.h.b16 %v36
  %v118 = vunpack.c.l.b16 %v37
  %v119 = vunpack.c.h.b16 %v37
  %v120 = vunpack.c.l.b16 %v38
  %v121 = vunpack.c.h.b16 %v38
  %v122 = vunpack.c.l.b16 %v39
  %v123 = vunpack.c.h.b16 %v39
  %v124 = vunpack.c.l.b16 %v40
  %v125 = vunpack.c.h.b16 %v40
  %v126 = vunpack.c.l.b16 %v41
  %v127 = vunpack.c.h.b16 %v41
  %v128 = vunpack.c.l.b16 %v42
  %v129 = vunpack.c.h.b16 %v42
  %v130 = vunpack.c.l.b16 %v43
  %v131 = vunpack.c.h.b16 %v43
  %v132 = vunpack.c.l.b16 %v44
  %v133 = vunpack.c.h.b16 %v44
  %v134 = vunpack.c.l.b16 %v45
  %v135 = vunpack.c.h.b16 %v45
  %v136 = vunpack.c.l.b16 %v46
  %v137 = vunpack.c.h.b16 %v46
  %v138 = vunpack.c.l.b16 %v47
  %v139 = vunpack.c.h.b16 %v47
  %v140 = vunpack.c.l.b16 %v48
  %v141 = vunpack.c.h.b16 %v48
  %v142 = vunpack.c.l.b16 %v49
  %v143 = vunpack.c.h.b16 %v49
  %v144 = vunpack.c.l.b16 %v50
  %v145 = vunpack.c.h.b16 %v50
  %v146 = vunpack.c.l.b16 %v51
  %v147 = vunpack.c.h.b16 %v51
  %v148 = vunpack.c.l.b16 %v52
  %v149 = vunpack.c.h.b16 %v52
  %v150 = vunpack.c.l.b16 %v53
  %v151 = vunpack.c.h.b16 %v53
  %v152 = vunpack.c.l.b16 %v54
  %v153 = vunpack.c.h.b16 %v54
  %v154 = vunpack.c.l.b16 %v55
  %v155 = vunpack.c.h.b16 %v55
  %v156 = vunpack.c.l.b16 %v56
  %v157 = vunpack.c.h.b16 %v56
  %v158 = vunpack.c.l.b16 %v57
  %v159 = vunpack.c.h.b16 %v57
  %v160 = vunpack.c.l.b16 %v58
  %v161 = vunpack.c.h.b16 %v58
  %v162 = vunpack.c.l.b16 %v59
  %v163 = vunpack.c.h.b16 %v59
  %v164 = vunpack.c.l.b16 %v60
  %v165 = vunpack.c.h.b16 %v60
  %v166 = vunpack.c.l.b16 %v61
  %v167 = vunpack.c.h.b16 %v61
  %v168 = vunpack.c.l.b16 %v62
  %v169 = vunpack.c.h.b16 %v62
  %v170 = vunpack.c.l.b16 %v63
  %v171 = vunpack.c.h.b16 %v63
  %v172 = vunpack.c.l.b16 %v64
  %v173 = vunpack.c.h.b16 %v64
  %v174 = vpack.c.b16 %v114, %v110
  %v175 = vpack.c.b16 %v115, %v111
  %v176 = vpack.c.b16 %v116, %v112
  %v177 = vpack.c.b16 %v117, %v113
  %v178 = vpack.c.b16 %v122, %v118
  %v179 = vpack.c.b16 %v123, %v119
  %v180 = vpack.c.b16 %v124, %v120
  %v181 = vpack.c.b16 %v125, %v121
  %v182 = vpack.c.b16 %v130, %v126
  %v183 = vpack.c.b16 %v131, %v127
  %v184 = vpack.c.b16 %v132, %v128
  %v185 = vpack.c.b16 %v133, %v129
  %v186 = vpack.c.b16 %v138, %v134
  %v187 = vpack.c.b16 %v139, %v135
  %v188 = vpack.c.b16 %v140, %v136
  %v189 = vpack.c.b16 %v141, %v137
  %v190 = vpack.c.b16 %v146, %v142
  %v191 = vpack.c.b16 %v147, %v143
  %v192 = vpack.c.b16 %v148, %v144
  %v193 = vpack.c.b16 %v149, %v145
  %v194 = vpack.c.b16 %v154, %v150
  %v195 = vpack.c.b16 %v155, %v151
  %v196 = vpack.c.b16 %v156, %v152
  %v197 = vpack.c.b16 %v157, %v153
  %v198 = vpack.c.b16 %v162, %v158
  %v199 = vpack.c.b16 %v163, %v159
  %v200 = vpack.c.b16 %v164, %v160
  %v201 = vpack.c.b16 %v165, %v161
  %v202 = vpack.c.b16 %v170, %v166
  %v203 = vpack.c.b16 %v171, %v167
  %v204 = vpack.c.b16 %v172, %v168
  %v205 = vpack.c.b16 %v173, %v169
  %238 = vmatprep.subr.bf16.mxu0 %v175
  %239 = vmatpush1.bf16.msra.mxu0 %v174
  %240 = vmatprep.subr.bf16.mxu0 %v179
  %241 = vmatpush1.bf16.msra.mxu0 %v178
  %242 = vmatprep.subr.bf16.mxu0 %v183
  %243 = vmatpush1.bf16.msra.mxu0 %v182
  %244 = vmatprep.subr.bf16.mxu0 %v187
  %245 = vmatpush1.bf16.msra.mxu0 %v186
  %246 = vmatprep.subr.bf16.mxu0 %v191
  %247 = vmatpush1.bf16.msra.mxu0 %v190
  %248 = vmatprep.subr.bf16.mxu0 %v195
  %249 = vmatpush1.bf16.msra.mxu0 %v194
  %250 = vmatprep.subr.bf16.mxu0 %v199
  %251 = vmatpush1.bf16.msra.mxu0 %v198
  %252 = vmatprep.subr.bf16.mxu0 %v203
  %253 = vmatpush1.bf16.msra.mxu0 %v202
  %254 = vmatprep.subr.bf16.mxu0 0
  %255 = vmatpush1.bf16.msra.mxu0 0
  %256 = vmatprep.subr.bf16.mxu0 0
  %257 = vmatpush1.bf16.msra.mxu0 0
  %258 = vmatprep.subr.bf16.mxu0 0
  %259 = vmatpush1.bf16.msra.mxu0 0
  %260 = vmatprep.subr.bf16.mxu0 0
  %261 = vmatpush1.bf16.msra.mxu0 0
  %262 = vmatprep.subr.bf16.mxu0 0
  %263 = vmatpush1.bf16.msra.mxu0 0
  %264 = vmatprep.subr.bf16.mxu0 0
  %265 = vmatpush1.bf16.msra.mxu0 0
  %266 = vmatprep.subr.bf16.mxu0 0
  %267 = vmatpush1.bf16.msra.mxu0 0
  %268 = vmatprep.subr.bf16.mxu0 0
  %269 = vmatpush1.bf16.msra.mxu0 0
  %270 = vmatprep.mubr.bf16.mxu0 0
  %271 = vmatmul.mubr.bf16.gmra.mrb[0].mxu0 %v77
  %v272 = vpop.f32.mrb[0].mxu0
  %v273 = vadd.f32 0.0, %v272
  %v274 = vpop.f32.mrb[0].mxu0
  %v275 = vadd.f32 0.0, %v274
  %v276 = vpop.f32.mrb[0].mxu0
  %v277 = vadd.f32 0.0, %v276
  %v278 = vpop.f32.mrb[0].mxu0
  %v279 = vadd.f32 0.0, %v278
  %280 = vdwg.mxu0
  %281 = vmatprep.subr.bf16.mxu0 %v177
  %282 = vmatpush1.bf16.msra.mxu0 %v176
  %283 = vmatprep.subr.bf16.mxu0 %v181
  %284 = vmatpush1.bf16.msra.mxu0 %v180
  %285 = vmatprep.subr.bf16.mxu0 %v185
  %286 = vmatpush1.bf16.msra.mxu0 %v184
  %287 = vmatprep.subr.bf16.mxu0 %v189
  %288 = vmatpush1.bf16.msra.mxu0 %v188
  %289 = vmatprep.subr.bf16.mxu0 %v193
  %290 = vmatpush1.bf16.msra.mxu0 %v192
  %291 = vmatprep.subr.bf16.mxu0 %v197
  %292 = vmatpush1.bf16.msra.mxu0 %v196
  %293 = vmatprep.subr.bf16.mxu0 %v201
  %294 = vmatpush1.bf16.msra.mxu0 %v200
  %295 = vmatprep.subr.bf16.mxu0 %v205
  %296 = vmatpush1.bf16.msra.mxu0 %v204
  %297 = vmatprep.subr.bf16.mxu0 0
  %298 = vmatpush1.bf16.msra.mxu0 0
  %299 = vmatprep.subr.bf16.mxu0 0
  %300 = vmatpush1.bf16.msra.mxu0 0
  %301 = vmatprep.subr.bf16.mxu0 0
  %302 = vmatpush1.bf16.msra.mxu0 0
  %303 = vmatprep.subr.bf16.mxu0 0
  %304 = vmatpush1.bf16.msra.mxu0 0
  %305 = vmatprep.subr.bf16.mxu0 0
  %306 = vmatpush1.bf16.msra.mxu0 0
  %307 = vmatprep.subr.bf16.mxu0 0
  %308 = vmatpush1.bf16.msra.mxu0 0
  %309 = vmatprep.subr.bf16.mxu0 0
  %310 = vmatpush1.bf16.msra.mxu0 0
  %311 = vmatprep.subr.bf16.mxu0 0
  %312 = vmatpush1.bf16.msra.mxu0 0
  %313 = vmatprep.mubr.bf16.mxu0 0
  %314 = vmatmul.mubr.bf16.gmra.mrb[0].mxu0 %v77
  %v315 = vpop.f32.mrb[0].mxu0
  %v316 = vadd.f32 0.0, %v315
  %v317 = vpop.f32.mrb[0].mxu0
  %v318 = vadd.f32 0.0, %v317
  %v319 = vpop.f32.mrb[0].mxu0
  %v320 = vadd.f32 0.0, %v319
  %v321 = vpop.f32.mrb[0].mxu0
  %v322 = vadd.f32 0.0, %v321
  %323 = vdwg.mxu0
  %v324 = vadd.f32 %v69, %v273
  %v325 = vadd.f32 %v70, %v275
  %v326 = vadd.f32 %v71, %v316
  %v327 = vadd.f32 %v72, %v318
  %v328 = vadd.f32 %v73, %v277
  %v329 = vadd.f32 %v74, %v279
  %v330 = vadd.f32 %v75, %v320
  %v331 = vadd.f32 %v76, %v322
  %v332 = vxor.u32 %v324, 2147483648
  %v333 = vxor.u32 %v328, 2147483648
  %v334 = vmul.f32 %v332, 1.442695
  %v335 = vpow.pop %v334
  %v336 = vmul.f32 %v333, 1.442695
  %v337 = vpow.pop %v336
  %v338 = vadd.f32 %v335, 1.0
  %v339 = vadd.f32 %v337, 1.0
  %v340 = vrcp.pop %v338
  %v341 = vmul.f32 1.0, %v340
  %v342 = vrcp.pop %v339
  %v343 = vmul.f32 1.0, %v342
  %v344 = vxor.u32 %v325, 2147483648
  %v345 = vxor.u32 %v329, 2147483648
  %v346 = vmul.f32 %v344, 1.442695
  %v347 = vpow.pop %v346
  %v348 = vmul.f32 %v345, 1.442695
  %v349 = vpow.pop %v348
  %v350 = vadd.f32 %v347, 1.0
  %v351 = vadd.f32 %v349, 1.0
  %v352 = vrcp.pop %v350
  %v353 = vmul.f32 1.0, %v352
  %v354 = vrcp.pop %v351
  %v355 = vmul.f32 1.0, %v354
  %v356 = vtanh.pop %v326
  %v357 = vtanh.pop %v330
  %v358 = vxor.u32 %v327, 2147483648
  %v359 = vxor.u32 %v331, 2147483648
  %v360 = vmul.f32 %v358, 1.442695
  %v361 = vpow.pop %v360
  %v362 = vmul.f32 %v359, 1.442695
  %v363 = vpow.pop %v362
  %v364 = vadd.f32 %v361, 1.0
  %v365 = vadd.f32 %v363, 1.0
  %v366 = vrcp.pop %v364
  %v367 = vmul.f32 1.0, %v366
  %v368 = vrcp.pop %v365
  %v369 = vmul.f32 1.0, %v368
  %v370 = vmul.f32 %v353, %v67
  %v371 = vmul.f32 %v355, %v68
  %v372 = vmul.f32 %v341, %v356
  %v373 = vmul.f32 %v343, %v357
  %v374 = vadd.f32 %v370, %v372
  %v375 = vadd.f32 %v371, %v373
  %v376 = vtanh.pop %v374
  %v377 = vtanh.pop %v375
  %v378 = vmul.f32 %v367, %v376
  %v379 = vmul.f32 %v369, %v377
  %v380 = vpack.c.bf16 %v379, %v378
  %381 = vst [vmem:[%s4] sm:$0xff] %v380
  %s382 = scalar_lea.vmem %s0, 64
  %v383 = vld [vmem:[%s382] sm:$0xff]
  %v384 = vld [vmem:[%s382 + $0x8] sm:$0xff]
  %v385 = vld [vmem:[%s382 + $0x10] sm:$0xff]
  %v386 = vld [vmem:[%s382 + $0x18] sm:$0xff]
  %v387 = vld [vmem:[%s382 + $0x20] sm:$0xff]
  %v388 = vld [vmem:[%s382 + $0x28] sm:$0xff]
  %v389 = vld [vmem:[%s382 + $0x30] sm:$0xff]
  %v390 = vld [vmem:[%s382 + $0x38] sm:$0xff]
  %391 = vmatprep.subr.bf16.mxu0 %v175
  %392 = vmatpush1.bf16.msra.mxu0 %v174
  %393 = vmatprep.subr.bf16.mxu0 %v179
  %394 = vmatpush1.bf16.msra.mxu0 %v178
  %395 = vmatprep.subr.bf16.mxu0 %v183
  %396 = vmatpush1.bf16.msra.mxu0 %v182
  %397 = vmatprep.subr.bf16.mxu0 %v187
  %398 = vmatpush1.bf16.msra.mxu0 %v186
  %399 = vmatprep.subr.bf16.mxu0 %v191
  %400 = vmatpush1.bf16.msra.mxu0 %v190
  %401 = vmatprep.subr.bf16.mxu0 %v195
  %402 = vmatpush1.bf16.msra.mxu0 %v194
  %403 = vmatprep.subr.bf16.mxu0 %v199
  %404 = vmatpush1.bf16.msra.mxu0 %v198
  %405 = vmatprep.subr.bf16.mxu0 %v203
  %406 = vmatpush1.bf16.msra.mxu0 %v202
  %407 = vmatprep.subr.bf16.mxu0 0
  %408 = vmatpush1.bf16.msra.mxu0 0
  %409 = vmatprep.subr.bf16.mxu0 0
  %410 = vmatpush1.bf16.msra.mxu0 0
  %411 = vmatprep.subr.bf16.mxu0 0
  %412 = vmatpush1.bf16.msra.mxu0 0
  %413 = vmatprep.subr.bf16.mxu0 0
  %414 = vmatpush1.bf16.msra.mxu0 0
  %415 = vmatprep.subr.bf16.mxu0 0
  %416 = vmatpush1.bf16.msra.mxu0 0
  %417 = vmatprep.subr.bf16.mxu0 0
  %418 = vmatpush1.bf16.msra.mxu0 0
  %419 = vmatprep.subr.bf16.mxu0 0
  %420 = vmatpush1.bf16.msra.mxu0 0
  %421 = vmatprep.subr.bf16.mxu0 0
  %422 = vmatpush1.bf16.msra.mxu0 0
  %423 = vmatprep.mubr.bf16.mxu0 0
  %424 = vmatmul.mubr.bf16.gmra.mrb[0].mxu0 %v380
  %v425 = vpop.f32.mrb[0].mxu0
  %v426 = vadd.f32 0.0, %v425
  %v427 = vpop.f32.mrb[0].mxu0
  %v428 = vadd.f32 0.0, %v427
  %v429 = vpop.f32.mrb[0].mxu0
  %v430 = vadd.f32 0.0, %v429
  %v431 = vpop.f32.mrb[0].mxu0
  %v432 = vadd.f32 0.0, %v431
  %433 = vdwg.mxu0
  %434 = vmatprep.subr.bf16.mxu0 %v177
  %435 = vmatpush1.bf16.msra.mxu0 %v176
  %436 = vmatprep.subr.bf16.mxu0 %v181
  %437 = vmatpush1.bf16.msra.mxu0 %v180
  %438 = vmatprep.subr.bf16.mxu0 %v185
  %439 = vmatpush1.bf16.msra.mxu0 %v184
  %440 = vmatprep.subr.bf16.mxu0 %v189
  %441 = vmatpush1.bf16.msra.mxu0 %v188
  %442 = vmatprep.subr.bf16.mxu0 %v193
  %443 = vmatpush1.bf16.msra.mxu0 %v192
  %444 = vmatprep.subr.bf16.mxu0 %v197
  %445 = vmatpush1.bf16.msra.mxu0 %v196
  %446 = vmatprep.subr.bf16.mxu0 %v201
  %447 = vmatpush1.bf16.msra.mxu0 %v200
  %448 = vmatprep.subr.bf16.mxu0 %v205
  %449 = vmatpush1.bf16.msra.mxu0 %v204
  %450 = vmatprep.subr.bf16.mxu0 0
  %451 = vmatpush1.bf16.msra.mxu0 0
  %452 = vmatprep.subr.bf16.mxu0 0
  %453 = vmatpush1.bf16.msra.mxu0 0
  %454 = vmatprep.subr.bf16.mxu0 0
  %455 = vmatpush1.bf16.msra.mxu0 0
  %456 = vmatprep.subr.bf16.mxu0 0
  %457 = vmatpush1.bf16.msra.mxu0 0
  %458 = vmatprep.subr.bf16.mxu0 0
  %459 = vmatpush1.bf16.msra.mxu0 0
  %460 = vmatprep.subr.bf16.mxu0 0
  %461 = vmatpush1.bf16.msra.mxu0 0
  %462 = vmatprep.subr.bf16.mxu0 0
  %463 = vmatpush1.bf16.msra.mxu0 0
  %464 = vmatprep.subr.bf16.mxu0 0
  %465 = vmatpush1.bf16.msra.mxu0 0
  %466 = vmatprep.mubr.bf16.mxu0 0
  %467 = vmatmul.mubr.bf16.gmra.mrb[0].mxu0 %v380
  %v468 = vpop.f32.mrb[0].mxu0
  %v469 = vadd.f32 0.0, %v468
  %v470 = vpop.f32.mrb[0].mxu0
  %v471 = vadd.f32 0.0, %v470
  %v472 = vpop.f32.mrb[0].mxu0
  %v473 = vadd.f32 0.0, %v472
  %v474 = vpop.f32.mrb[0].mxu0
  %v475 = vadd.f32 0.0, %v474
  %476 = vdwg.mxu0
  %v477 = vadd.f32 %v383, %v426
  %v478 = vadd.f32 %v384, %v428
  %v479 = vadd.f32 %v385, %v469
  %v480 = vadd.f32 %v386, %v471
  %v481 = vadd.f32 %v387, %v430
  %v482 = vadd.f32 %v388, %v432
  %v483 = vadd.f32 %v389, %v473
  %v484 = vadd.f32 %v390, %v475
  %v485 = vxor.u32 %v477, 2147483648
  %v486 = vxor.u32 %v481, 2147483648
  %v487 = vmul.f32 %v485, 1.442695
  %v488 = vpow.pop %v487
  %v489 = vmul.f32 %v486, 1.442695
  %v490 = vpow.pop %v489
  %v491 = vadd.f32 %v488, 1.0
  %v492 = vadd.f32 %v490, 1.0
  %v493 = vrcp.pop %v491
  %v494 = vmul.f32 1.0, %v493
  %v495 = vrcp.pop %v492
  %v496 = vmul.f32 1.0, %v495
  %v497 = vxor.u32 %v478, 2147483648
  %v498 = vxor.u32 %v482, 2147483648
  %v499 = vmul.f32 %v497, 1.442695
  %v500 = vpow.pop %v499
  %v501 = vmul.f32 %v498, 1.442695
  %v502 = vpow.pop %v501
  %v503 = vadd.f32 %v500, 1.0
  %v504 = vadd.f32 %v502, 1.0
  %v505 = vrcp.pop %v503
  %v506 = vmul.f32 1.0, %v505
  %v507 = vrcp.pop %v504
  %v508 = vmul.f32 1.0, %v507
  %v509 = vtanh.pop %v479
  %v510 = vtanh.pop %v483
  %v511 = vxor.u32 %v480, 2147483648
  %v512 = vxor.u32 %v484, 2147483648
  %v513 = vmul.f32 %v511, 1.442695
  %v514 = vpow.pop %v513
  %v515 = vmul.f32 %v512, 1.442695
  %v516 = vpow.pop %v515
  %v517 = vadd.f32 %v514, 1.0
  %v518 = vadd.f32 %v516, 1.0
  %v519 = vrcp.pop %v517
  %v520 = vmul.f32 1.0, %v519
  %v521 = vrcp.pop %v518
  %v522 = vmul.f32 1.0, %v521
  %v523 = vmul.f32 %v506, %v374
  %v524 = vmul.f32 %v508, %v375
  %v525 = vmul.f32 %v494, %v509
  %v526 = vmul.f32 %v496, %v510
  %v527 = vadd.f32 %v523, %v525
  %v528 = vadd.f32 %v524, %v526
  %v529 = vtanh.pop %v527
  %v530 = vtanh.pop %v528
  %v531 = vmul.f32 %v520, %v529
  %v532 = vmul.f32 %v522, %v530
  %v533 = vpack.c.bf16 %v532, %v531
  %s534 = scalar_lea.vmem %s4, 8
  %535 = vst [vmem:[%s534] sm:$0xff] %v533
  %s536 = scalar_lea.vmem %s0, 128
  %v537 = vld [vmem:[%s536] sm:$0xff]
  %v538 = vld [vmem:[%s536 + $0x8] sm:$0xff]
  %v539 = vld [vmem:[%s536 + $0x10] sm:$0xff]
  %v540 = vld [vmem:[%s536 + $0x18] sm:$0xff]
  %v541 = vld [vmem:[%s536 + $0x20] sm:$0xff]
  %v542 = vld [vmem:[%s536 + $0x28] sm:$0xff]
  %v543 = vld [vmem:[%s536 + $0x30] sm:$0xff]
  %v544 = vld [vmem:[%s536 + $0x38] sm:$0xff]
  %545 = vmatprep.subr.bf16.mxu0 %v175
  %546 = vmatpush1.bf16.msra.mxu0 %v174
  %547 = vmatprep.subr.bf16.mxu0 %v179
  %548 = vmatpush1.bf16.msra.mxu0 %v178
  %549 = vmatprep.subr.bf16.mxu0 %v183
  %550 = vmatpush1.bf16.msra.mxu0 %v182
  %551 = vmatprep.subr.bf16.mxu0 %v187
  %552 = vmatpush1.bf16.msra.mxu0 %v186
  %553 = vmatprep.subr.bf16.mxu0 %v191
  %554 = vmatpush1.bf16.msra.mxu0 %v190
  %555 = vmatprep.subr.bf16.mxu0 %v195
  %556 = vmatpush1.bf16.msra.mxu0 %v194
  %557 = vmatprep.subr.bf16.mxu0 %v199
  %558 = vmatpush1.bf16.msra.mxu0 %v198
  %559 = vmatprep.subr.bf16.mxu0 %v203
  %560 = vmatpush1.bf16.msra.mxu0 %v202
  %561 = vmatprep.subr.bf16.mxu0 0
  %562 = vmatpush1.bf16.msra.mxu0 0
  %563 = vmatprep.subr.bf16.mxu0 0
  %564 = vmatpush1.bf16.msra.mxu0 0
  %565 = vmatprep.subr.bf16.mxu0 0
  %566 = vmatpush1.bf16.msra.mxu0 0
  %567 = vmatprep.subr.bf16.mxu0 0
  %568 = vmatpush1.bf16.msra.mxu0 0
  %569 = vmatprep.subr.bf16.mxu0 0
  %570 = vmatpush1.bf16.msra.mxu0 0
  %571 = vmatprep.subr.bf16.mxu0 0
  %572 = vmatpush1.bf16.msra.mxu0 0
  %573 = vmatprep.subr.bf16.mxu0 0
  %574 = vmatpush1.bf16.msra.mxu0 0
  %575 = vmatprep.subr.bf16.mxu0 0
  %576 = vmatpush1.bf16.msra.mxu0 0
  %577 = vmatprep.mubr.bf16.mxu0 0
  %578 = vmatmul.mubr.bf16.gmra.mrb[0].mxu0 %v533
  %v579 = vpop.f32.mrb[0].mxu0
  %v580 = vadd.f32 0.0, %v579
  %v581 = vpop.f32.mrb[0].mxu0
  %v582 = vadd.f32 0.0, %v581
  %v583 = vpop.f32.mrb[0].mxu0
  %v584 = vadd.f32 0.0, %v583
  %v585 = vpop.f32.mrb[0].mxu0
  %v586 = vadd.f32 0.0, %v585
  %587 = vdwg.mxu0
  %588 = vmatprep.subr.bf16.mxu0 %v177
  %589 = vmatpush1.bf16.msra.mxu0 %v176
  %590 = vmatprep.subr.bf16.mxu0 %v181
  %591 = vmatpush1.bf16.msra.mxu0 %v180
  %592 = vmatprep.subr.bf16.mxu0 %v185
  %593 = vmatpush1.bf16.msra.mxu0 %v184
  %594 = vmatprep.subr.bf16.mxu0 %v189
  %595 = vmatpush1.bf16.msra.mxu0 %v188
  %596 = vmatprep.subr.bf16.mxu0 %v193
  %597 = vmatpush1.bf16.msra.mxu0 %v192
  %598 = vmatprep.subr.bf16.mxu0 %v197
  %599 = vmatpush1.bf16.msra.mxu0 %v196
  %600 = vmatprep.subr.bf16.mxu0 %v201
  %601 = vmatpush1.bf16.msra.mxu0 %v200
  %602 = vmatprep.subr.bf16.mxu0 %v205
  %603 = vmatpush1.bf16.msra.mxu0 %v204
  %604 = vmatprep.subr.bf16.mxu0 0
  %605 = vmatpush1.bf16.msra.mxu0 0
  %606 = vmatprep.subr.bf16.mxu0 0
  %607 = vmatpush1.bf16.msra.mxu0 0
  %608 = vmatprep.subr.bf16.mxu0 0
  %609 = vmatpush1.bf16.msra.mxu0 0
  %610 = vmatprep.subr.bf16.mxu0 0
  %611 = vmatpush1.bf16.msra.mxu0 0
  %612 = vmatprep.subr.bf16.mxu0 0
  %613 = vmatpush1.bf16.msra.mxu0 0
  %614 = vmatprep.subr.bf16.mxu0 0
  %615 = vmatpush1.bf16.msra.mxu0 0
  %616 = vmatprep.subr.bf16.mxu0 0
  %617 = vmatpush1.bf16.msra.mxu0 0
  %618 = vmatprep.subr.bf16.mxu0 0
  %619 = vmatpush1.bf16.msra.mxu0 0
  %620 = vmatprep.mubr.bf16.mxu0 0
  %621 = vmatmul.mubr.bf16.gmra.mrb[0].mxu0 %v533
  %v622 = vpop.f32.mrb[0].mxu0
  %v623 = vadd.f32 0.0, %v622
  %v624 = vpop.f32.mrb[0].mxu0
  %v625 = vadd.f32 0.0, %v624
  %v626 = vpop.f32.mrb[0].mxu0
  %v627 = vadd.f32 0.0, %v626
  %v628 = vpop.f32.mrb[0].mxu0
  %v629 = vadd.f32 0.0, %v628
  %630 = vdwg.mxu0
  %v631 = vadd.f32 %v537, %v580
  %v632 = vadd.f32 %v538, %v582
  %v633 = vadd.f32 %v539, %v623
  %v634 = vadd.f32 %v540, %v625
  %v635 = vadd.f32 %v541, %v584
  %v636 = vadd.f32 %v542, %v586
  %v637 = vadd.f32 %v543, %v627
  %v638 = vadd.f32 %v544, %v629
  %v639 = vxor.u32 %v631, 2147483648
  %v640 = vxor.u32 %v635, 2147483648
  %v641 = vmul.f32 %v639, 1.442695
  %v642 = vpow.pop %v641
  %v643 = vmul.f32 %v640, 1.442695
  %v644 = vpow.pop %v643
  %v645 = vadd.f32 %v642, 1.0
  %v646 = vadd.f32 %v644, 1.0
  %v647 = vrcp.pop %v645
  %v648 = vmul.f32 1.0, %v647
  %v649 = vrcp.pop %v646
  %v650 = vmul.f32 1.0, %v649
  %v651 = vxor.u32 %v632, 2147483648
  %v652 = vxor.u32 %v636, 2147483648
  %v653 = vmul.f32 %v651, 1.442695
  %v654 = vpow.pop %v653
  %v655 = vmul.f32 %v652, 1.442695
  %v656 = vpow.pop %v655
  %v657 = vadd.f32 %v654, 1.0
  %v658 = vadd.f32 %v656, 1.0
  %v659 = vrcp.pop %v657
  %v660 = vmul.f32 1.0, %v659
  %v661 = vrcp.pop %v658
  %v662 = vmul.f32 1.0, %v661
  %v663 = vtanh.pop %v633
  %v664 = vtanh.pop %v637
  %v665 = vxor.u32 %v634, 2147483648
  %v666 = vxor.u32 %v638, 2147483648
  %v667 = vmul.f32 %v665, 1.442695
  %v668 = vpow.pop %v667
  %v669 = vmul.f32 %v666, 1.442695
  %v670 = vpow.pop %v669
  %v671 = vadd.f32 %v668, 1.0
  %v672 = vadd.f32 %v670, 1.0
  %v673 = vrcp.pop %v671
  %v674 = vmul.f32 1.0, %v673
  %v675 = vrcp.pop %v672
  %v676 = vmul.f32 1.0, %v675
  %v677 = vmul.f32 %v660, %v527
  %v678 = vmul.f32 %v662, %v528
  %v679 = vmul.f32 %v648, %v663
  %v680 = vmul.f32 %v650, %v664
  %v681 = vadd.f32 %v677, %v679
  %v682 = vadd.f32 %v678, %v680
  %v683 = vtanh.pop %v681
  %v684 = vtanh.pop %v682
  %v685 = vmul.f32 %v674, %v683
  %v686 = vmul.f32 %v676, %v684
  %v687 = vpack.c.bf16 %v686, %v685
  %s688 = scalar_lea.vmem %s4, 16
  %689 = vst [vmem:[%s688] sm:$0xff] %v687
  %s690 = scalar_lea.vmem %s0, 192
  %v691 = vld [vmem:[%s690] sm:$0xff]
  %v692 = vld [vmem:[%s690 + $0x8] sm:$0xff]
  %v693 = vld [vmem:[%s690 + $0x10] sm:$0xff]
  %v694 = vld [vmem:[%s690 + $0x18] sm:$0xff]
  %v695 = vld [vmem:[%s690 + $0x20] sm:$0xff]
  %v696 = vld [vmem:[%s690 + $0x28] sm:$0xff]
  %v697 = vld [vmem:[%s690 + $0x30] sm:$0xff]
  %v698 = vld [vmem:[%s690 + $0x38] sm:$0xff]
  %699 = vmatprep.subr.bf16.mxu0 %v175
  %700 = vmatpush1.bf16.msra.mxu0 %v174
  %701 = vmatprep.subr.bf16.mxu0 %v179
  %702 = vmatpush1.bf16.msra.mxu0 %v178
  %703 = vmatprep.subr.bf16.mxu0 %v183
  %704 = vmatpush1.bf16.msra.mxu0 %v182
  %705 = vmatprep.subr.bf16.mxu0 %v187
  %706 = vmatpush1.bf16.msra.mxu0 %v186
  %707 = vmatprep.subr.bf16.mxu0 %v191
  %708 = vmatpush1.bf16.msra.mxu0 %v190
  %709 = vmatprep.subr.bf16.mxu0 %v195
  %710 = vmatpush1.bf16.msra.mxu0 %v194
  %711 = vmatprep.subr.bf16.mxu0 %v199
  %712 = vmatpush1.bf16.msra.mxu0 %v198
  %713 = vmatprep.subr.bf16.mxu0 %v203
  %714 = vmatpush1.bf16.msra.mxu0 %v202
  %715 = vmatprep.subr.bf16.mxu0 0
  %716 = vmatpush1.bf16.msra.mxu0 0
  %717 = vmatprep.subr.bf16.mxu0 0
  %718 = vmatpush1.bf16.msra.mxu0 0
  %719 = vmatprep.subr.bf16.mxu0 0
  %720 = vmatpush1.bf16.msra.mxu0 0
  %721 = vmatprep.subr.bf16.mxu0 0
  %722 = vmatpush1.bf16.msra.mxu0 0
  %723 = vmatprep.subr.bf16.mxu0 0
  %724 = vmatpush1.bf16.msra.mxu0 0
  %725 = vmatprep.subr.bf16.mxu0 0
  %726 = vmatpush1.bf16.msra.mxu0 0
  %727 = vmatprep.subr.bf16.mxu0 0
  %728 = vmatpush1.bf16.msra.mxu0 0
  %729 = vmatprep.subr.bf16.mxu0 0
  %730 = vmatpush1.bf16.msra.mxu0 0
  %731 = vmatprep.mubr.bf16.mxu0 0
  %732 = vmatmul.mubr.bf16.gmra.mrb[0].mxu0 %v687
  %v733 = vpop.f32.mrb[0].mxu0
  %v734 = vadd.f32 0.0, %v733
  %v735 = vpop.f32.mrb[0].mxu0
  %v736 = vadd.f32 0.0, %v735
  %v737 = vpop.f32.mrb[0].mxu0
  %v738 = vadd.f32 0.0, %v737
  %v739 = vpop.f32.mrb[0].mxu0
  %v740 = vadd.f32 0.0, %v739
  %741 = vdwg.mxu0
  %742 = vmatprep.subr.bf16.mxu0 %v177
  %743 = vmatpush1.bf16.msra.mxu0 %v176
  %744 = vmatprep.subr.bf16.mxu0 %v181
  %745 = vmatpush1.bf16.msra.mxu0 %v180
  %746 = vmatprep.subr.bf16.mxu0 %v185
  %747 = vmatpush1.bf16.msra.mxu0 %v184
  %748 = vmatprep.subr.bf16.mxu0 %v189
  %749 = vmatpush1.bf16.msra.mxu0 %v188
  %750 = vmatprep.subr.bf16.mxu0 %v193
  %751 = vmatpush1.bf16.msra.mxu0 %v192
  %752 = vmatprep.subr.bf16.mxu0 %v197
  %753 = vmatpush1.bf16.msra.mxu0 %v196
  %754 = vmatprep.subr.bf16.mxu0 %v201
  %755 = vmatpush1.bf16.msra.mxu0 %v200
  %756 = vmatprep.subr.bf16.mxu0 %v205
  %757 = vmatpush1.bf16.msra.mxu0 %v204
  %758 = vmatprep.subr.bf16.mxu0 0
  %759 = vmatpush1.bf16.msra.mxu0 0
  %760 = vmatprep.subr.bf16.mxu0 0
  %761 = vmatpush1.bf16.msra.mxu0 0
  %762 = vmatprep.subr.bf16.mxu0 0
  %763 = vmatpush1.bf16.msra.mxu0 0
  %764 = vmatprep.subr.bf16.mxu0 0
  %765 = vmatpush1.bf16.msra.mxu0 0
  %766 = vmatprep.subr.bf16.mxu0 0
  %767 = vmatpush1.bf16.msra.mxu0 0
  %768 = vmatprep.subr.bf16.mxu0 0
  %769 = vmatpush1.bf16.msra.mxu0 0
  %770 = vmatprep.subr.bf16.mxu0 0
  %771 = vmatpush1.bf16.msra.mxu0 0
  %772 = vmatprep.subr.bf16.mxu0 0
  %773 = vmatpush1.bf16.msra.mxu0 0
  %774 = vmatprep.mubr.bf16.mxu0 0
  %775 = vmatmul.mubr.bf16.gmra.mrb[0].mxu0 %v687
  %v776 = vpop.f32.mrb[0].mxu0
  %v777 = vadd.f32 0.0, %v776
  %v778 = vpop.f32.mrb[0].mxu0
  %v779 = vadd.f32 0.0, %v778
  %v780 = vpop.f32.mrb[0].mxu0
  %v781 = vadd.f32 0.0, %v780
  %v782 = vpop.f32.mrb[0].mxu0
  %v783 = vadd.f32 0.0, %v782
  %784 = vdwg.mxu0
  %v785 = vadd.f32 %v691, %v734
  %v786 = vadd.f32 %v692, %v736
  %v787 = vadd.f32 %v693, %v777
  %v788 = vadd.f32 %v694, %v779
  %v789 = vadd.f32 %v695, %v738
  %v790 = vadd.f32 %v696, %v740
  %v791 = vadd.f32 %v697, %v781
  %v792 = vadd.f32 %v698, %v783
  %v793 = vxor.u32 %v785, 2147483648
  %v794 = vxor.u32 %v789, 2147483648
  %v795 = vmul.f32 %v793, 1.442695
  %v796 = vpow.pop %v795
  %v797 = vmul.f32 %v794, 1.442695
  %v798 = vpow.pop %v797
  %v799 = vadd.f32 %v796, 1.0
  %v800 = vadd.f32 %v798, 1.0
  %v801 = vrcp.pop %v799
  %v802 = vmul.f32 1.0, %v801
  %v803 = vrcp.pop %v800
  %v804 = vmul.f32 1.0, %v803
  %v805 = vxor.u32 %v786, 2147483648
  %v806 = vxor.u32 %v790, 2147483648
  %v807 = vmul.f32 %v805, 1.442695
  %v808 = vpow.pop %v807
  %v809 = vmul.f32 %v806, 1.442695
  %v810 = vpow.pop %v809
  %v811 = vadd.f32 %v808, 1.0
  %v812 = vadd.f32 %v810, 1.0
  %v813 = vrcp.pop %v811
  %v814 = vmul.f32 1.0, %v813
  %v815 = vrcp.pop %v812
  %v816 = vmul.f32 1.0, %v815
  %v817 = vtanh.pop %v787
  %v818 = vtanh.pop %v791
  %v819 = vxor.u32 %v788, 2147483648
  %v820 = vxor.u32 %v792, 2147483648
  %v821 = vmul.f32 %v819, 1.442695
  %v822 = vpow.pop %v821
  %v823 = vmul.f32 %v820, 1.442695
  %v824 = vpow.pop %v823
  %v825 = vadd.f32 %v822, 1.0
  %v826 = vadd.f32 %v824, 1.0
  %v827 = vrcp.pop %v825
  %v828 = vmul.f32 1.0, %v827
  %v829 = vrcp.pop %v826
  %v830 = vmul.f32 1.0, %v829
  %v831 = vmul.f32 %v814, %v681
  %v832 = vmul.f32 %v816, %v682
  %v833 = vmul.f32 %v802, %v817
  %v834 = vmul.f32 %v804, %v818
  %v835 = vadd.f32 %v831, %v833
  %v836 = vadd.f32 %v832, %v834
  %v837 = vtanh.pop %v835
  %v838 = vtanh.pop %v836
  %v839 = vmul.f32 %v828, %v837
  %v840 = vmul.f32 %v830, %v838
  %v841 = vpack.c.bf16 %v840, %v839
  %s842 = scalar_lea.vmem %s4, 24
  %843 = vst [vmem:[%s842] sm:$0xff] %v841
  %s844 = scalar_lea.vmem %s0, 256
  %v845 = vld [vmem:[%s844] sm:$0xff]
  %v846 = vld [vmem:[%s844 + $0x8] sm:$0xff]
  %v847 = vld [vmem:[%s844 + $0x10] sm:$0xff]
  %v848 = vld [vmem:[%s844 + $0x18] sm:$0xff]
  %v849 = vld [vmem:[%s844 + $0x20] sm:$0xff]
  %v850 = vld [vmem:[%s844 + $0x28] sm:$0xff]
  %v851 = vld [vmem:[%s844 + $0x30] sm:$0xff]
  %v852 = vld [vmem:[%s844 + $0x38] sm:$0xff]
  %853 = vmatprep.subr.bf16.mxu0 %v175
  %854 = vmatpush1.bf16.msra.mxu0 %v174
  %855 = vmatprep.subr.bf16.mxu0 %v179
  %856 = vmatpush1.bf16.msra.mxu0 %v178
  %857 = vmatprep.subr.bf16.mxu0 %v183
  %858 = vmatpush1.bf16.msra.mxu0 %v182
  %859 = vmatprep.subr.bf16.mxu0 %v187
  %860 = vmatpush1.bf16.msra.mxu0 %v186
  %861 = vmatprep.subr.bf16.mxu0 %v191
  %862 = vmatpush1.bf16.msra.mxu0 %v190
  %863 = vmatprep.subr.bf16.mxu0 %v195
  %864 = vmatpush1.bf16.msra.mxu0 %v194
  %865 = vmatprep.subr.bf16.mxu0 %v199
  %866 = vmatpush1.bf16.msra.mxu0 %v198
  %867 = vmatprep.subr.bf16.mxu0 %v203
  %868 = vmatpush1.bf16.msra.mxu0 %v202
  %869 = vmatprep.subr.bf16.mxu0 0
  %870 = vmatpush1.bf16.msra.mxu0 0
  %871 = vmatprep.subr.bf16.mxu0 0
  %872 = vmatpush1.bf16.msra.mxu0 0
  %873 = vmatprep.subr.bf16.mxu0 0
  %874 = vmatpush1.bf16.msra.mxu0 0
  %875 = vmatprep.subr.bf16.mxu0 0
  %876 = vmatpush1.bf16.msra.mxu0 0
  %877 = vmatprep.subr.bf16.mxu0 0
  %878 = vmatpush1.bf16.msra.mxu0 0
  %879 = vmatprep.subr.bf16.mxu0 0
  %880 = vmatpush1.bf16.msra.mxu0 0
  %881 = vmatprep.subr.bf16.mxu0 0
  %882 = vmatpush1.bf16.msra.mxu0 0
  %883 = vmatprep.subr.bf16.mxu0 0
  %884 = vmatpush1.bf16.msra.mxu0 0
  %885 = vmatprep.mubr.bf16.mxu0 0
  %886 = vmatmul.mubr.bf16.gmra.mrb[0].mxu0 %v841
  %v887 = vpop.f32.mrb[0].mxu0
  %v888 = vadd.f32 0.0, %v887
  %v889 = vpop.f32.mrb[0].mxu0
  %v890 = vadd.f32 0.0, %v889
  %v891 = vpop.f32.mrb[0].mxu0
  %v892 = vadd.f32 0.0, %v891
  %v893 = vpop.f32.mrb[0].mxu0
  %v894 = vadd.f32 0.0, %v893
  %895 = vdwg.mxu0
  %896 = vmatprep.subr.bf16.mxu0 %v177
  %897 = vmatpush1.bf16.msra.mxu0 %v176
  %898 = vmatprep.subr.bf16.mxu0 %v181
  %899 = vmatpush1.bf16.msra.mxu0 %v180
  %900 = vmatprep.subr.bf16.mxu0 %v185
  %901 = vmatpush1.bf16.msra.mxu0 %v184
  %902 = vmatprep.subr.bf16.mxu0 %v189
  %903 = vmatpush1.bf16.msra.mxu0 %v188
  %904 = vmatprep.subr.bf16.mxu0 %v193
  %905 = vmatpush1.bf16.msra.mxu0 %v192
  %906 = vmatprep.subr.bf16.mxu0 %v197
  %907 = vmatpush1.bf16.msra.mxu0 %v196
  %908 = vmatprep.subr.bf16.mxu0 %v201
  %909 = vmatpush1.bf16.msra.mxu0 %v200
  %910 = vmatprep.subr.bf16.mxu0 %v205
  %911 = vmatpush1.bf16.msra.mxu0 %v204
  %912 = vmatprep.subr.bf16.mxu0 0
  %913 = vmatpush1.bf16.msra.mxu0 0
  %914 = vmatprep.subr.bf16.mxu0 0
  %915 = vmatpush1.bf16.msra.mxu0 0
  %916 = vmatprep.subr.bf16.mxu0 0
  %917 = vmatpush1.bf16.msra.mxu0 0
  %918 = vmatprep.subr.bf16.mxu0 0
  %919 = vmatpush1.bf16.msra.mxu0 0
  %920 = vmatprep.subr.bf16.mxu0 0
  %921 = vmatpush1.bf16.msra.mxu0 0
  %922 = vmatprep.subr.bf16.mxu0 0
  %923 = vmatpush1.bf16.msra.mxu0 0
  %924 = vmatprep.subr.bf16.mxu0 0
  %925 = vmatpush1.bf16.msra.mxu0 0
  %926 = vmatprep.subr.bf16.mxu0 0
  %927 = vmatpush1.bf16.msra.mxu0 0
  %928 = vmatprep.mubr.bf16.mxu0 0
  %929 = vmatmul.mubr.bf16.gmra.mrb[0].mxu0 %v841
  %v930 = vpop.f32.mrb[0].mxu0
  %v931 = vadd.f32 0.0, %v930
  %v932 = vpop.f32.mrb[0].mxu0
  %v933 = vadd.f32 0.0, %v932
  %v934 = vpop.f32.mrb[0].mxu0
  %v935 = vadd.f32 0.0, %v934
  %v936 = vpop.f32.mrb[0].mxu0
  %v937 = vadd.f32 0.0, %v936
  %938 = vdwg.mxu0
  %v939 = vadd.f32 %v845, %v888
  %v940 = vadd.f32 %v846, %v890
  %v941 = vadd.f32 %v847, %v931
  %v942 = vadd.f32 %v848, %v933
  %v943 = vadd.f32 %v849, %v892
  %v944 = vadd.f32 %v850, %v894
  %v945 = vadd.f32 %v851, %v935
  %v946 = vadd.f32 %v852, %v937
  %v947 = vxor.u32 %v939, 2147483648
  %v948 = vxor.u32 %v943, 2147483648
  %v949 = vmul.f32 %v947, 1.442695
  %v950 = vpow.pop %v949
  %v951 = vmul.f32 %v948, 1.442695
  %v952 = vpow.pop %v951
  %v953 = vadd.f32 %v950, 1.0
  %v954 = vadd.f32 %v952, 1.0
  %v955 = vrcp.pop %v953
  %v956 = vmul.f32 1.0, %v955
  %v957 = vrcp.pop %v954
  %v958 = vmul.f32 1.0, %v957
  %v959 = vxor.u32 %v940, 2147483648
  %v960 = vxor.u32 %v944, 2147483648
  %v961 = vmul.f32 %v959, 1.442695
  %v962 = vpow.pop %v961
  %v963 = vmul.f32 %v960, 1.442695
  %v964 = vpow.pop %v963
  %v965 = vadd.f32 %v962, 1.0
  %v966 = vadd.f32 %v964, 1.0
  %v967 = vrcp.pop %v965
  %v968 = vmul.f32 1.0, %v967
  %v969 = vrcp.pop %v966
  %v970 = vmul.f32 1.0, %v969
  %v971 = vtanh.pop %v941
  %v972 = vtanh.pop %v945
  %v973 = vxor.u32 %v942, 2147483648
  %v974 = vxor.u32 %v946, 2147483648
  %v975 = vmul.f32 %v973, 1.442695
  %v976 = vpow.pop %v975
  %v977 = vmul.f32 %v974, 1.442695
  %v978 = vpow.pop %v977
  %v979 = vadd.f32 %v976, 1.0
  %v980 = vadd.f32 %v978, 1.0
  %v981 = vrcp.pop %v979
  %v982 = vmul.f32 1.0, %v981
  %v983 = vrcp.pop %v980
  %v984 = vmul.f32 1.0, %v983
  %v985 = vmul.f32 %v968, %v835
  %v986 = vmul.f32 %v970, %v836
  %v987 = vmul.f32 %v956, %v971
  %v988 = vmul.f32 %v958, %v972
  %v989 = vadd.f32 %v985, %v987
  %v990 = vadd.f32 %v986, %v988
  %v991 = vtanh.pop %v989
  %v992 = vtanh.pop %v990
  %v993 = vmul.f32 %v982, %v991
  %v994 = vmul.f32 %v984, %v992
  %v995 = vpack.c.bf16 %v994, %v993
  %s996 = scalar_lea.vmem %s4, 32
  %997 = vst [vmem:[%s996] sm:$0xff] %v995
  %s998 = scalar_lea.vmem %s0, 320
  %v999 = vld [vmem:[%s998] sm:$0xff]
  %v1000 = vld [vmem:[%s998 + $0x8] sm:$0xff]
  %v1001 = vld [vmem:[%s998 + $0x10] sm:$0xff]
  %v1002 = vld [vmem:[%s998 + $0x18] sm:$0xff]
  %v1003 = vld [vmem:[%s998 + $0x20] sm:$0xff]
  %v1004 = vld [vmem:[%s998 + $0x28] sm:$0xff]
  %v1005 = vld [vmem:[%s998 + $0x30] sm:$0xff]
  %v1006 = vld [vmem:[%s998 + $0x38] sm:$0xff]
  %1007 = vmatprep.subr.bf16.mxu0 %v175
  %1008 = vmatpush1.bf16.msra.mxu0 %v174
  %1009 = vmatprep.subr.bf16.mxu0 %v179
  %1010 = vmatpush1.bf16.msra.mxu0 %v178
  %1011 = vmatprep.subr.bf16.mxu0 %v183
  %1012 = vmatpush1.bf16.msra.mxu0 %v182
  %1013 = vmatprep.subr.bf16.mxu0 %v187
  %1014 = vmatpush1.bf16.msra.mxu0 %v186
  %1015 = vmatprep.subr.bf16.mxu0 %v191
  %1016 = vmatpush1.bf16.msra.mxu0 %v190
  %1017 = vmatprep.subr.bf16.mxu0 %v195
  %1018 = vmatpush1.bf16.msra.mxu0 %v194
  %1019 = vmatprep.subr.bf16.mxu0 %v199
  %1020 = vmatpush1.bf16.msra.mxu0 %v198
  %1021 = vmatprep.subr.bf16.mxu0 %v203
  %1022 = vmatpush1.bf16.msra.mxu0 %v202
  %1023 = vmatprep.subr.bf16.mxu0 0
  %1024 = vmatpush1.bf16.msra.mxu0 0
  %1025 = vmatprep.subr.bf16.mxu0 0
  %1026 = vmatpush1.bf16.msra.mxu0 0
  %1027 = vmatprep.subr.bf16.mxu0 0
  %1028 = vmatpush1.bf16.msra.mxu0 0
  %1029 = vmatprep.subr.bf16.mxu0 0
  %1030 = vmatpush1.bf16.msra.mxu0 0
  %1031 = vmatprep.subr.bf16.mxu0 0
  %1032 = vmatpush1.bf16.msra.mxu0 0
  %1033 = vmatprep.subr.bf16.mxu0 0
  %1034 = vmatpush1.bf16.msra.mxu0 0
  %1035 = vmatprep.subr.bf16.mxu0 0
  %1036 = vmatpush1.bf16.msra.mxu0 0
  %1037 = vmatprep.subr.bf16.mxu0 0
  %1038 = vmatpush1.bf16.msra.mxu0 0
  %1039 = vmatprep.mubr.bf16.mxu0 0
  %1040 = vmatmul.mubr.bf16.gmra.mrb[0].mxu0 %v995
  %v1041 = vpop.f32.mrb[0].mxu0
  %v1042 = vadd.f32 0.0, %v1041
  %v1043 = vpop.f32.mrb[0].mxu0
  %v1044 = vadd.f32 0.0, %v1043
  %v1045 = vpop.f32.mrb[0].mxu0
  %v1046 = vadd.f32 0.0, %v1045
  %v1047 = vpop.f32.mrb[0].mxu0
  %v1048 = vadd.f32 0.0, %v1047
  %1049 = vdwg.mxu0
  %1050 = vmatprep.subr.bf16.mxu0 %v177
  %1051 = vmatpush1.bf16.msra.mxu0 %v176
  %1052 = vmatprep.subr.bf16.mxu0 %v181
  %1053 = vmatpush1.bf16.msra.mxu0 %v180
  %1054 = vmatprep.subr.bf16.mxu0 %v185
  %1055 = vmatpush1.bf16.msra.mxu0 %v184
  %1056 = vmatprep.subr.bf16.mxu0 %v189
  %1057 = vmatpush1.bf16.msra.mxu0 %v188
  %1058 = vmatprep.subr.bf16.mxu0 %v193
  %1059 = vmatpush1.bf16.msra.mxu0 %v192
  %1060 = vmatprep.subr.bf16.mxu0 %v197
  %1061 = vmatpush1.bf16.msra.mxu0 %v196
  %1062 = vmatprep.subr.bf16.mxu0 %v201
  %1063 = vmatpush1.bf16.msra.mxu0 %v200
  %1064 = vmatprep.subr.bf16.mxu0 %v205
  %1065 = vmatpush1.bf16.msra.mxu0 %v204
  %1066 = vmatprep.subr.bf16.mxu0 0
  %1067 = vmatpush1.bf16.msra.mxu0 0
  %1068 = vmatprep.subr.bf16.mxu0 0
  %1069 = vmatpush1.bf16.msra.mxu0 0
  %1070 = vmatprep.subr.bf16.mxu0 0
  %1071 = vmatpush1.bf16.msra.mxu0 0
  %1072 = vmatprep.subr.bf16.mxu0 0
  %1073 = vmatpush1.bf16.msra.mxu0 0
  %1074 = vmatprep.subr.bf16.mxu0 0
  %1075 = vmatpush1.bf16.msra.mxu0 0
  %1076 = vmatprep.subr.bf16.mxu0 0
  %1077 = vmatpush1.bf16.msra.mxu0 0
  %1078 = vmatprep.subr.bf16.mxu0 0
  %1079 = vmatpush1.bf16.msra.mxu0 0
  %1080 = vmatprep.subr.bf16.mxu0 0
  %1081 = vmatpush1.bf16.msra.mxu0 0
  %1082 = vmatprep.mubr.bf16.mxu0 0
  %1083 = vmatmul.mubr.bf16.gmra.mrb[0].mxu0 %v995
  %v1084 = vpop.f32.mrb[0].mxu0
  %v1085 = vadd.f32 0.0, %v1084
  %v1086 = vpop.f32.mrb[0].mxu0
  %v1087 = vadd.f32 0.0, %v1086
  %v1088 = vpop.f32.mrb[0].mxu0
  %v1089 = vadd.f32 0.0, %v1088
  %v1090 = vpop.f32.mrb[0].mxu0
  %v1091 = vadd.f32 0.0, %v1090
  %1092 = vdwg.mxu0
  %v1093 = vadd.f32 %v999, %v1042
  %v1094 = vadd.f32 %v1000, %v1044
  %v1095 = vadd.f32 %v1001, %v1085
  %v1096 = vadd.f32 %v1002, %v1087
  %v1097 = vadd.f32 %v1003, %v1046
  %v1098 = vadd.f32 %v1004, %v1048
  %v1099 = vadd.f32 %v1005, %v1089
  %v1100 = vadd.f32 %v1006, %v1091
  %v1101 = vxor.u32 %v1093, 2147483648
  %v1102 = vxor.u32 %v1097, 2147483648
  %v1103 = vmul.f32 %v1101, 1.442695
  %v1104 = vpow.pop %v1103
  %v1105 = vmul.f32 %v1102, 1.442695
  %v1106 = vpow.pop %v1105
  %v1107 = vadd.f32 %v1104, 1.0
  %v1108 = vadd.f32 %v1106, 1.0
  %v1109 = vrcp.pop %v1107
  %v1110 = vmul.f32 1.0, %v1109
  %v1111 = vrcp.pop %v1108
  %v1112 = vmul.f32 1.0, %v1111
  %v1113 = vxor.u32 %v1094, 2147483648
  %v1114 = vxor.u32 %v1098, 2147483648
  %v1115 = vmul.f32 %v1113, 1.442695
  %v1116 = vpow.pop %v1115
  %v1117 = vmul.f32 %v1114, 1.442695
  %v1118 = vpow.pop %v1117
  %v1119 = vadd.f32 %v1116, 1.0
  %v1120 = vadd.f32 %v1118, 1.0
  %v1121 = vrcp.pop %v1119
  %v1122 = vmul.f32 1.0, %v1121
  %v1123 = vrcp.pop %v1120
  %v1124 = vmul.f32 1.0, %v1123
  %v1125 = vtanh.pop %v1095
  %v1126 = vtanh.pop %v1099
  %v1127 = vxor.u32 %v1096, 2147483648
  %v1128 = vxor.u32 %v1100, 2147483648
  %v1129 = vmul.f32 %v1127, 1.442695
  %v1130 = vpow.pop %v1129
  %v1131 = vmul.f32 %v1128, 1.442695
  %v1132 = vpow.pop %v1131
  %v1133 = vadd.f32 %v1130, 1.0
  %v1134 = vadd.f32 %v1132, 1.0
  %v1135 = vrcp.pop %v1133
  %v1136 = vmul.f32 1.0, %v1135
  %v1137 = vrcp.pop %v1134
  %v1138 = vmul.f32 1.0, %v1137
  %v1139 = vmul.f32 %v1122, %v989
  %v1140 = vmul.f32 %v1124, %v990
  %v1141 = vmul.f32 %v1110, %v1125
  %v1142 = vmul.f32 %v1112, %v1126
  %v1143 = vadd.f32 %v1139, %v1141
  %v1144 = vadd.f32 %v1140, %v1142
  %v1145 = vtanh.pop %v1143
  %v1146 = vtanh.pop %v1144
  %v1147 = vmul.f32 %v1136, %v1145
  %v1148 = vmul.f32 %v1138, %v1146
  %v1149 = vpack.c.bf16 %v1148, %v1147
  %s1150 = scalar_lea.vmem %s4, 40
  %1151 = vst [vmem:[%s1150] sm:$0xff] %v1149
  %s1152 = scalar_lea.vmem %s0, 384
  %v1153 = vld [vmem:[%s1152] sm:$0xff]
  %v1154 = vld [vmem:[%s1152 + $0x8] sm:$0xff]
  %v1155 = vld [vmem:[%s1152 + $0x10] sm:$0xff]
  %v1156 = vld [vmem:[%s1152 + $0x18] sm:$0xff]
  %v1157 = vld [vmem:[%s1152 + $0x20] sm:$0xff]
  %v1158 = vld [vmem:[%s1152 + $0x28] sm:$0xff]
  %v1159 = vld [vmem:[%s1152 + $0x30] sm:$0xff]
  %v1160 = vld [vmem:[%s1152 + $0x38] sm:$0xff]
  %1161 = vmatprep.subr.bf16.mxu0 %v175
  %1162 = vmatpush1.bf16.msra.mxu0 %v174
  %1163 = vmatprep.subr.bf16.mxu0 %v179
  %1164 = vmatpush1.bf16.msra.mxu0 %v178
  %1165 = vmatprep.subr.bf16.mxu0 %v183
  %1166 = vmatpush1.bf16.msra.mxu0 %v182
  %1167 = vmatprep.subr.bf16.mxu0 %v187
  %1168 = vmatpush1.bf16.msra.mxu0 %v186
  %1169 = vmatprep.subr.bf16.mxu0 %v191
  %1170 = vmatpush1.bf16.msra.mxu0 %v190
  %1171 = vmatprep.subr.bf16.mxu0 %v195
  %1172 = vmatpush1.bf16.msra.mxu0 %v194
  %1173 = vmatprep.subr.bf16.mxu0 %v199
  %1174 = vmatpush1.bf16.msra.mxu0 %v198
  %1175 = vmatprep.subr.bf16.mxu0 %v203
  %1176 = vmatpush1.bf16.msra.mxu0 %v202
  %1177 = vmatprep.subr.bf16.mxu0 0
  %1178 = vmatpush1.bf16.msra.mxu0 0
  %1179 = vmatprep.subr.bf16.mxu0 0
  %1180 = vmatpush1.bf16.msra.mxu0 0
  %1181 = vmatprep.subr.bf16.mxu0 0
  %1182 = vmatpush1.bf16.msra.mxu0 0
  %1183 = vmatprep.subr.bf16.mxu0 0
  %1184 = vmatpush1.bf16.msra.mxu0 0
  %1185 = vmatprep.subr.bf16.mxu0 0
  %1186 = vmatpush1.bf16.msra.mxu0 0
  %1187 = vmatprep.subr.bf16.mxu0 0
  %1188 = vmatpush1.bf16.msra.mxu0 0
  %1189 = vmatprep.subr.bf16.mxu0 0
  %1190 = vmatpush1.bf16.msra.mxu0 0
  %1191 = vmatprep.subr.bf16.mxu0 0
  %1192 = vmatpush1.bf16.msra.mxu0 0
  %1193 = vmatprep.mubr.bf16.mxu0 0
  %1194 = vmatmul.mubr.bf16.gmra.mrb[0].mxu0 %v1149
  %v1195 = vpop.f32.mrb[0].mxu0
  %v1196 = vadd.f32 0.0, %v1195
  %v1197 = vpop.f32.mrb[0].mxu0
  %v1198 = vadd.f32 0.0, %v1197
  %v1199 = vpop.f32.mrb[0].mxu0
  %v1200 = vadd.f32 0.0, %v1199
  %v1201 = vpop.f32.mrb[0].mxu0
  %v1202 = vadd.f32 0.0, %v1201
  %1203 = vdwg.mxu0
  %1204 = vmatprep.subr.bf16.mxu0 %v177
  %1205 = vmatpush1.bf16.msra.mxu0 %v176
  %1206 = vmatprep.subr.bf16.mxu0 %v181
  %1207 = vmatpush1.bf16.msra.mxu0 %v180
  %1208 = vmatprep.subr.bf16.mxu0 %v185
  %1209 = vmatpush1.bf16.msra.mxu0 %v184
  %1210 = vmatprep.subr.bf16.mxu0 %v189
  %1211 = vmatpush1.bf16.msra.mxu0 %v188
  %1212 = vmatprep.subr.bf16.mxu0 %v193
  %1213 = vmatpush1.bf16.msra.mxu0 %v192
  %1214 = vmatprep.subr.bf16.mxu0 %v197
  %1215 = vmatpush1.bf16.msra.mxu0 %v196
  %1216 = vmatprep.subr.bf16.mxu0 %v201
  %1217 = vmatpush1.bf16.msra.mxu0 %v200
  %1218 = vmatprep.subr.bf16.mxu0 %v205
  %1219 = vmatpush1.bf16.msra.mxu0 %v204
  %1220 = vmatprep.subr.bf16.mxu0 0
  %1221 = vmatpush1.bf16.msra.mxu0 0
  %1222 = vmatprep.subr.bf16.mxu0 0
  %1223 = vmatpush1.bf16.msra.mxu0 0
  %1224 = vmatprep.subr.bf16.mxu0 0
  %1225 = vmatpush1.bf16.msra.mxu0 0
  %1226 = vmatprep.subr.bf16.mxu0 0
  %1227 = vmatpush1.bf16.msra.mxu0 0
  %1228 = vmatprep.subr.bf16.mxu0 0
  %1229 = vmatpush1.bf16.msra.mxu0 0
  %1230 = vmatprep.subr.bf16.mxu0 0
  %1231 = vmatpush1.bf16.msra.mxu0 0
  %1232 = vmatprep.subr.bf16.mxu0 0
  %1233 = vmatpush1.bf16.msra.mxu0 0
  %1234 = vmatprep.subr.bf16.mxu0 0
  %1235 = vmatpush1.bf16.msra.mxu0 0
  %1236 = vmatprep.mubr.bf16.mxu0 0
  %1237 = vmatmul.mubr.bf16.gmra.mrb[0].mxu0 %v1149
  %v1238 = vpop.f32.mrb[0].mxu0
  %v1239 = vadd.f32 0.0, %v1238
  %v1240 = vpop.f32.mrb[0].mxu0
  %v1241 = vadd.f32 0.0, %v1240
  %v1242 = vpop.f32.mrb[0].mxu0
  %v1243 = vadd.f32 0.0, %v1242
  %v1244 = vpop.f32.mrb[0].mxu0
  %v1245 = vadd.f32 0.0, %v1244
  %1246 = vdwg.mxu0
  %v1247 = vadd.f32 %v1153, %v1196
  %v1248 = vadd.f32 %v1154, %v1198
  %v1249 = vadd.f32 %v1155, %v1239
  %v1250 = vadd.f32 %v1156, %v1241
  %v1251 = vadd.f32 %v1157, %v1200
  %v1252 = vadd.f32 %v1158, %v1202
  %v1253 = vadd.f32 %v1159, %v1243
  %v1254 = vadd.f32 %v1160, %v1245
  %v1255 = vxor.u32 %v1247, 2147483648
  %v1256 = vxor.u32 %v1251, 2147483648
  %v1257 = vmul.f32 %v1255, 1.442695
  %v1258 = vpow.pop %v1257
  %v1259 = vmul.f32 %v1256, 1.442695
  %v1260 = vpow.pop %v1259
  %v1261 = vadd.f32 %v1258, 1.0
  %v1262 = vadd.f32 %v1260, 1.0
  %v1263 = vrcp.pop %v1261
  %v1264 = vmul.f32 1.0, %v1263
  %v1265 = vrcp.pop %v1262
  %v1266 = vmul.f32 1.0, %v1265
  %v1267 = vxor.u32 %v1248, 2147483648
  %v1268 = vxor.u32 %v1252, 2147483648
  %v1269 = vmul.f32 %v1267, 1.442695
  %v1270 = vpow.pop %v1269
  %v1271 = vmul.f32 %v1268, 1.442695
  %v1272 = vpow.pop %v1271
  %v1273 = vadd.f32 %v1270, 1.0
  %v1274 = vadd.f32 %v1272, 1.0
  %v1275 = vrcp.pop %v1273
  %v1276 = vmul.f32 1.0, %v1275
  %v1277 = vrcp.pop %v1274
  %v1278 = vmul.f32 1.0, %v1277
  %v1279 = vtanh.pop %v1249
  %v1280 = vtanh.pop %v1253
  %v1281 = vxor.u32 %v1250, 2147483648
  %v1282 = vxor.u32 %v1254, 2147483648
  %v1283 = vmul.f32 %v1281, 1.442695
  %v1284 = vpow.pop %v1283
  %v1285 = vmul.f32 %v1282, 1.442695
  %v1286 = vpow.pop %v1285
  %v1287 = vadd.f32 %v1284, 1.0
  %v1288 = vadd.f32 %v1286, 1.0
  %v1289 = vrcp.pop %v1287
  %v1290 = vmul.f32 1.0, %v1289
  %v1291 = vrcp.pop %v1288
  %v1292 = vmul.f32 1.0, %v1291
  %v1293 = vmul.f32 %v1276, %v1143
  %v1294 = vmul.f32 %v1278, %v1144
  %v1295 = vmul.f32 %v1264, %v1279
  %v1296 = vmul.f32 %v1266, %v1280
  %v1297 = vadd.f32 %v1293, %v1295
  %v1298 = vadd.f32 %v1294, %v1296
  %v1299 = vtanh.pop %v1297
  %v1300 = vtanh.pop %v1298
  %v1301 = vmul.f32 %v1290, %v1299
  %v1302 = vmul.f32 %v1292, %v1300
  %v1303 = vpack.c.bf16 %v1302, %v1301
  %s1304 = scalar_lea.vmem %s4, 48
  %1305 = vst [vmem:[%s1304] sm:$0xff] %v1303
  %s1306 = scalar_lea.vmem %s0, 448
  %v1307 = vld [vmem:[%s1306] sm:$0xff]
  %v1308 = vld [vmem:[%s1306 + $0x8] sm:$0xff]
  %v1309 = vld [vmem:[%s1306 + $0x10] sm:$0xff]
  %v1310 = vld [vmem:[%s1306 + $0x18] sm:$0xff]
  %v1311 = vld [vmem:[%s1306 + $0x20] sm:$0xff]
  %v1312 = vld [vmem:[%s1306 + $0x28] sm:$0xff]
  %v1313 = vld [vmem:[%s1306 + $0x30] sm:$0xff]
  %v1314 = vld [vmem:[%s1306 + $0x38] sm:$0xff]
  %1315 = vmatprep.subr.bf16.mxu0 %v175
  %1316 = vmatpush1.bf16.msra.mxu0 %v174
  %1317 = vmatprep.subr.bf16.mxu0 %v179
  %1318 = vmatpush1.bf16.msra.mxu0 %v178
  %1319 = vmatprep.subr.bf16.mxu0 %v183
  %1320 = vmatpush1.bf16.msra.mxu0 %v182
  %1321 = vmatprep.subr.bf16.mxu0 %v187
  %1322 = vmatpush1.bf16.msra.mxu0 %v186
  %1323 = vmatprep.subr.bf16.mxu0 %v191
  %1324 = vmatpush1.bf16.msra.mxu0 %v190
  %1325 = vmatprep.subr.bf16.mxu0 %v195
  %1326 = vmatpush1.bf16.msra.mxu0 %v194
  %1327 = vmatprep.subr.bf16.mxu0 %v199
  %1328 = vmatpush1.bf16.msra.mxu0 %v198
  %1329 = vmatprep.subr.bf16.mxu0 %v203
  %1330 = vmatpush1.bf16.msra.mxu0 %v202
  %1331 = vmatprep.subr.bf16.mxu0 0
  %1332 = vmatpush1.bf16.msra.mxu0 0
  %1333 = vmatprep.subr.bf16.mxu0 0
  %1334 = vmatpush1.bf16.msra.mxu0 0
  %1335 = vmatprep.subr.bf16.mxu0 0
  %1336 = vmatpush1.bf16.msra.mxu0 0
  %1337 = vmatprep.subr.bf16.mxu0 0
  %1338 = vmatpush1.bf16.msra.mxu0 0
  %1339 = vmatprep.subr.bf16.mxu0 0
  %1340 = vmatpush1.bf16.msra.mxu0 0
  %1341 = vmatprep.subr.bf16.mxu0 0
  %1342 = vmatpush1.bf16.msra.mxu0 0
  %1343 = vmatprep.subr.bf16.mxu0 0
  %1344 = vmatpush1.bf16.msra.mxu0 0
  %1345 = vmatprep.subr.bf16.mxu0 0
  %1346 = vmatpush1.bf16.msra.mxu0 0
  %1347 = vmatprep.mubr.bf16.mxu0 0
  %1348 = vmatmul.mubr.bf16.gmra.mrb[0].mxu0 %v1303
  %v1349 = vpop.f32.mrb[0].mxu0
  %v1350 = vadd.f32 0.0, %v1349
  %v1351 = vpop.f32.mrb[0].mxu0
  %v1352 = vadd.f32 0.0, %v1351
  %v1353 = vpop.f32.mrb[0].mxu0
  %v1354 = vadd.f32 0.0, %v1353
  %v1355 = vpop.f32.mrb[0].mxu0
  %v1356 = vadd.f32 0.0, %v1355
  %1357 = vdwg.mxu0
  %1358 = vmatprep.subr.bf16.mxu0 %v177
  %1359 = vmatpush1.bf16.msra.mxu0 %v176
  %1360 = vmatprep.subr.bf16.mxu0 %v181
  %1361 = vmatpush1.bf16.msra.mxu0 %v180
  %1362 = vmatprep.subr.bf16.mxu0 %v185
  %1363 = vmatpush1.bf16.msra.mxu0 %v184
  %1364 = vmatprep.subr.bf16.mxu0 %v189
  %1365 = vmatpush1.bf16.msra.mxu0 %v188
  %1366 = vmatprep.subr.bf16.mxu0 %v193
  %1367 = vmatpush1.bf16.msra.mxu0 %v192
  %1368 = vmatprep.subr.bf16.mxu0 %v197
  %1369 = vmatpush1.bf16.msra.mxu0 %v196
  %1370 = vmatprep.subr.bf16.mxu0 %v201
  %1371 = vmatpush1.bf16.msra.mxu0 %v200
  %1372 = vmatprep.subr.bf16.mxu0 %v205
  %1373 = vmatpush1.bf16.msra.mxu0 %v204
  %1374 = vmatprep.subr.bf16.mxu0 0
  %1375 = vmatpush1.bf16.msra.mxu0 0
  %1376 = vmatprep.subr.bf16.mxu0 0
  %1377 = vmatpush1.bf16.msra.mxu0 0
  %1378 = vmatprep.subr.bf16.mxu0 0
  %1379 = vmatpush1.bf16.msra.mxu0 0
  %1380 = vmatprep.subr.bf16.mxu0 0
  %1381 = vmatpush1.bf16.msra.mxu0 0
  %1382 = vmatprep.subr.bf16.mxu0 0
  %1383 = vmatpush1.bf16.msra.mxu0 0
  %1384 = vmatprep.subr.bf16.mxu0 0
  %1385 = vmatpush1.bf16.msra.mxu0 0
  %1386 = vmatprep.subr.bf16.mxu0 0
  %1387 = vmatpush1.bf16.msra.mxu0 0
  %1388 = vmatprep.subr.bf16.mxu0 0
  %1389 = vmatpush1.bf16.msra.mxu0 0
  %1390 = vmatprep.mubr.bf16.mxu0 0
  %1391 = vmatmul.mubr.bf16.gmra.mrb[0].mxu0 %v1303
  %v1392 = vpop.f32.mrb[0].mxu0
  %v1393 = vadd.f32 0.0, %v1392
  %v1394 = vpop.f32.mrb[0].mxu0
  %v1395 = vadd.f32 0.0, %v1394
  %v1396 = vpop.f32.mrb[0].mxu0
  %v1397 = vadd.f32 0.0, %v1396
  %v1398 = vpop.f32.mrb[0].mxu0
  %v1399 = vadd.f32 0.0, %v1398
  %1400 = vdwg.mxu0
  %v1401 = vadd.f32 %v1307, %v1350
  %v1402 = vadd.f32 %v1308, %v1352
  %v1403 = vadd.f32 %v1309, %v1393
  %v1404 = vadd.f32 %v1310, %v1395
  %v1405 = vadd.f32 %v1311, %v1354
  %v1406 = vadd.f32 %v1312, %v1356
  %v1407 = vadd.f32 %v1313, %v1397
  %v1408 = vadd.f32 %v1314, %v1399
  %v1409 = vxor.u32 %v1401, 2147483648
  %v1410 = vxor.u32 %v1405, 2147483648
  %v1411 = vmul.f32 %v1409, 1.442695
  %v1412 = vpow.pop %v1411
  %v1413 = vmul.f32 %v1410, 1.442695
  %v1414 = vpow.pop %v1413
  %v1415 = vadd.f32 %v1412, 1.0
  %v1416 = vadd.f32 %v1414, 1.0
  %v1417 = vrcp.pop %v1415
  %v1418 = vmul.f32 1.0, %v1417
  %v1419 = vrcp.pop %v1416
  %v1420 = vmul.f32 1.0, %v1419
  %v1421 = vxor.u32 %v1402, 2147483648
  %v1422 = vxor.u32 %v1406, 2147483648
  %v1423 = vmul.f32 %v1421, 1.442695
  %v1424 = vpow.pop %v1423
  %v1425 = vmul.f32 %v1422, 1.442695
  %v1426 = vpow.pop %v1425
  %v1427 = vadd.f32 %v1424, 1.0
  %v1428 = vadd.f32 %v1426, 1.0
  %v1429 = vrcp.pop %v1427
  %v1430 = vmul.f32 1.0, %v1429
  %v1431 = vrcp.pop %v1428
  %v1432 = vmul.f32 1.0, %v1431
  %v1433 = vtanh.pop %v1403
  %v1434 = vtanh.pop %v1407
  %v1435 = vxor.u32 %v1404, 2147483648
  %v1436 = vxor.u32 %v1408, 2147483648
  %v1437 = vmul.f32 %v1435, 1.442695
  %v1438 = vpow.pop %v1437
  %v1439 = vmul.f32 %v1436, 1.442695
  %v1440 = vpow.pop %v1439
  %v1441 = vadd.f32 %v1438, 1.0
  %v1442 = vadd.f32 %v1440, 1.0
  %v1443 = vrcp.pop %v1441
  %v1444 = vmul.f32 1.0, %v1443
  %v1445 = vrcp.pop %v1442
  %v1446 = vmul.f32 1.0, %v1445
  %v1447 = vmul.f32 %v1430, %v1297
  %v1448 = vmul.f32 %v1432, %v1298
  %v1449 = vmul.f32 %v1418, %v1433
  %v1450 = vmul.f32 %v1420, %v1434
  %v1451 = vadd.f32 %v1447, %v1449
  %v1452 = vadd.f32 %v1448, %v1450
  %v1453 = vtanh.pop %v1451
  %v1454 = vtanh.pop %v1452
  %v1455 = vmul.f32 %v1444, %v1453
  %v1456 = vmul.f32 %v1446, %v1454
  %v1457 = vpack.c.bf16 %v1456, %v1455
  %s1458 = scalar_lea.vmem %s4, 56
  %1459 = vst [vmem:[%s1458] sm:$0xff] %v1457
  %1460 = vst [vmem:[#allocation2] sm:$0xff] %v1455
  %1461 = vst [vmem:[#allocation2 + $0x8] sm:$0xff] %v1456
  %1462 = vst [vmem:[#allocation3] sm:$0xff] %v1451
  %1463 = vst [vmem:[#allocation3 + $0x8] sm:$0xff] %v1452
  // Predicated region
  $region22: #{encoder_forward.2} parent=0 // pred_check
    %p1464 = pneg %p21
  $region23: #{encoder_forward.2} parent=0 // pred_check_branch
    %1466 = sbr.rel (%p1464) target = $region25
  $region24: #{encoder_forward.2} parent=0 // pred_region
    %1467 = vst [vmem:[%s5] sm:$0xff] %v1455
    %1468 = vst [vmem:[%s5 + $0x8] sm:$0xff] %v1456
    %1469 = vst [vmem:[%s6] sm:$0xff] %v1451
    %1470 = vst [vmem:[%s6 + $0x8] sm:$0xff] %v1452
  $region25: #{encoder_forward.2} parent=0 // pred_fallthru
    _
  // Predicated region
  $region26: #{encoder_forward.2} parent=0 // pred_check
    _
  $region27: #{encoder_forward.2} parent=0 // pred_check_branch
    %1472 = sbr.rel (0) target = $region29
  $region28: #{encoder_forward.2} parent=0 // pred_region
    _
  $region29: #{encoder_forward.2} parent=0 // pred_fallthru
    _
  // Predicated region
  $region30: #{encoder_forward.2} parent=0 // pred_check
    _
  $region31: #{encoder_forward.2} parent=0 // pred_check_branch
    %1474 = sbr.rel (0) target = $region33
  $region32: #{encoder_forward.2} parent=0 // pred_region
    _
  $region33: #{encoder_forward.2} parent=0 // pred_fallthru
    _
  // Predicated region
  $region34: #{encoder_forward.2} parent=0 // pred_check
    _
  $region35: #{encoder_forward.2} parent=0 // pred_check_branch
    %1476 = sbr.rel (0) target = $region37
  $region36: #{encoder_forward.2} parent=0 // pred_region
    _
  $region37: #{encoder_forward.2} parent=0 // pred_fallthru
    _
  // Predicated region
  $region38: #{encoder_forward.2} parent=0 // pred_check
    _
  $region39: #{encoder_forward.2} parent=0 // pred_check_branch
    %1478 = sbr.rel (0) target = $region41
  $region40: #{encoder_forward.2} parent=0 // pred_region
    _
  $region41: #{encoder_forward.2} parent=0 // pred_fallthru
    _
  // Predicated region
  $region42: #{encoder_forward.2} parent=0 // pred_check
    _
  $region43: #{encoder_forward.2} parent=0 // pred_check_branch
    %1480 = sbr.rel (0) target = $region45
  $region44: #{encoder_forward.2} parent=0 // pred_region
    _
  $region45: #{encoder_forward.2} parent=0 // pred_fallthru
    _
  // Predicated region
  $region46: #{encoder_forward.2} parent=0 // pred_check
    _
  $region47: #{encoder_forward.2} parent=0 // pred_check_branch
    %1482 = sbr.rel (0) target = $region49
  $region48: #{encoder_forward.2} parent=0 // pred_region
    _
  $region49: #{encoder_forward.2} parent=0 // pred_fallthru
    _

</llo_original>
